<compile_context>
chip_gen: v7x
topology: tpu7x:2x2x1
jax: 0.10.0
libtpu: 0.0.40
codegen_flags: <defaults>
</compile_context>

<pallas_src>
import functools

import jax
import jax.numpy as jnp
from jax.experimental import pallas as pl
from jax.experimental.pallas import tpu as pltpu


_SUPPORTED = ("prelu", "relu", "lrelu", "tanh", "linh", "clip")

# Below this many bytes the pallas_call fixed cost dominates; XLA-fused jnp
# elementwise is strictly cheaper.
_SMALL_BYTES = 1 << 20  # 1 MiB


def _device_kind():
    try:
        return jax.devices()[0].device_kind.lower()
    except Exception:  # pragma: no cover - defensive
        return ""


_KIND = _device_kind()
_IS_V7 = "v7" in _KIND
_IS_V6 = "v6" in _KIND or "trillium" in _KIND


# ---------------------------------------------------------------------------
# Elementwise math (shared by kernel body, small-input path and reference).
# ---------------------------------------------------------------------------
def _apply(x, mode, alpha=None):
    if mode == "relu":
        return jnp.maximum(x, jnp.zeros((), x.dtype))
    if mode == "lrelu":
        # nn.LeakyReLU default negative_slope = 0.01
        return jnp.where(x >= 0, x, jnp.asarray(0.01, x.dtype) * x)
    if mode == "prelu":
        return jnp.where(x >= 0, x, alpha.astype(x.dtype) * x)
    if mode == "tanh":
        return jnp.tanh(x)
    if mode == "linh":
        return jnp.clip(x, -1.0, 1.0)
    if mode == "clip":
        return jnp.clip(x, 0.0, 1.0)
    return x  # identity


def _activ_kernel(x_ref, o_ref, *, mode):
    """Elementwise activation on one VMEM tile (no learnable params)."""
    o_ref[...] = _apply(x_ref[...], mode)


def _prelu_kernel(alpha_ref, x_ref, o_ref):
    """PReLU with a single scalar slope held in SMEM."""
    x = x_ref[...]
    a = alpha_ref[0].astype(x.dtype)
    o_ref[...] = jnp.where(x >= 0, x, a * x)


# ---------------------------------------------------------------------------
# Tiling helpers.
# ---------------------------------------------------------------------------
def _round_up(v, m):
    return ((v + m - 1) // m) * m


def _sublane(itemsize):
    # Packed min sublane tile: 8 for 32-bit, 16 for 16-bit, 32 for 8-bit.
    return 8 * max(1, 4 // itemsize)


def _choose_lane(total):
    """Pick a lane width (multiple of 128) and required tail pad (elements)."""
    for lane in (4096, 2048, 1024, 512, 256, 128):
        if total % lane == 0:
            return lane, 0
    lane = 512  # ragged total: minimal pad, < lane extra elements
    return lane, _round_up(total, lane) - total


# ---------------------------------------------------------------------------
# Public wrapper.
# ---------------------------------------------------------------------------
def activ_layer(x, activation="lrelu", prelu_weight=None):
    """Pallas equivalent of ActivLayer(activation)(x) for NCHW (or any) input."""
    if activation is not None:
        activation = activation.lower()
    # Matches the torch module: any unrecognized string falls back to Identity.
    mode = activation if activation in _SUPPORTED else "identity"

    # Identity: skip the HBM->VMEM->HBM round trip entirely.
    if mode == "identity":
        return x

    orig_shape = x.shape
    dtype = x.dtype
    total = x.size
    itemsize = jnp.dtype(dtype).itemsize

    alpha = None
    if mode == "prelu":
        # nn.PReLU() default: single learnable parameter initialized to 0.25.
        if prelu_weight is None:
            prelu_weight = 0.25
        alpha = jnp.asarray(prelu_weight, dtype=jnp.float32).reshape(-1)
        if alpha.size != 1:
            # TODO(synk): per-channel PReLU (num_parameters=C) needs channel-aware tiling.
            raise ValueError("only scalar PReLU (num_parameters=1) is supported")

    # Small tensors: plain (XLA-fused) elementwise is cheaper than a pallas_call.
    if total * itemsize < _SMALL_BYTES:
        return _apply(x, mode, alpha)

    # --- Lane-dense 2-D slab layout -----------------------------------------
    lane, pad = _choose_lane(total)
    flat = x.reshape(-1)
    if pad:
        flat = jnp.pad(flat, (0, pad))          # minimal pad (< lane elements)
    rows = flat.size // lane
    x2d = flat.reshape(rows, lane)

    sub = _sublane(itemsize)
    target_block_bytes = (8 if (_IS_V7 or _IS_V6) else 4) * (1 << 20)
    max_tile_r = max(sub, (target_block_bytes // (lane * itemsize)) // sub * sub)
    # A full-extent row block is always layout-legal; otherwise a sub-multiple
    # tile with a ragged (masked) last grid block.
    tile_r = rows if rows <= max_tile_r else max_tile_r
    grid = (pl.cdiv(rows, tile_r),)

    block_bytes = tile_r * lane * itemsize
    # double-buffered input + output blocks + headroom, capped below v7x VMEM.
    vmem_limit = int(min(48 * (1 << 20), max(16 * (1 << 20), 6 * block_bytes)))

    x_spec = pl.BlockSpec((tile_r, lane), lambda i: (i, 0))
    o_spec = pl.BlockSpec((tile_r, lane), lambda i: (i, 0))
    out_shape = jax.ShapeDtypeStruct((rows, lane), dtype)

    def _call(dim_sem):
        cp = pltpu.CompilerParams(
            dimension_semantics=dim_sem,
            vmem_limit_bytes=vmem_limit,
        )
        if mode == "prelu":
            return pl.pallas_call(
                _prelu_kernel,
                out_shape=out_shape,
                grid=grid,
                in_specs=[
                    pl.BlockSpec(memory_space=pltpu.MemorySpace.SMEM),  # alpha
                    x_spec,
                ],
                out_specs=o_spec,
                input_output_aliases={1: 0},
                compiler_params=cp,
            )(alpha, x2d)
        return pl.pallas_call(
            functools.partial(_activ_kernel, mode=mode),
            out_shape=out_shape,
            grid=grid,
            in_specs=[x_spec],
            out_specs=o_spec,
            input_output_aliases={0: 0},
            compiler_params=cp,
        )(x2d)

    if _IS_V7:
        # v7x has 2 TensorCores: shard the row-tile grid across them.
        try:
            out2d = _call((pltpu.CORE_PARALLEL,))
        except Exception:
            out2d = _call(("parallel",))
    else:
        out2d = _call(("parallel",))

    if pad:
        return out2d.reshape(-1)[:total].reshape(orig_shape)
    return out2d.reshape(orig_shape)


# ---------------------------------------------------------------------------
# Reference + self-test.
# ---------------------------------------------------------------------------
def _reference(x, activation="lrelu", prelu_weight=0.25):
    a = activation.lower() if activation is not None else None
    mode = a if a in _SUPPORTED else "identity"
    alpha = jnp.asarray(prelu_weight, jnp.float32).reshape(-1) if mode == "prelu" else None
    return _apply(x, mode, alpha)


if __name__ == "__main__":
    key = jax.random.PRNGKey(0)
    ok = True

    test_cases = [
        ((2, 4, 16, 16), jnp.float32),      # small -> jnp short-circuit
        ((2, 3, 15, 17), jnp.float32),      # small ragged -> jnp short-circuit
        ((4, 16, 128, 128), jnp.float32),   # 4 MiB, lane-divisible -> Pallas, no pad
        ((6, 16, 200, 256), jnp.float32),   # ~19 MiB -> multi-block grid, ragged last block
        ((3, 5, 129, 257), jnp.float32),    # ragged total -> Pallas + minimal pad
        ((4, 16, 128, 128), jnp.bfloat16),  # bf16 -> 16-row packed sublane tiling
    ]
    modes = ["lrelu", "relu", "prelu", "tanh", "linh", "clip", None, "bogus"]

    for shape, dtype in test_cases:
        key, sub = jax.random.split(key)
        x = jax.random.normal(sub, shape, dtype=jnp.float32).astype(dtype)
        for mode in modes:
            out = activ_layer(x, activation=mode)
            jax.block_until_ready(out)
            ref = _reference(x, activation=mode)
            if out.shape != x.shape or out.dtype != x.dtype:
                ok = False
            tol = 1e-5 if dtype == jnp.float32 else 2e-2
            if not jnp.allclose(out.astype(jnp.float32), ref.astype(jnp.float32),
                                atol=tol, rtol=tol):
                ok = False

    if ok:
        print("KERNEL_OK")
</pallas_src>

<mosaic_0001>
module attributes {stable_mosaic.version = 11 : i64} {
  func.func @_activ_kernel(%arg0: i32, %arg1: memref<256x4096xf32, #tpu.memory_space<vmem>>, %arg2: memref<256x4096xf32, #tpu.memory_space<vmem>>) attributes {dimension_semantics = [#tpu.dimension_semantics<parallel>], iteration_bounds = array<i64: 1>, scalar_prefetch = 0 : i64, scratch_operands = 0 : i64, tpu.core_type = #tpu.core_type<tc>, window_params = [{transform_indices = @transform_0, window_bounds = array<i64: 256, 4096>}, {transform_indices = @transform_1, window_bounds = array<i64: 256, 4096>}]} {
    %c0 = arith.constant 0 : index
    %c0_0 = arith.constant 0 : index
    %0 = vector.load %arg1[%c0, %c0_0] : memref<256x4096xf32, #tpu.memory_space<vmem>>, vector<256x4096xf32>
    %cst = arith.constant 0.000000e+00 : f32
    %1 = vector.broadcast %cst : f32 to vector<256x4096xf32>
    %2 = arith.cmpf oge, %0, %1 : vector<256x4096xf32>
    %cst_1 = arith.constant 0.00999999977 : f32
    %3 = vector.broadcast %cst_1 : f32 to vector<256x4096xf32>
    %4 = arith.mulf %3, %0 : vector<256x4096xf32>
    %5 = arith.select %2, %0, %4 : vector<256x4096xi1>, vector<256x4096xf32>
    %c0_2 = arith.constant 0 : index
    %c0_3 = arith.constant 0 : index
    %6 = vector.load %arg2[%c0_2, %c0_3] : memref<256x4096xf32, #tpu.memory_space<vmem>>, vector<256x4096xf32>
    tpu.vector_store %arg2[%c0_2, %c0_3], %5 {strides = array<i32>} : memref<256x4096xf32, #tpu.memory_space<vmem>>, vector<256x4096xf32>,
    return
  }
  func.func @transform_0(%arg0: i32) -> (i32, i32) {
    %c0_i32 = arith.constant 0 : i32
    %c0_i32_0 = arith.constant 0 : i32
    return %arg0, %c0_i32 : i32, i32
  }
  func.func @transform_1(%arg0: i32) -> (i32, i32) {
    %c0_i32 = arith.constant 0 : i32
    %c0_i32_0 = arith.constant 0 : i32
    return %arg0, %c0_i32 : i32, i32
  }
}

</mosaic_0001>

<llo_original>
// kernel: tpu_custom_call.1
$region0: #{tpu_custom_call.1}
  #allocation0 [shape = 'u32[]', space=smem, size = 0x4, offset = 0x4, fixed_abs, tag = 'smem constant byte address 0x4 - core index']
  #allocation1 [shape = 'u32[144,128]{1,0:T(1,128)}', space=vmem, size = 0x12000, scoped, tag = 'internal scratch']
  %s0 = inlined_call_operand.hbm [shape: f32[256,4096], index: 0, kind: input, shape index: {}, may-alias: {0,1}]
  %s1 = inlined_call_operand.hbm [shape: f32[256,4096], index: 1, kind: output, shape index: {}, may-alias: {0,1}]
  %s2 = sld [smem:[#allocation0]]
  $region18: #{tpu_custom_call.1} parent=0
    _
  %s4 = ssub.s32 1, %s2
  %s5 = scalar_select 0, %s4, %s2
  $region1: #{tpu_custom_call.1} parent=0
    #allocation2 [shape = 'u8[4194304]{0}', space=vmem, size = 0x400000, scoped, tag = 'input window, operand 0, single buffered']
    #allocation3 [shape = 's32[1]{0}', space=sflag, size = 0x4, scoped, tag = 'scoped memory for tpu_custom_call.1']
    #allocation4 [shape = 's32[1]{0}', space=sflag, size = 0x4, scoped, tag = 'scoped memory for tpu_custom_call.1']
    #allocation5 [shape = 'u8[4194304]{0}', space=vmem, size = 0x400000, scoped, tag = 'output window, operand 0, single buffered']
    %6 = vsyncpa [#allocation3], 0
    %7 = vsyncpa [#allocation4], 0
    // Predicated region
    $region2: #{tpu_custom_call.1} parent=1 // pred_check
      _
    $region3: #{tpu_custom_call.1} parent=1 // pred_check_branch
      %9 = sbr.rel (0) target = $region5
    $region4: #{tpu_custom_call.1} parent=1 // pred_region
      %s11 = ssub.s32 131072, 131072
      %12 = vsyncadd [#allocation3], %s11
      %s13 = sshll.u32 [#allocation2], 4
      %s14 = int_to_ptr.vmem [resolvable:$true] %s13
      %19 = dma.hbm_to_vmem [thread:$0]  %s0, 131072, %s14, [#allocation3], 4096, 4096, 256
    $region5: #{tpu_custom_call.1} parent=1 // pred_fallthru
      _
    // Predicated region
    $region6: #{tpu_custom_call.1} parent=1 // pred_check
      _
    $region7: #{tpu_custom_call.1} parent=1 // pred_check_branch
      %21 = sbr.rel (0) target = $region9
    $region8: #{tpu_custom_call.1} parent=1 // pred_region
      %22 = dma.done [#allocation3], 131072
    $region9: #{tpu_custom_call.1} parent=1 // pred_fallthru
      _
    %v23 = vld [vmem:[#allocation2] sm:$0xff]
    %v24 = vld [vmem:[#allocation2 + $0x8] sm:$0xff]
    %v25 = vld [vmem:[#allocation2 + $0x10] sm:$0xff]
    %v26 = vld [vmem:[#allocation2 + $0x18] sm:$0xff]
    %v27 = vld [vmem:[#allocation2 + $0x20] sm:$0xff]
    %v28 = vld [vmem:[#allocation2 + $0x28] sm:$0xff]
    %v29 = vld [vmem:[#allocation2 + $0x30] sm:$0xff]
    %v30 = vld [vmem:[#allocation2 + $0x38] sm:$0xff]
    %v31 = vld [vmem:[#allocation2 + $0x40] sm:$0xff]
    %v32 = vld [vmem:[#allocation2 + $0x48] sm:$0xff]
    %v33 = vld [vmem:[#allocation2 + $0x50] sm:$0xff]
    %v34 = vld [vmem:[#allocation2 + $0x58] sm:$0xff]
    %v35 = vld [vmem:[#allocation2 + $0x60] sm:$0xff]
    %v36 = vld [vmem:[#allocation2 + $0x68] sm:$0xff]
    %v37 = vld [vmem:[#allocation2 + $0x70] sm:$0xff]
    %v38 = vld [vmem:[#allocation2 + $0x78] sm:$0xff]
    %v39 = vld [vmem:[#allocation2 + $0x80] sm:$0xff]
    %v40 = vld [vmem:[#allocation2 + $0x88] sm:$0xff]
    %v41 = vld [vmem:[#allocation2 + $0x90] sm:$0xff]
    %v42 = vld [vmem:[#allocation2 + $0x98] sm:$0xff]
    %v43 = vld [vmem:[#allocation2 + $0xa0] sm:$0xff]
    %v44 = vld [vmem:[#allocation2 + $0xa8] sm:$0xff]
    %v45 = vld [vmem:[#allocation2 + $0xb0] sm:$0xff]
    %v46 = vld [vmem:[#allocation2 + $0xb8] sm:$0xff]
    %v47 = vld [vmem:[#allocation2 + $0xc0] sm:$0xff]
    %v48 = vld [vmem:[#allocation2 + $0xc8] sm:$0xff]
    %v49 = vld [vmem:[#allocation2 + $0xd0] sm:$0xff]
    %v50 = vld [vmem:[#allocation2 + $0xd8] sm:$0xff]
    %v51 = vld [vmem:[#allocation2 + $0xe0] sm:$0xff]
    %v52 = vld [vmem:[#allocation2 + $0xe8] sm:$0xff]
    %v53 = vld [vmem:[#allocation2 + $0xf0] sm:$0xff]
    %v54 = vld [vmem:[#allocation2 + $0xf8] sm:$0xff]
    %v55 = vld [vmem:[#allocation2 + $0x100] sm:$0xff]
    %v56 = vld [vmem:[#allocation2 + $0x108] sm:$0xff]
    %v57 = vld [vmem:[#allocation2 + $0x110] sm:$0xff]
    %v58 = vld [vmem:[#allocation2 + $0x118] sm:$0xff]
    %v59 = vld [vmem:[#allocation2 + $0x120] sm:$0xff]
    %v60 = vld [vmem:[#allocation2 + $0x128] sm:$0xff]
    %v61 = vld [vmem:[#allocation2 + $0x130] sm:$0xff]
    %v62 = vld [vmem:[#allocation2 + $0x138] sm:$0xff]
    %v63 = vld [vmem:[#allocation2 + $0x140] sm:$0xff]
    %v64 = vld [vmem:[#allocation2 + $0x148] sm:$0xff]
    %v65 = vld [vmem:[#allocation2 + $0x150] sm:$0xff]
    %v66 = vld [vmem:[#allocation2 + $0x158] sm:$0xff]
    %v67 = vld [vmem:[#allocation2 + $0x160] sm:$0xff]
    %v68 = vld [vmem:[#allocation2 + $0x168] sm:$0xff]
    %v69 = vld [vmem:[#allocation2 + $0x170] sm:$0xff]
    %v70 = vld [vmem:[#allocation2 + $0x178] sm:$0xff]
    %v71 = vld [vmem:[#allocation2 + $0x180] sm:$0xff]
    %v72 = vld [vmem:[#allocation2 + $0x188] sm:$0xff]
    %v73 = vld [vmem:[#allocation2 + $0x190] sm:$0xff]
    %v74 = vld [vmem:[#allocation2 + $0x198] sm:$0xff]
    %v75 = vld [vmem:[#allocation2 + $0x1a0] sm:$0xff]
    %v76 = vld [vmem:[#allocation2 + $0x1a8] sm:$0xff]
    %v77 = vld [vmem:[#allocation2 + $0x1b0] sm:$0xff]
    %v78 = vld [vmem:[#allocation2 + $0x1b8] sm:$0xff]
    %v79 = vld [vmem:[#allocation2 + $0x1c0] sm:$0xff]
    %v80 = vld [vmem:[#allocation2 + $0x1c8] sm:$0xff]
    %v81 = vld [vmem:[#allocation2 + $0x1d0] sm:$0xff]
    %v82 = vld [vmem:[#allocation2 + $0x1d8] sm:$0xff]
    %v83 = vld [vmem:[#allocation2 + $0x1e0] sm:$0xff]
    %v84 = vld [vmem:[#allocation2 + $0x1e8] sm:$0xff]
    %v85 = vld [vmem:[#allocation2 + $0x1f0] sm:$0xff]
    %v86 = vld [vmem:[#allocation2 + $0x1f8] sm:$0xff]
    %v87 = vld [vmem:[#allocation2 + $0x200] sm:$0xff]
    %v88 = vld [vmem:[#allocation2 + $0x208] sm:$0xff]
    %v89 = vld [vmem:[#allocation2 + $0x210] sm:$0xff]
    %v90 = vld [vmem:[#allocation2 + $0x218] sm:$0xff]
    %v91 = vld [vmem:[#allocation2 + $0x220] sm:$0xff]
    %v92 = vld [vmem:[#allocation2 + $0x228] sm:$0xff]
    %v93 = vld [vmem:[#allocation2 + $0x230] sm:$0xff]
    %v94 = vld [vmem:[#allocation2 + $0x238] sm:$0xff]
    %v95 = vld [vmem:[#allocation2 + $0x240] sm:$0xff]
    %v96 = vld [vmem:[#allocation2 + $0x248] sm:$0xff]
    %v97 = vld [vmem:[#allocation2 + $0x250] sm:$0xff]
    %v98 = vld [vmem:[#allocation2 + $0x258] sm:$0xff]
    %v99 = vld [vmem:[#allocation2 + $0x260] sm:$0xff]
    %v100 = vld [vmem:[#allocation2 + $0x268] sm:$0xff]
    %v101 = vld [vmem:[#allocation2 + $0x270] sm:$0xff]
    %v102 = vld [vmem:[#allocation2 + $0x278] sm:$0xff]
    %v103 = vld [vmem:[#allocation2 + $0x280] sm:$0xff]
    %v104 = vld [vmem:[#allocation2 + $0x288] sm:$0xff]
    %v105 = vld [vmem:[#allocation2 + $0x290] sm:$0xff]
    %v106 = vld [vmem:[#allocation2 + $0x298] sm:$0xff]
    %v107 = vld [vmem:[#allocation2 + $0x2a0] sm:$0xff]
    %v108 = vld [vmem:[#allocation2 + $0x2a8] sm:$0xff]
    %v109 = vld [vmem:[#allocation2 + $0x2b0] sm:$0xff]
    %v110 = vld [vmem:[#allocation2 + $0x2b8] sm:$0xff]
    %v111 = vld [vmem:[#allocation2 + $0x2c0] sm:$0xff]
    %v112 = vld [vmem:[#allocation2 + $0x2c8] sm:$0xff]
    %v113 = vld [vmem:[#allocation2 + $0x2d0] sm:$0xff]
    %v114 = vld [vmem:[#allocation2 + $0x2d8] sm:$0xff]
    %v115 = vld [vmem:[#allocation2 + $0x2e0] sm:$0xff]
    %v116 = vld [vmem:[#allocation2 + $0x2e8] sm:$0xff]
    %v117 = vld [vmem:[#allocation2 + $0x2f0] sm:$0xff]
    %v118 = vld [vmem:[#allocation2 + $0x2f8] sm:$0xff]
    %v119 = vld [vmem:[#allocation2 + $0x300] sm:$0xff]
    %v120 = vld [vmem:[#allocation2 + $0x308] sm:$0xff]
    %v121 = vld [vmem:[#allocation2 + $0x310] sm:$0xff]
    %v122 = vld [vmem:[#allocation2 + $0x318] sm:$0xff]
    %v123 = vld [vmem:[#allocation2 + $0x320] sm:$0xff]
    %v124 = vld [vmem:[#allocation2 + $0x328] sm:$0xff]
    %v125 = vld [vmem:[#allocation2 + $0x330] sm:$0xff]
    %v126 = vld [vmem:[#allocation2 + $0x338] sm:$0xff]
    %v127 = vld [vmem:[#allocation2 + $0x340] sm:$0xff]
    %v128 = vld [vmem:[#allocation2 + $0x348] sm:$0xff]
    %v129 = vld [vmem:[#allocation2 + $0x350] sm:$0xff]
    %v130 = vld [vmem:[#allocation2 + $0x358] sm:$0xff]
    %v131 = vld [vmem:[#allocation2 + $0x360] sm:$0xff]
    %v132 = vld [vmem:[#allocation2 + $0x368] sm:$0xff]
    %v133 = vld [vmem:[#allocation2 + $0x370] sm:$0xff]
    %v134 = vld [vmem:[#allocation2 + $0x378] sm:$0xff]
    %v135 = vld [vmem:[#allocation2 + $0x380] sm:$0xff]
    %v136 = vld [vmem:[#allocation2 + $0x388] sm:$0xff]
    %v137 = vld [vmem:[#allocation2 + $0x390] sm:$0xff]
    %v138 = vld [vmem:[#allocation2 + $0x398] sm:$0xff]
    %v139 = vld [vmem:[#allocation2 + $0x3a0] sm:$0xff]
    %v140 = vld [vmem:[#allocation2 + $0x3a8] sm:$0xff]
    %v141 = vld [vmem:[#allocation2 + $0x3b0] sm:$0xff]
    %v142 = vld [vmem:[#allocation2 + $0x3b8] sm:$0xff]
    %v143 = vld [vmem:[#allocation2 + $0x3c0] sm:$0xff]
    %v144 = vld [vmem:[#allocation2 + $0x3c8] sm:$0xff]
    %v145 = vld [vmem:[#allocation2 + $0x3d0] sm:$0xff]
    %v146 = vld [vmem:[#allocation2 + $0x3d8] sm:$0xff]
    %v147 = vld [vmem:[#allocation2 + $0x3e0] sm:$0xff]
    %v148 = vld [vmem:[#allocation2 + $0x3e8] sm:$0xff]
    %v149 = vld [vmem:[#allocation2 + $0x3f0] sm:$0xff]
    %v150 = vld [vmem:[#allocation2 + $0x3f8] sm:$0xff]
    %v151 = vld [vmem:[#allocation2 + $0x400] sm:$0xff]
    %v152 = vld [vmem:[#allocation2 + $0x408] sm:$0xff]
    %v153 = vld [vmem:[#allocation2 + $0x410] sm:$0xff]
    %v154 = vld [vmem:[#allocation2 + $0x418] sm:$0xff]
    %v155 = vld [vmem:[#allocation2 + $0x420] sm:$0xff]
    %v156 = vld [vmem:[#allocation2 + $0x428] sm:$0xff]
    %v157 = vld [vmem:[#allocation2 + $0x430] sm:$0xff]
    %v158 = vld [vmem:[#allocation2 + $0x438] sm:$0xff]
    %v159 = vld [vmem:[#allocation2 + $0x440] sm:$0xff]
    %v160 = vld [vmem:[#allocation2 + $0x448] sm:$0xff]
    %v161 = vld [vmem:[#allocation2 + $0x450] sm:$0xff]
    %v162 = vld [vmem:[#allocation2 + $0x458] sm:$0xff]
    %v163 = vld [vmem:[#allocation2 + $0x460] sm:$0xff]
    %v164 = vld [vmem:[#allocation2 + $0x468] sm:$0xff]
    %v165 = vld [vmem:[#allocation2 + $0x470] sm:$0xff]
    %v166 = vld [vmem:[#allocation2 + $0x478] sm:$0xff]
    %v167 = vld [vmem:[#allocation2 + $0x480] sm:$0xff]
    %v168 = vld [vmem:[#allocation2 + $0x488] sm:$0xff]
    %v169 = vld [vmem:[#allocation2 + $0x490] sm:$0xff]
    %v170 = vld [vmem:[#allocation2 + $0x498] sm:$0xff]
    %v171 = vld [vmem:[#allocation2 + $0x4a0] sm:$0xff]
    %v172 = vld [vmem:[#allocation2 + $0x4a8] sm:$0xff]
    %v173 = vld [vmem:[#allocation2 + $0x4b0] sm:$0xff]
    %v174 = vld [vmem:[#allocation2 + $0x4b8] sm:$0xff]
    %v175 = vld [vmem:[#allocation2 + $0x4c0] sm:$0xff]
    %v176 = vld [vmem:[#allocation2 + $0x4c8] sm:$0xff]
    %v177 = vld [vmem:[#allocation2 + $0x4d0] sm:$0xff]
    %v178 = vld [vmem:[#allocation2 + $0x4d8] sm:$0xff]
    %v179 = vld [vmem:[#allocation2 + $0x4e0] sm:$0xff]
    %v180 = vld [vmem:[#allocation2 + $0x4e8] sm:$0xff]
    %v181 = vld [vmem:[#allocation2 + $0x4f0] sm:$0xff]
    %v182 = vld [vmem:[#allocation2 + $0x4f8] sm:$0xff]
    %v183 = vld [vmem:[#allocation2 + $0x500] sm:$0xff]
    %v184 = vld [vmem:[#allocation2 + $0x508] sm:$0xff]
    %v185 = vld [vmem:[#allocation2 + $0x510] sm:$0xff]
    %v186 = vld [vmem:[#allocation2 + $0x518] sm:$0xff]
    %v187 = vld [vmem:[#allocation2 + $0x520] sm:$0xff]
    %v188 = vld [vmem:[#allocation2 + $0x528] sm:$0xff]
    %v189 = vld [vmem:[#allocation2 + $0x530] sm:$0xff]
    %v190 = vld [vmem:[#allocation2 + $0x538] sm:$0xff]
    %v191 = vld [vmem:[#allocation2 + $0x540] sm:$0xff]
    %v192 = vld [vmem:[#allocation2 + $0x548] sm:$0xff]
    %v193 = vld [vmem:[#allocation2 + $0x550] sm:$0xff]
    %v194 = vld [vmem:[#allocation2 + $0x558] sm:$0xff]
    %v195 = vld [vmem:[#allocation2 + $0x560] sm:$0xff]
    %v196 = vld [vmem:[#allocation2 + $0x568] sm:$0xff]
    %v197 = vld [vmem:[#allocation2 + $0x570] sm:$0xff]
    %v198 = vld [vmem:[#allocation2 + $0x578] sm:$0xff]
    %v199 = vld [vmem:[#allocation2 + $0x580] sm:$0xff]
    %v200 = vld [vmem:[#allocation2 + $0x588] sm:$0xff]
    %v201 = vld [vmem:[#allocation2 + $0x590] sm:$0xff]
    %v202 = vld [vmem:[#allocation2 + $0x598] sm:$0xff]
    %v203 = vld [vmem:[#allocation2 + $0x5a0] sm:$0xff]
    %v204 = vld [vmem:[#allocation2 + $0x5a8] sm:$0xff]
    %v205 = vld [vmem:[#allocation2 + $0x5b0] sm:$0xff]
    %v206 = vld [vmem:[#allocation2 + $0x5b8] sm:$0xff]
    %v207 = vld [vmem:[#allocation2 + $0x5c0] sm:$0xff]
    %v208 = vld [vmem:[#allocation2 + $0x5c8] sm:$0xff]
    %v209 = vld [vmem:[#allocation2 + $0x5d0] sm:$0xff]
    %v210 = vld [vmem:[#allocation2 + $0x5d8] sm:$0xff]
    %v211 = vld [vmem:[#allocation2 + $0x5e0] sm:$0xff]
    %v212 = vld [vmem:[#allocation2 + $0x5e8] sm:$0xff]
    %v213 = vld [vmem:[#allocation2 + $0x5f0] sm:$0xff]
    %v214 = vld [vmem:[#allocation2 + $0x5f8] sm:$0xff]
    %v215 = vld [vmem:[#allocation2 + $0x600] sm:$0xff]
    %v216 = vld [vmem:[#allocation2 + $0x608] sm:$0xff]
    %v217 = vld [vmem:[#allocation2 + $0x610] sm:$0xff]
    %v218 = vld [vmem:[#allocation2 + $0x618] sm:$0xff]
    %v219 = vld [vmem:[#allocation2 + $0x620] sm:$0xff]
    %v220 = vld [vmem:[#allocation2 + $0x628] sm:$0xff]
    %v221 = vld [vmem:[#allocation2 + $0x630] sm:$0xff]
    %v222 = vld [vmem:[#allocation2 + $0x638] sm:$0xff]
    %v223 = vld [vmem:[#allocation2 + $0x640] sm:$0xff]
    %v224 = vld [vmem:[#allocation2 + $0x648] sm:$0xff]
    %v225 = vld [vmem:[#allocation2 + $0x650] sm:$0xff]
    %v226 = vld [vmem:[#allocation2 + $0x658] sm:$0xff]
    %v227 = vld [vmem:[#allocation2 + $0x660] sm:$0xff]
    %v228 = vld [vmem:[#allocation2 + $0x668] sm:$0xff]
    %v229 = vld [vmem:[#allocation2 + $0x670] sm:$0xff]
    %v230 = vld [vmem:[#allocation2 + $0x678] sm:$0xff]
    %v231 = vld [vmem:[#allocation2 + $0x680] sm:$0xff]
    %v232 = vld [vmem:[#allocation2 + $0x688] sm:$0xff]
    %v233 = vld [vmem:[#allocation2 + $0x690] sm:$0xff]
    %v234 = vld [vmem:[#allocation2 + $0x698] sm:$0xff]
    %v235 = vld [vmem:[#allocation2 + $0x6a0] sm:$0xff]
    %v236 = vld [vmem:[#allocation2 + $0x6a8] sm:$0xff]
    %v237 = vld [vmem:[#allocation2 + $0x6b0] sm:$0xff]
    %v238 = vld [vmem:[#allocation2 + $0x6b8] sm:$0xff]
    %v239 = vld [vmem:[#allocation2 + $0x6c0] sm:$0xff]
    %v240 = vld [vmem:[#allocation2 + $0x6c8] sm:$0xff]
    %v241 = vld [vmem:[#allocation2 + $0x6d0] sm:$0xff]
    %v242 = vld [vmem:[#allocation2 + $0x6d8] sm:$0xff]
    %v243 = vld [vmem:[#allocation2 + $0x6e0] sm:$0xff]
    %v244 = vld [vmem:[#allocation2 + $0x6e8] sm:$0xff]
    %v245 = vld [vmem:[#allocation2 + $0x6f0] sm:$0xff]
    %v246 = vld [vmem:[#allocation2 + $0x6f8] sm:$0xff]
    %v247 = vld [vmem:[#allocation2 + $0x700] sm:$0xff]
    %v248 = vld [vmem:[#allocation2 + $0x708] sm:$0xff]
    %v249 = vld [vmem:[#allocation2 + $0x710] sm:$0xff]
    %v250 = vld [vmem:[#allocation2 + $0x718] sm:$0xff]
    %v251 = vld [vmem:[#allocation2 + $0x720] sm:$0xff]
    %v252 = vld [vmem:[#allocation2 + $0x728] sm:$0xff]
    %v253 = vld [vmem:[#allocation2 + $0x730] sm:$0xff]
    %v254 = vld [vmem:[#allocation2 + $0x738] sm:$0xff]
    %v255 = vld [vmem:[#allocation2 + $0x740] sm:$0xff]
    %v256 = vld [vmem:[#allocation2 + $0x748] sm:$0xff]
    %v257 = vld [vmem:[#allocation2 + $0x750] sm:$0xff]
    %v258 = vld [vmem:[#allocation2 + $0x758] sm:$0xff]
    %v259 = vld [vmem:[#allocation2 + $0x760] sm:$0xff]
    %v260 = vld [vmem:[#allocation2 + $0x768] sm:$0xff]
    %v261 = vld [vmem:[#allocation2 + $0x770] sm:$0xff]
    %v262 = vld [vmem:[#allocation2 + $0x778] sm:$0xff]
    %v263 = vld [vmem:[#allocation2 + $0x780] sm:$0xff]
    %v264 = vld [vmem:[#allocation2 + $0x788] sm:$0xff]
    %v265 = vld [vmem:[#allocation2 + $0x790] sm:$0xff]
    %v266 = vld [vmem:[#allocation2 + $0x798] sm:$0xff]
    %v267 = vld [vmem:[#allocation2 + $0x7a0] sm:$0xff]
    %v268 = vld [vmem:[#allocation2 + $0x7a8] sm:$0xff]
    %v269 = vld [vmem:[#allocation2 + $0x7b0] sm:$0xff]
    %v270 = vld [vmem:[#allocation2 + $0x7b8] sm:$0xff]
    %v271 = vld [vmem:[#allocation2 + $0x7c0] sm:$0xff]
    %v272 = vld [vmem:[#allocation2 + $0x7c8] sm:$0xff]
    %v273 = vld [vmem:[#allocation2 + $0x7d0] sm:$0xff]
    %v274 = vld [vmem:[#allocation2 + $0x7d8] sm:$0xff]
    %v275 = vld [vmem:[#allocation2 + $0x7e0] sm:$0xff]
    %v276 = vld [vmem:[#allocation2 + $0x7e8] sm:$0xff]
    %v277 = vld [vmem:[#allocation2 + $0x7f0] sm:$0xff]
    %v278 = vld [vmem:[#allocation2 + $0x7f8] sm:$0xff]
    %v279 = vld [vmem:[#allocation2 + $0x800] sm:$0xff]
    %v280 = vld [vmem:[#allocation2 + $0x808] sm:$0xff]
    %v281 = vld [vmem:[#allocation2 + $0x810] sm:$0xff]
    %v282 = vld [vmem:[#allocation2 + $0x818] sm:$0xff]
    %v283 = vld [vmem:[#allocation2 + $0x820] sm:$0xff]
    %v284 = vld [vmem:[#allocation2 + $0x828] sm:$0xff]
    %v285 = vld [vmem:[#allocation2 + $0x830] sm:$0xff]
    %v286 = vld [vmem:[#allocation2 + $0x838] sm:$0xff]
    %v287 = vld [vmem:[#allocation2 + $0x840] sm:$0xff]
    %v288 = vld [vmem:[#allocation2 + $0x848] sm:$0xff]
    %v289 = vld [vmem:[#allocation2 + $0x850] sm:$0xff]
    %v290 = vld [vmem:[#allocation2 + $0x858] sm:$0xff]
    %v291 = vld [vmem:[#allocation2 + $0x860] sm:$0xff]
    %v292 = vld [vmem:[#allocation2 + $0x868] sm:$0xff]
    %v293 = vld [vmem:[#allocation2 + $0x870] sm:$0xff]
    %v294 = vld [vmem:[#allocation2 + $0x878] sm:$0xff]
    %v295 = vld [vmem:[#allocation2 + $0x880] sm:$0xff]
    %v296 = vld [vmem:[#allocation2 + $0x888] sm:$0xff]
    %v297 = vld [vmem:[#allocation2 + $0x890] sm:$0xff]
    %v298 = vld [vmem:[#allocation2 + $0x898] sm:$0xff]
    %v299 = vld [vmem:[#allocation2 + $0x8a0] sm:$0xff]
    %v300 = vld [vmem:[#allocation2 + $0x8a8] sm:$0xff]
    %v301 = vld [vmem:[#allocation2 + $0x8b0] sm:$0xff]
    %v302 = vld [vmem:[#allocation2 + $0x8b8] sm:$0xff]
    %v303 = vld [vmem:[#allocation2 + $0x8c0] sm:$0xff]
    %v304 = vld [vmem:[#allocation2 + $0x8c8] sm:$0xff]
    %v305 = vld [vmem:[#allocation2 + $0x8d0] sm:$0xff]
    %v306 = vld [vmem:[#allocation2 + $0x8d8] sm:$0xff]
    %v307 = vld [vmem:[#allocation2 + $0x8e0] sm:$0xff]
    %v308 = vld [vmem:[#allocation2 + $0x8e8] sm:$0xff]
    %v309 = vld [vmem:[#allocation2 + $0x8f0] sm:$0xff]
    %v310 = vld [vmem:[#allocation2 + $0x8f8] sm:$0xff]
    %v311 = vld [vmem:[#allocation2 + $0x900] sm:$0xff]
    %v312 = vld [vmem:[#allocation2 + $0x908] sm:$0xff]
    %v313 = vld [vmem:[#allocation2 + $0x910] sm:$0xff]
    %v314 = vld [vmem:[#allocation2 + $0x918] sm:$0xff]
    %v315 = vld [vmem:[#allocation2 + $0x920] sm:$0xff]
    %v316 = vld [vmem:[#allocation2 + $0x928] sm:$0xff]
    %v317 = vld [vmem:[#allocation2 + $0x930] sm:$0xff]
    %v318 = vld [vmem:[#allocation2 + $0x938] sm:$0xff]
    %v319 = vld [vmem:[#allocation2 + $0x940] sm:$0xff]
    %v320 = vld [vmem:[#allocation2 + $0x948] sm:$0xff]
    %v321 = vld [vmem:[#allocation2 + $0x950] sm:$0xff]
    %v322 = vld [vmem:[#allocation2 + $0x958] sm:$0xff]
    %v323 = vld [vmem:[#allocation2 + $0x960] sm:$0xff]
    %v324 = vld [vmem:[#allocation2 + $0x968] sm:$0xff]
    %v325 = vld [vmem:[#allocation2 + $0x970] sm:$0xff]
    %v326 = vld [vmem:[#allocation2 + $0x978] sm:$0xff]
    %v327 = vld [vmem:[#allocation2 + $0x980] sm:$0xff]
    %v328 = vld [vmem:[#allocation2 + $0x988] sm:$0xff]
    %v329 = vld [vmem:[#allocation2 + $0x990] sm:$0xff]
    %v330 = vld [vmem:[#allocation2 + $0x998] sm:$0xff]
    %v331 = vld [vmem:[#allocation2 + $0x9a0] sm:$0xff]
    %v332 = vld [vmem:[#allocation2 + $0x9a8] sm:$0xff]
    %v333 = vld [vmem:[#allocation2 + $0x9b0] sm:$0xff]
    %v334 = vld [vmem:[#allocation2 + $0x9b8] sm:$0xff]
    %v335 = vld [vmem:[#allocation2 + $0x9c0] sm:$0xff]
    %v336 = vld [vmem:[#allocation2 + $0x9c8] sm:$0xff]
    %v337 = vld [vmem:[#allocation2 + $0x9d0] sm:$0xff]
    %v338 = vld [vmem:[#allocation2 + $0x9d8] sm:$0xff]
    %v339 = vld [vmem:[#allocation2 + $0x9e0] sm:$0xff]
    %v340 = vld [vmem:[#allocation2 + $0x9e8] sm:$0xff]
    %v341 = vld [vmem:[#allocation2 + $0x9f0] sm:$0xff]
    %v342 = vld [vmem:[#allocation2 + $0x9f8] sm:$0xff]
    %v343 = vld [vmem:[#allocation2 + $0xa00] sm:$0xff]
    %v344 = vld [vmem:[#allocation2 + $0xa08] sm:$0xff]
    %v345 = vld [vmem:[#allocation2 + $0xa10] sm:$0xff]
    %v346 = vld [vmem:[#allocation2 + $0xa18] sm:$0xff]
    %v347 = vld [vmem:[#allocation2 + $0xa20] sm:$0xff]
    %v348 = vld [vmem:[#allocation2 + $0xa28] sm:$0xff]
    %v349 = vld [vmem:[#allocation2 + $0xa30] sm:$0xff]
    %v350 = vld [vmem:[#allocation2 + $0xa38] sm:$0xff]
    %v351 = vld [vmem:[#allocation2 + $0xa40] sm:$0xff]
    %v352 = vld [vmem:[#allocation2 + $0xa48] sm:$0xff]
    %v353 = vld [vmem:[#allocation2 + $0xa50] sm:$0xff]
    %v354 = vld [vmem:[#allocation2 + $0xa58] sm:$0xff]
    %v355 = vld [vmem:[#allocation2 + $0xa60] sm:$0xff]
    %v356 = vld [vmem:[#allocation2 + $0xa68] sm:$0xff]
    %v357 = vld [vmem:[#allocation2 + $0xa70] sm:$0xff]
    %v358 = vld [vmem:[#allocation2 + $0xa78] sm:$0xff]
    %v359 = vld [vmem:[#allocation2 + $0xa80] sm:$0xff]
    %v360 = vld [vmem:[#allocation2 + $0xa88] sm:$0xff]
    %v361 = vld [vmem:[#allocation2 + $0xa90] sm:$0xff]
    %v362 = vld [vmem:[#allocation2 + $0xa98] sm:$0xff]
    %v363 = vld [vmem:[#allocation2 + $0xaa0] sm:$0xff]
    %v364 = vld [vmem:[#allocation2 + $0xaa8] sm:$0xff]
    %v365 = vld [vmem:[#allocation2 + $0xab0] sm:$0xff]
    %v366 = vld [vmem:[#allocation2 + $0xab8] sm:$0xff]
    %v367 = vld [vmem:[#allocation2 + $0xac0] sm:$0xff]
    %v368 = vld [vmem:[#allocation2 + $0xac8] sm:$0xff]
    %v369 = vld [vmem:[#allocation2 + $0xad0] sm:$0xff]
    %v370 = vld [vmem:[#allocation2 + $0xad8] sm:$0xff]
    %v371 = vld [vmem:[#allocation2 + $0xae0] sm:$0xff]
    %v372 = vld [vmem:[#allocation2 + $0xae8] sm:$0xff]
    %v373 = vld [vmem:[#allocation2 + $0xaf0] sm:$0xff]
    %v374 = vld [vmem:[#allocation2 + $0xaf8] sm:$0xff]
    %v375 = vld [vmem:[#allocation2 + $0xb00] sm:$0xff]
    %v376 = vld [vmem:[#allocation2 + $0xb08] sm:$0xff]
    %v377 = vld [vmem:[#allocation2 + $0xb10] sm:$0xff]
    %v378 = vld [vmem:[#allocation2 + $0xb18] sm:$0xff]
    %v379 = vld [vmem:[#allocation2 + $0xb20] sm:$0xff]
    %v380 = vld [vmem:[#allocation2 + $0xb28] sm:$0xff]
    %v381 = vld [vmem:[#allocation2 + $0xb30] sm:$0xff]
    %v382 = vld [vmem:[#allocation2 + $0xb38] sm:$0xff]
    %v383 = vld [vmem:[#allocation2 + $0xb40] sm:$0xff]
    %v384 = vld [vmem:[#allocation2 + $0xb48] sm:$0xff]
    %v385 = vld [vmem:[#allocation2 + $0xb50] sm:$0xff]
    %v386 = vld [vmem:[#allocation2 + $0xb58] sm:$0xff]
    %v387 = vld [vmem:[#allocation2 + $0xb60] sm:$0xff]
    %v388 = vld [vmem:[#allocation2 + $0xb68] sm:$0xff]
    %v389 = vld [vmem:[#allocation2 + $0xb70] sm:$0xff]
    %v390 = vld [vmem:[#allocation2 + $0xb78] sm:$0xff]
    %v391 = vld [vmem:[#allocation2 + $0xb80] sm:$0xff]
    %v392 = vld [vmem:[#allocation2 + $0xb88] sm:$0xff]
    %v393 = vld [vmem:[#allocation2 + $0xb90] sm:$0xff]
    %v394 = vld [vmem:[#allocation2 + $0xb98] sm:$0xff]
    %v395 = vld [vmem:[#allocation2 + $0xba0] sm:$0xff]
    %v396 = vld [vmem:[#allocation2 + $0xba8] sm:$0xff]
    %v397 = vld [vmem:[#allocation2 + $0xbb0] sm:$0xff]
    %v398 = vld [vmem:[#allocation2 + $0xbb8] sm:$0xff]
    %v399 = vld [vmem:[#allocation2 + $0xbc0] sm:$0xff]
    %v400 = vld [vmem:[#allocation2 + $0xbc8] sm:$0xff]
    %v401 = vld [vmem:[#allocation2 + $0xbd0] sm:$0xff]
    %v402 = vld [vmem:[#allocation2 + $0xbd8] sm:$0xff]
    %v403 = vld [vmem:[#allocation2 + $0xbe0] sm:$0xff]
    %v404 = vld [vmem:[#allocation2 + $0xbe8] sm:$0xff]
    %v405 = vld [vmem:[#allocation2 + $0xbf0] sm:$0xff]
    %v406 = vld [vmem:[#allocation2 + $0xbf8] sm:$0xff]
    %v407 = vld [vmem:[#allocation2 + $0xc00] sm:$0xff]
    %v408 = vld [vmem:[#allocation2 + $0xc08] sm:$0xff]
    %v409 = vld [vmem:[#allocation2 + $0xc10] sm:$0xff]
    %v410 = vld [vmem:[#allocation2 + $0xc18] sm:$0xff]
    %v411 = vld [vmem:[#allocation2 + $0xc20] sm:$0xff]
    %v412 = vld [vmem:[#allocation2 + $0xc28] sm:$0xff]
    %v413 = vld [vmem:[#allocation2 + $0xc30] sm:$0xff]
    %v414 = vld [vmem:[#allocation2 + $0xc38] sm:$0xff]
    %v415 = vld [vmem:[#allocation2 + $0xc40] sm:$0xff]
    %v416 = vld [vmem:[#allocation2 + $0xc48] sm:$0xff]
    %v417 = vld [vmem:[#allocation2 + $0xc50] sm:$0xff]
    %v418 = vld [vmem:[#allocation2 + $0xc58] sm:$0xff]
    %v419 = vld [vmem:[#allocation2 + $0xc60] sm:$0xff]
    %v420 = vld [vmem:[#allocation2 + $0xc68] sm:$0xff]
    %v421 = vld [vmem:[#allocation2 + $0xc70] sm:$0xff]
    %v422 = vld [vmem:[#allocation2 + $0xc78] sm:$0xff]
    %v423 = vld [vmem:[#allocation2 + $0xc80] sm:$0xff]
    %v424 = vld [vmem:[#allocation2 + $0xc88] sm:$0xff]
    %v425 = vld [vmem:[#allocation2 + $0xc90] sm:$0xff]
    %v426 = vld [vmem:[#allocation2 + $0xc98] sm:$0xff]
    %v427 = vld [vmem:[#allocation2 + $0xca0] sm:$0xff]
    %v428 = vld [vmem:[#allocation2 + $0xca8] sm:$0xff]
    %v429 = vld [vmem:[#allocation2 + $0xcb0] sm:$0xff]
    %v430 = vld [vmem:[#allocation2 + $0xcb8] sm:$0xff]
    %v431 = vld [vmem:[#allocation2 + $0xcc0] sm:$0xff]
    %v432 = vld [vmem:[#allocation2 + $0xcc8] sm:$0xff]
    %v433 = vld [vmem:[#allocation2 + $0xcd0] sm:$0xff]
    %v434 = vld [vmem:[#allocation2 + $0xcd8] sm:$0xff]
    %v435 = vld [vmem:[#allocation2 + $0xce0] sm:$0xff]
    %v436 = vld [vmem:[#allocation2 + $0xce8] sm:$0xff]
    %v437 = vld [vmem:[#allocation2 + $0xcf0] sm:$0xff]
    %v438 = vld [vmem:[#allocation2 + $0xcf8] sm:$0xff]
    %v439 = vld [vmem:[#allocation2 + $0xd00] sm:$0xff]
    %v440 = vld [vmem:[#allocation2 + $0xd08] sm:$0xff]
    %v441 = vld [vmem:[#allocation2 + $0xd10] sm:$0xff]
    %v442 = vld [vmem:[#allocation2 + $0xd18] sm:$0xff]
    %v443 = vld [vmem:[#allocation2 + $0xd20] sm:$0xff]
    %v444 = vld [vmem:[#allocation2 + $0xd28] sm:$0xff]
    %v445 = vld [vmem:[#allocation2 + $0xd30] sm:$0xff]
    %v446 = vld [vmem:[#allocation2 + $0xd38] sm:$0xff]
    %v447 = vld [vmem:[#allocation2 + $0xd40] sm:$0xff]
    %v448 = vld [vmem:[#allocation2 + $0xd48] sm:$0xff]
    %v449 = vld [vmem:[#allocation2 + $0xd50] sm:$0xff]
    %v450 = vld [vmem:[#allocation2 + $0xd58] sm:$0xff]
    %v451 = vld [vmem:[#allocation2 + $0xd60] sm:$0xff]
    %v452 = vld [vmem:[#allocation2 + $0xd68] sm:$0xff]
    %v453 = vld [vmem:[#allocation2 + $0xd70] sm:$0xff]
    %v454 = vld [vmem:[#allocation2 + $0xd78] sm:$0xff]
    %v455 = vld [vmem:[#allocation2 + $0xd80] sm:$0xff]
    %v456 = vld [vmem:[#allocation2 + $0xd88] sm:$0xff]
    %v457 = vld [vmem:[#allocation2 + $0xd90] sm:$0xff]
    %v458 = vld [vmem:[#allocation2 + $0xd98] sm:$0xff]
    %v459 = vld [vmem:[#allocation2 + $0xda0] sm:$0xff]
    %v460 = vld [vmem:[#allocation2 + $0xda8] sm:$0xff]
    %v461 = vld [vmem:[#allocation2 + $0xdb0] sm:$0xff]
    %v462 = vld [vmem:[#allocation2 + $0xdb8] sm:$0xff]
    %v463 = vld [vmem:[#allocation2 + $0xdc0] sm:$0xff]
    %v464 = vld [vmem:[#allocation2 + $0xdc8] sm:$0xff]
    %v465 = vld [vmem:[#allocation2 + $0xdd0] sm:$0xff]
    %v466 = vld [vmem:[#allocation2 + $0xdd8] sm:$0xff]
    %v467 = vld [vmem:[#allocation2 + $0xde0] sm:$0xff]
    %v468 = vld [vmem:[#allocation2 + $0xde8] sm:$0xff]
    %v469 = vld [vmem:[#allocation2 + $0xdf0] sm:$0xff]
    %v470 = vld [vmem:[#allocation2 + $0xdf8] sm:$0xff]
    %v471 = vld [vmem:[#allocation2 + $0xe00] sm:$0xff]
    %v472 = vld [vmem:[#allocation2 + $0xe08] sm:$0xff]
    %v473 = vld [vmem:[#allocation2 + $0xe10] sm:$0xff]
    %v474 = vld [vmem:[#allocation2 + $0xe18] sm:$0xff]
    %v475 = vld [vmem:[#allocation2 + $0xe20] sm:$0xff]
    %v476 = vld [vmem:[#allocation2 + $0xe28] sm:$0xff]
    %v477 = vld [vmem:[#allocation2 + $0xe30] sm:$0xff]
    %v478 = vld [vmem:[#allocation2 + $0xe38] sm:$0xff]
    %v479 = vld [vmem:[#allocation2 + $0xe40] sm:$0xff]
    %v480 = vld [vmem:[#allocation2 + $0xe48] sm:$0xff]
    %v481 = vld [vmem:[#allocation2 + $0xe50] sm:$0xff]
    %v482 = vld [vmem:[#allocation2 + $0xe58] sm:$0xff]
    %v483 = vld [vmem:[#allocation2 + $0xe60] sm:$0xff]
    %v484 = vld [vmem:[#allocation2 + $0xe68] sm:$0xff]
    %v485 = vld [vmem:[#allocation2 + $0xe70] sm:$0xff]
    %v486 = vld [vmem:[#allocation2 + $0xe78] sm:$0xff]
    %v487 = vld [vmem:[#allocation2 + $0xe80] sm:$0xff]
    %v488 = vld [vmem:[#allocation2 + $0xe88] sm:$0xff]
    %v489 = vld [vmem:[#allocation2 + $0xe90] sm:$0xff]
    %v490 = vld [vmem:[#allocation2 + $0xe98] sm:$0xff]
    %v491 = vld [vmem:[#allocation2 + $0xea0] sm:$0xff]
    %v492 = vld [vmem:[#allocation2 + $0xea8] sm:$0xff]
    %v493 = vld [vmem:[#allocation2 + $0xeb0] sm:$0xff]
    %v494 = vld [vmem:[#allocation2 + $0xeb8] sm:$0xff]
    %v495 = vld [vmem:[#allocation2 + $0xec0] sm:$0xff]
    %v496 = vld [vmem:[#allocation2 + $0xec8] sm:$0xff]
    %v497 = vld [vmem:[#allocation2 + $0xed0] sm:$0xff]
    %v498 = vld [vmem:[#allocation2 + $0xed8] sm:$0xff]
    %v499 = vld [vmem:[#allocation2 + $0xee0] sm:$0xff]
    %v500 = vld [vmem:[#allocation2 + $0xee8] sm:$0xff]
    %v501 = vld [vmem:[#allocation2 + $0xef0] sm:$0xff]
    %v502 = vld [vmem:[#allocation2 + $0xef8] sm:$0xff]
    %v503 = vld [vmem:[#allocation2 + $0xf00] sm:$0xff]
    %v504 = vld [vmem:[#allocation2 + $0xf08] sm:$0xff]
    %v505 = vld [vmem:[#allocation2 + $0xf10] sm:$0xff]
    %v506 = vld [vmem:[#allocation2 + $0xf18] sm:$0xff]
    %v507 = vld [vmem:[#allocation2 + $0xf20] sm:$0xff]
    %v508 = vld [vmem:[#allocation2 + $0xf28] sm:$0xff]
    %v509 = vld [vmem:[#allocation2 + $0xf30] sm:$0xff]
    %v510 = vld [vmem:[#allocation2 + $0xf38] sm:$0xff]
    %v511 = vld [vmem:[#allocation2 + $0xf40] sm:$0xff]
    %v512 = vld [vmem:[#allocation2 + $0xf48] sm:$0xff]
    %v513 = vld [vmem:[#allocation2 + $0xf50] sm:$0xff]
    %v514 = vld [vmem:[#allocation2 + $0xf58] sm:$0xff]
    %v515 = vld [vmem:[#allocation2 + $0xf60] sm:$0xff]
    %v516 = vld [vmem:[#allocation2 + $0xf68] sm:$0xff]
    %v517 = vld [vmem:[#allocation2 + $0xf70] sm:$0xff]
    %v518 = vld [vmem:[#allocation2 + $0xf78] sm:$0xff]
    %v519 = vld [vmem:[#allocation2 + $0xf80] sm:$0xff]
    %v520 = vld [vmem:[#allocation2 + $0xf88] sm:$0xff]
    %v521 = vld [vmem:[#allocation2 + $0xf90] sm:$0xff]
    %v522 = vld [vmem:[#allocation2 + $0xf98] sm:$0xff]
    %v523 = vld [vmem:[#allocation2 + $0xfa0] sm:$0xff]
    %v524 = vld [vmem:[#allocation2 + $0xfa8] sm:$0xff]
    %v525 = vld [vmem:[#allocation2 + $0xfb0] sm:$0xff]
    %v526 = vld [vmem:[#allocation2 + $0xfb8] sm:$0xff]
    %v527 = vld [vmem:[#allocation2 + $0xfc0] sm:$0xff]
    %v528 = vld [vmem:[#allocation2 + $0xfc8] sm:$0xff]
    %v529 = vld [vmem:[#allocation2 + $0xfd0] sm:$0xff]
    %v530 = vld [vmem:[#allocation2 + $0xfd8] sm:$0xff]
    %v531 = vld [vmem:[#allocation2 + $0xfe0] sm:$0xff]
    %v532 = vld [vmem:[#allocation2 + $0xfe8] sm:$0xff]
    %v533 = vld [vmem:[#allocation2 + $0xff0] sm:$0xff]
    %v534 = vld [vmem:[#allocation2 + $0xff8] sm:$0xff]
    %v535 = vld [vmem:[#allocation2 + $0x1000] sm:$0xff]
    %v536 = vld [vmem:[#allocation2 + $0x1008] sm:$0xff]
    %v537 = vld [vmem:[#allocation2 + $0x1010] sm:$0xff]
    %v538 = vld [vmem:[#allocation2 + $0x1018] sm:$0xff]
    %v539 = vld [vmem:[#allocation2 + $0x1020] sm:$0xff]
    %v540 = vld [vmem:[#allocation2 + $0x1028] sm:$0xff]
    %v541 = vld [vmem:[#allocation2 + $0x1030] sm:$0xff]
    %v542 = vld [vmem:[#allocation2 + $0x1038] sm:$0xff]
    %v543 = vld [vmem:[#allocation2 + $0x1040] sm:$0xff]
    %v544 = vld [vmem:[#allocation2 + $0x1048] sm:$0xff]
    %v545 = vld [vmem:[#allocation2 + $0x1050] sm:$0xff]
    %v546 = vld [vmem:[#allocation2 + $0x1058] sm:$0xff]
    %v547 = vld [vmem:[#allocation2 + $0x1060] sm:$0xff]
    %v548 = vld [vmem:[#allocation2 + $0x1068] sm:$0xff]
    %v549 = vld [vmem:[#allocation2 + $0x1070] sm:$0xff]
    %v550 = vld [vmem:[#allocation2 + $0x1078] sm:$0xff]
    %v551 = vld [vmem:[#allocation2 + $0x1080] sm:$0xff]
    %v552 = vld [vmem:[#allocation2 + $0x1088] sm:$0xff]
    %v553 = vld [vmem:[#allocation2 + $0x1090] sm:$0xff]
    %v554 = vld [vmem:[#allocation2 + $0x1098] sm:$0xff]
    %v555 = vld [vmem:[#allocation2 + $0x10a0] sm:$0xff]
    %v556 = vld [vmem:[#allocation2 + $0x10a8] sm:$0xff]
    %v557 = vld [vmem:[#allocation2 + $0x10b0] sm:$0xff]
    %v558 = vld [vmem:[#allocation2 + $0x10b8] sm:$0xff]
    %v559 = vld [vmem:[#allocation2 + $0x10c0] sm:$0xff]
    %v560 = vld [vmem:[#allocation2 + $0x10c8] sm:$0xff]
    %v561 = vld [vmem:[#allocation2 + $0x10d0] sm:$0xff]
    %v562 = vld [vmem:[#allocation2 + $0x10d8] sm:$0xff]
    %v563 = vld [vmem:[#allocation2 + $0x10e0] sm:$0xff]
    %v564 = vld [vmem:[#allocation2 + $0x10e8] sm:$0xff]
    %v565 = vld [vmem:[#allocation2 + $0x10f0] sm:$0xff]
    %v566 = vld [vmem:[#allocation2 + $0x10f8] sm:$0xff]
    %v567 = vld [vmem:[#allocation2 + $0x1100] sm:$0xff]
    %v568 = vld [vmem:[#allocation2 + $0x1108] sm:$0xff]
    %v569 = vld [vmem:[#allocation2 + $0x1110] sm:$0xff]
    %v570 = vld [vmem:[#allocation2 + $0x1118] sm:$0xff]
    %v571 = vld [vmem:[#allocation2 + $0x1120] sm:$0xff]
    %v572 = vld [vmem:[#allocation2 + $0x1128] sm:$0xff]
    %v573 = vld [vmem:[#allocation2 + $0x1130] sm:$0xff]
    %v574 = vld [vmem:[#allocation2 + $0x1138] sm:$0xff]
    %v575 = vld [vmem:[#allocation2 + $0x1140] sm:$0xff]
    %v576 = vld [vmem:[#allocation2 + $0x1148] sm:$0xff]
    %v577 = vld [vmem:[#allocation2 + $0x1150] sm:$0xff]
    %v578 = vld [vmem:[#allocation2 + $0x1158] sm:$0xff]
    %v579 = vld [vmem:[#allocation2 + $0x1160] sm:$0xff]
    %v580 = vld [vmem:[#allocation2 + $0x1168] sm:$0xff]
    %v581 = vld [vmem:[#allocation2 + $0x1170] sm:$0xff]
    %v582 = vld [vmem:[#allocation2 + $0x1178] sm:$0xff]
    %v583 = vld [vmem:[#allocation2 + $0x1180] sm:$0xff]
    %v584 = vld [vmem:[#allocation2 + $0x1188] sm:$0xff]
    %v585 = vld [vmem:[#allocation2 + $0x1190] sm:$0xff]
    %v586 = vld [vmem:[#allocation2 + $0x1198] sm:$0xff]
    %v587 = vld [vmem:[#allocation2 + $0x11a0] sm:$0xff]
    %v588 = vld [vmem:[#allocation2 + $0x11a8] sm:$0xff]
    %v589 = vld [vmem:[#allocation2 + $0x11b0] sm:$0xff]
    %v590 = vld [vmem:[#allocation2 + $0x11b8] sm:$0xff]
    %v591 = vld [vmem:[#allocation2 + $0x11c0] sm:$0xff]
    %v592 = vld [vmem:[#allocation2 + $0x11c8] sm:$0xff]
    %v593 = vld [vmem:[#allocation2 + $0x11d0] sm:$0xff]
    %v594 = vld [vmem:[#allocation2 + $0x11d8] sm:$0xff]
    %v595 = vld [vmem:[#allocation2 + $0x11e0] sm:$0xff]
    %v596 = vld [vmem:[#allocation2 + $0x11e8] sm:$0xff]
    %v597 = vld [vmem:[#allocation2 + $0x11f0] sm:$0xff]
    %v598 = vld [vmem:[#allocation2 + $0x11f8] sm:$0xff]
    %v599 = vld [vmem:[#allocation2 + $0x1200] sm:$0xff]
    %v600 = vld [vmem:[#allocation2 + $0x1208] sm:$0xff]
    %v601 = vld [vmem:[#allocation2 + $0x1210] sm:$0xff]
    %v602 = vld [vmem:[#allocation2 + $0x1218] sm:$0xff]
    %v603 = vld [vmem:[#allocation2 + $0x1220] sm:$0xff]
    %v604 = vld [vmem:[#allocation2 + $0x1228] sm:$0xff]
    %v605 = vld [vmem:[#allocation2 + $0x1230] sm:$0xff]
    %v606 = vld [vmem:[#allocation2 + $0x1238] sm:$0xff]
    %v607 = vld [vmem:[#allocation2 + $0x1240] sm:$0xff]
    %v608 = vld [vmem:[#allocation2 + $0x1248] sm:$0xff]
    %v609 = vld [vmem:[#allocation2 + $0x1250] sm:$0xff]
    %v610 = vld [vmem:[#allocation2 + $0x1258] sm:$0xff]
    %v611 = vld [vmem:[#allocation2 + $0x1260] sm:$0xff]
    %v612 = vld [vmem:[#allocation2 + $0x1268] sm:$0xff]
    %v613 = vld [vmem:[#allocation2 + $0x1270] sm:$0xff]
    %v614 = vld [vmem:[#allocation2 + $0x1278] sm:$0xff]
    %v615 = vld [vmem:[#allocation2 + $0x1280] sm:$0xff]
    %v616 = vld [vmem:[#allocation2 + $0x1288] sm:$0xff]
    %v617 = vld [vmem:[#allocation2 + $0x1290] sm:$0xff]
    %v618 = vld [vmem:[#allocation2 + $0x1298] sm:$0xff]
    %v619 = vld [vmem:[#allocation2 + $0x12a0] sm:$0xff]
    %v620 = vld [vmem:[#allocation2 + $0x12a8] sm:$0xff]
    %v621 = vld [vmem:[#allocation2 + $0x12b0] sm:$0xff]
    %v622 = vld [vmem:[#allocation2 + $0x12b8] sm:$0xff]
    %v623 = vld [vmem:[#allocation2 + $0x12c0] sm:$0xff]
    %v624 = vld [vmem:[#allocation2 + $0x12c8] sm:$0xff]
    %v625 = vld [vmem:[#allocation2 + $0x12d0] sm:$0xff]
    %v626 = vld [vmem:[#allocation2 + $0x12d8] sm:$0xff]
    %v627 = vld [vmem:[#allocation2 + $0x12e0] sm:$0xff]
    %v628 = vld [vmem:[#allocation2 + $0x12e8] sm:$0xff]
    %v629 = vld [vmem:[#allocation2 + $0x12f0] sm:$0xff]
    %v630 = vld [vmem:[#allocation2 + $0x12f8] sm:$0xff]
    %v631 = vld [vmem:[#allocation2 + $0x1300] sm:$0xff]
    %v632 = vld [vmem:[#allocation2 + $0x1308] sm:$0xff]
    %v633 = vld [vmem:[#allocation2 + $0x1310] sm:$0xff]
    %v634 = vld [vmem:[#allocation2 + $0x1318] sm:$0xff]
    %v635 = vld [vmem:[#allocation2 + $0x1320] sm:$0xff]
    %v636 = vld [vmem:[#allocation2 + $0x1328] sm:$0xff]
    %v637 = vld [vmem:[#allocation2 + $0x1330] sm:$0xff]
    %v638 = vld [vmem:[#allocation2 + $0x1338] sm:$0xff]
    %v639 = vld [vmem:[#allocation2 + $0x1340] sm:$0xff]
    %v640 = vld [vmem:[#allocation2 + $0x1348] sm:$0xff]
    %v641 = vld [vmem:[#allocation2 + $0x1350] sm:$0xff]
    %v642 = vld [vmem:[#allocation2 + $0x1358] sm:$0xff]
    %v643 = vld [vmem:[#allocation2 + $0x1360] sm:$0xff]
    %v644 = vld [vmem:[#allocation2 + $0x1368] sm:$0xff]
    %v645 = vld [vmem:[#allocation2 + $0x1370] sm:$0xff]
    %v646 = vld [vmem:[#allocation2 + $0x1378] sm:$0xff]
    %v647 = vld [vmem:[#allocation2 + $0x1380] sm:$0xff]
    %v648 = vld [vmem:[#allocation2 + $0x1388] sm:$0xff]
    %v649 = vld [vmem:[#allocation2 + $0x1390] sm:$0xff]
    %v650 = vld [vmem:[#allocation2 + $0x1398] sm:$0xff]
    %v651 = vld [vmem:[#allocation2 + $0x13a0] sm:$0xff]
    %v652 = vld [vmem:[#allocation2 + $0x13a8] sm:$0xff]
    %v653 = vld [vmem:[#allocation2 + $0x13b0] sm:$0xff]
    %v654 = vld [vmem:[#allocation2 + $0x13b8] sm:$0xff]
    %v655 = vld [vmem:[#allocation2 + $0x13c0] sm:$0xff]
    %v656 = vld [vmem:[#allocation2 + $0x13c8] sm:$0xff]
    %v657 = vld [vmem:[#allocation2 + $0x13d0] sm:$0xff]
    %v658 = vld [vmem:[#allocation2 + $0x13d8] sm:$0xff]
    %v659 = vld [vmem:[#allocation2 + $0x13e0] sm:$0xff]
    %v660 = vld [vmem:[#allocation2 + $0x13e8] sm:$0xff]
    %v661 = vld [vmem:[#allocation2 + $0x13f0] sm:$0xff]
    %v662 = vld [vmem:[#allocation2 + $0x13f8] sm:$0xff]
    %v663 = vld [vmem:[#allocation2 + $0x1400] sm:$0xff]
    %v664 = vld [vmem:[#allocation2 + $0x1408] sm:$0xff]
    %v665 = vld [vmem:[#allocation2 + $0x1410] sm:$0xff]
    %v666 = vld [vmem:[#allocation2 + $0x1418] sm:$0xff]
    %v667 = vld [vmem:[#allocation2 + $0x1420] sm:$0xff]
    %v668 = vld [vmem:[#allocation2 + $0x1428] sm:$0xff]
    %v669 = vld [vmem:[#allocation2 + $0x1430] sm:$0xff]
    %v670 = vld [vmem:[#allocation2 + $0x1438] sm:$0xff]
    %v671 = vld [vmem:[#allocation2 + $0x1440] sm:$0xff]
    %v672 = vld [vmem:[#allocation2 + $0x1448] sm:$0xff]
    %v673 = vld [vmem:[#allocation2 + $0x1450] sm:$0xff]
    %v674 = vld [vmem:[#allocation2 + $0x1458] sm:$0xff]
    %v675 = vld [vmem:[#allocation2 + $0x1460] sm:$0xff]
    %v676 = vld [vmem:[#allocation2 + $0x1468] sm:$0xff]
    %v677 = vld [vmem:[#allocation2 + $0x1470] sm:$0xff]
    %v678 = vld [vmem:[#allocation2 + $0x1478] sm:$0xff]
    %v679 = vld [vmem:[#allocation2 + $0x1480] sm:$0xff]
    %v680 = vld [vmem:[#allocation2 + $0x1488] sm:$0xff]
    %v681 = vld [vmem:[#allocation2 + $0x1490] sm:$0xff]
    %v682 = vld [vmem:[#allocation2 + $0x1498] sm:$0xff]
    %v683 = vld [vmem:[#allocation2 + $0x14a0] sm:$0xff]
    %v684 = vld [vmem:[#allocation2 + $0x14a8] sm:$0xff]
    %v685 = vld [vmem:[#allocation2 + $0x14b0] sm:$0xff]
    %v686 = vld [vmem:[#allocation2 + $0x14b8] sm:$0xff]
    %v687 = vld [vmem:[#allocation2 + $0x14c0] sm:$0xff]
    %v688 = vld [vmem:[#allocation2 + $0x14c8] sm:$0xff]
    %v689 = vld [vmem:[#allocation2 + $0x14d0] sm:$0xff]
    %v690 = vld [vmem:[#allocation2 + $0x14d8] sm:$0xff]
    %v691 = vld [vmem:[#allocation2 + $0x14e0] sm:$0xff]
    %v692 = vld [vmem:[#allocation2 + $0x14e8] sm:$0xff]
    %v693 = vld [vmem:[#allocation2 + $0x14f0] sm:$0xff]
    %v694 = vld [vmem:[#allocation2 + $0x14f8] sm:$0xff]
    %v695 = vld [vmem:[#allocation2 + $0x1500] sm:$0xff]
    %v696 = vld [vmem:[#allocation2 + $0x1508] sm:$0xff]
    %v697 = vld [vmem:[#allocation2 + $0x1510] sm:$0xff]
    %v698 = vld [vmem:[#allocation2 + $0x1518] sm:$0xff]
    %v699 = vld [vmem:[#allocation2 + $0x1520] sm:$0xff]
    %v700 = vld [vmem:[#allocation2 + $0x1528] sm:$0xff]
    %v701 = vld [vmem:[#allocation2 + $0x1530] sm:$0xff]
    %v702 = vld [vmem:[#allocation2 + $0x1538] sm:$0xff]
    %v703 = vld [vmem:[#allocation2 + $0x1540] sm:$0xff]
    %v704 = vld [vmem:[#allocation2 + $0x1548] sm:$0xff]
    %v705 = vld [vmem:[#allocation2 + $0x1550] sm:$0xff]
    %v706 = vld [vmem:[#allocation2 + $0x1558] sm:$0xff]
    %v707 = vld [vmem:[#allocation2 + $0x1560] sm:$0xff]
    %v708 = vld [vmem:[#allocation2 + $0x1568] sm:$0xff]
    %v709 = vld [vmem:[#allocation2 + $0x1570] sm:$0xff]
    %v710 = vld [vmem:[#allocation2 + $0x1578] sm:$0xff]
    %v711 = vld [vmem:[#allocation2 + $0x1580] sm:$0xff]
    %v712 = vld [vmem:[#allocation2 + $0x1588] sm:$0xff]
    %v713 = vld [vmem:[#allocation2 + $0x1590] sm:$0xff]
    %v714 = vld [vmem:[#allocation2 + $0x1598] sm:$0xff]
    %v715 = vld [vmem:[#allocation2 + $0x15a0] sm:$0xff]
    %v716 = vld [vmem:[#allocation2 + $0x15a8] sm:$0xff]
    %v717 = vld [vmem:[#allocation2 + $0x15b0] sm:$0xff]
    %v718 = vld [vmem:[#allocation2 + $0x15b8] sm:$0xff]
    %v719 = vld [vmem:[#allocation2 + $0x15c0] sm:$0xff]
    %v720 = vld [vmem:[#allocation2 + $0x15c8] sm:$0xff]
    %v721 = vld [vmem:[#allocation2 + $0x15d0] sm:$0xff]
    %v722 = vld [vmem:[#allocation2 + $0x15d8] sm:$0xff]
    %v723 = vld [vmem:[#allocation2 + $0x15e0] sm:$0xff]
    %v724 = vld [vmem:[#allocation2 + $0x15e8] sm:$0xff]
    %v725 = vld [vmem:[#allocation2 + $0x15f0] sm:$0xff]
    %v726 = vld [vmem:[#allocation2 + $0x15f8] sm:$0xff]
    %v727 = vld [vmem:[#allocation2 + $0x1600] sm:$0xff]
    %v728 = vld [vmem:[#allocation2 + $0x1608] sm:$0xff]
    %v729 = vld [vmem:[#allocation2 + $0x1610] sm:$0xff]
    %v730 = vld [vmem:[#allocation2 + $0x1618] sm:$0xff]
    %v731 = vld [vmem:[#allocation2 + $0x1620] sm:$0xff]
    %v732 = vld [vmem:[#allocation2 + $0x1628] sm:$0xff]
    %v733 = vld [vmem:[#allocation2 + $0x1630] sm:$0xff]
    %v734 = vld [vmem:[#allocation2 + $0x1638] sm:$0xff]
    %v735 = vld [vmem:[#allocation2 + $0x1640] sm:$0xff]
    %v736 = vld [vmem:[#allocation2 + $0x1648] sm:$0xff]
    %v737 = vld [vmem:[#allocation2 + $0x1650] sm:$0xff]
    %v738 = vld [vmem:[#allocation2 + $0x1658] sm:$0xff]
    %v739 = vld [vmem:[#allocation2 + $0x1660] sm:$0xff]
    %v740 = vld [vmem:[#allocation2 + $0x1668] sm:$0xff]
    %v741 = vld [vmem:[#allocation2 + $0x1670] sm:$0xff]
    %v742 = vld [vmem:[#allocation2 + $0x1678] sm:$0xff]
    %v743 = vld [vmem:[#allocation2 + $0x1680] sm:$0xff]
    %v744 = vld [vmem:[#allocation2 + $0x1688] sm:$0xff]
    %v745 = vld [vmem:[#allocation2 + $0x1690] sm:$0xff]
    %v746 = vld [vmem:[#allocation2 + $0x1698] sm:$0xff]
    %v747 = vld [vmem:[#allocation2 + $0x16a0] sm:$0xff]
    %v748 = vld [vmem:[#allocation2 + $0x16a8] sm:$0xff]
    %v749 = vld [vmem:[#allocation2 + $0x16b0] sm:$0xff]
    %v750 = vld [vmem:[#allocation2 + $0x16b8] sm:$0xff]
    %v751 = vld [vmem:[#allocation2 + $0x16c0] sm:$0xff]
    %v752 = vld [vmem:[#allocation2 + $0x16c8] sm:$0xff]
    %v753 = vld [vmem:[#allocation2 + $0x16d0] sm:$0xff]
    %v754 = vld [vmem:[#allocation2 + $0x16d8] sm:$0xff]
    %v755 = vld [vmem:[#allocation2 + $0x16e0] sm:$0xff]
    %v756 = vld [vmem:[#allocation2 + $0x16e8] sm:$0xff]
    %v757 = vld [vmem:[#allocation2 + $0x16f0] sm:$0xff]
    %v758 = vld [vmem:[#allocation2 + $0x16f8] sm:$0xff]
    %v759 = vld [vmem:[#allocation2 + $0x1700] sm:$0xff]
    %v760 = vld [vmem:[#allocation2 + $0x1708] sm:$0xff]
    %v761 = vld [vmem:[#allocation2 + $0x1710] sm:$0xff]
    %v762 = vld [vmem:[#allocation2 + $0x1718] sm:$0xff]
    %v763 = vld [vmem:[#allocation2 + $0x1720] sm:$0xff]
    %v764 = vld [vmem:[#allocation2 + $0x1728] sm:$0xff]
    %v765 = vld [vmem:[#allocation2 + $0x1730] sm:$0xff]
    %v766 = vld [vmem:[#allocation2 + $0x1738] sm:$0xff]
    %v767 = vld [vmem:[#allocation2 + $0x1740] sm:$0xff]
    %v768 = vld [vmem:[#allocation2 + $0x1748] sm:$0xff]
    %v769 = vld [vmem:[#allocation2 + $0x1750] sm:$0xff]
    %v770 = vld [vmem:[#allocation2 + $0x1758] sm:$0xff]
    %v771 = vld [vmem:[#allocation2 + $0x1760] sm:$0xff]
    %v772 = vld [vmem:[#allocation2 + $0x1768] sm:$0xff]
    %v773 = vld [vmem:[#allocation2 + $0x1770] sm:$0xff]
    %v774 = vld [vmem:[#allocation2 + $0x1778] sm:$0xff]
    %v775 = vld [vmem:[#allocation2 + $0x1780] sm:$0xff]
    %v776 = vld [vmem:[#allocation2 + $0x1788] sm:$0xff]
    %v777 = vld [vmem:[#allocation2 + $0x1790] sm:$0xff]
    %v778 = vld [vmem:[#allocation2 + $0x1798] sm:$0xff]
    %v779 = vld [vmem:[#allocation2 + $0x17a0] sm:$0xff]
    %v780 = vld [vmem:[#allocation2 + $0x17a8] sm:$0xff]
    %v781 = vld [vmem:[#allocation2 + $0x17b0] sm:$0xff]
    %v782 = vld [vmem:[#allocation2 + $0x17b8] sm:$0xff]
    %v783 = vld [vmem:[#allocation2 + $0x17c0] sm:$0xff]
    %v784 = vld [vmem:[#allocation2 + $0x17c8] sm:$0xff]
    %v785 = vld [vmem:[#allocation2 + $0x17d0] sm:$0xff]
    %v786 = vld [vmem:[#allocation2 + $0x17d8] sm:$0xff]
    %v787 = vld [vmem:[#allocation2 + $0x17e0] sm:$0xff]
    %v788 = vld [vmem:[#allocation2 + $0x17e8] sm:$0xff]
    %v789 = vld [vmem:[#allocation2 + $0x17f0] sm:$0xff]
    %v790 = vld [vmem:[#allocation2 + $0x17f8] sm:$0xff]
    %v791 = vld [vmem:[#allocation2 + $0x1800] sm:$0xff]
    %v792 = vld [vmem:[#allocation2 + $0x1808] sm:$0xff]
    %v793 = vld [vmem:[#allocation2 + $0x1810] sm:$0xff]
    %v794 = vld [vmem:[#allocation2 + $0x1818] sm:$0xff]
    %v795 = vld [vmem:[#allocation2 + $0x1820] sm:$0xff]
    %v796 = vld [vmem:[#allocation2 + $0x1828] sm:$0xff]
    %v797 = vld [vmem:[#allocation2 + $0x1830] sm:$0xff]
    %v798 = vld [vmem:[#allocation2 + $0x1838] sm:$0xff]
    %v799 = vld [vmem:[#allocation2 + $0x1840] sm:$0xff]
    %v800 = vld [vmem:[#allocation2 + $0x1848] sm:$0xff]
    %v801 = vld [vmem:[#allocation2 + $0x1850] sm:$0xff]
    %v802 = vld [vmem:[#allocation2 + $0x1858] sm:$0xff]
    %v803 = vld [vmem:[#allocation2 + $0x1860] sm:$0xff]
    %v804 = vld [vmem:[#allocation2 + $0x1868] sm:$0xff]
    %v805 = vld [vmem:[#allocation2 + $0x1870] sm:$0xff]
    %v806 = vld [vmem:[#allocation2 + $0x1878] sm:$0xff]
    %v807 = vld [vmem:[#allocation2 + $0x1880] sm:$0xff]
    %v808 = vld [vmem:[#allocation2 + $0x1888] sm:$0xff]
    %v809 = vld [vmem:[#allocation2 + $0x1890] sm:$0xff]
    %v810 = vld [vmem:[#allocation2 + $0x1898] sm:$0xff]
    %v811 = vld [vmem:[#allocation2 + $0x18a0] sm:$0xff]
    %v812 = vld [vmem:[#allocation2 + $0x18a8] sm:$0xff]
    %v813 = vld [vmem:[#allocation2 + $0x18b0] sm:$0xff]
    %v814 = vld [vmem:[#allocation2 + $0x18b8] sm:$0xff]
    %v815 = vld [vmem:[#allocation2 + $0x18c0] sm:$0xff]
    %v816 = vld [vmem:[#allocation2 + $0x18c8] sm:$0xff]
    %v817 = vld [vmem:[#allocation2 + $0x18d0] sm:$0xff]
    %v818 = vld [vmem:[#allocation2 + $0x18d8] sm:$0xff]
    %v819 = vld [vmem:[#allocation2 + $0x18e0] sm:$0xff]
    %v820 = vld [vmem:[#allocation2 + $0x18e8] sm:$0xff]
    %v821 = vld [vmem:[#allocation2 + $0x18f0] sm:$0xff]
    %v822 = vld [vmem:[#allocation2 + $0x18f8] sm:$0xff]
    %v823 = vld [vmem:[#allocation2 + $0x1900] sm:$0xff]
    %v824 = vld [vmem:[#allocation2 + $0x1908] sm:$0xff]
    %v825 = vld [vmem:[#allocation2 + $0x1910] sm:$0xff]
    %v826 = vld [vmem:[#allocation2 + $0x1918] sm:$0xff]
    %v827 = vld [vmem:[#allocation2 + $0x1920] sm:$0xff]
    %v828 = vld [vmem:[#allocation2 + $0x1928] sm:$0xff]
    %v829 = vld [vmem:[#allocation2 + $0x1930] sm:$0xff]
    %v830 = vld [vmem:[#allocation2 + $0x1938] sm:$0xff]
    %v831 = vld [vmem:[#allocation2 + $0x1940] sm:$0xff]
    %v832 = vld [vmem:[#allocation2 + $0x1948] sm:$0xff]
    %v833 = vld [vmem:[#allocation2 + $0x1950] sm:$0xff]
    %v834 = vld [vmem:[#allocation2 + $0x1958] sm:$0xff]
    %v835 = vld [vmem:[#allocation2 + $0x1960] sm:$0xff]
    %v836 = vld [vmem:[#allocation2 + $0x1968] sm:$0xff]
    %v837 = vld [vmem:[#allocation2 + $0x1970] sm:$0xff]
    %v838 = vld [vmem:[#allocation2 + $0x1978] sm:$0xff]
    %v839 = vld [vmem:[#allocation2 + $0x1980] sm:$0xff]
    %v840 = vld [vmem:[#allocation2 + $0x1988] sm:$0xff]
    %v841 = vld [vmem:[#allocation2 + $0x1990] sm:$0xff]
    %v842 = vld [vmem:[#allocation2 + $0x1998] sm:$0xff]
    %v843 = vld [vmem:[#allocation2 + $0x19a0] sm:$0xff]
    %v844 = vld [vmem:[#allocation2 + $0x19a8] sm:$0xff]
    %v845 = vld [vmem:[#allocation2 + $0x19b0] sm:$0xff]
    %v846 = vld [vmem:[#allocation2 + $0x19b8] sm:$0xff]
    %v847 = vld [vmem:[#allocation2 + $0x19c0] sm:$0xff]
    %v848 = vld [vmem:[#allocation2 + $0x19c8] sm:$0xff]
    %v849 = vld [vmem:[#allocation2 + $0x19d0] sm:$0xff]
    %v850 = vld [vmem:[#allocation2 + $0x19d8] sm:$0xff]
    %v851 = vld [vmem:[#allocation2 + $0x19e0] sm:$0xff]
    %v852 = vld [vmem:[#allocation2 + $0x19e8] sm:$0xff]
    %v853 = vld [vmem:[#allocation2 + $0x19f0] sm:$0xff]
    %v854 = vld [vmem:[#allocation2 + $0x19f8] sm:$0xff]
    %v855 = vld [vmem:[#allocation2 + $0x1a00] sm:$0xff]
    %v856 = vld [vmem:[#allocation2 + $0x1a08] sm:$0xff]
    %v857 = vld [vmem:[#allocation2 + $0x1a10] sm:$0xff]
    %v858 = vld [vmem:[#allocation2 + $0x1a18] sm:$0xff]
    %v859 = vld [vmem:[#allocation2 + $0x1a20] sm:$0xff]
    %v860 = vld [vmem:[#allocation2 + $0x1a28] sm:$0xff]
    %v861 = vld [vmem:[#allocation2 + $0x1a30] sm:$0xff]
    %v862 = vld [vmem:[#allocation2 + $0x1a38] sm:$0xff]
    %v863 = vld [vmem:[#allocation2 + $0x1a40] sm:$0xff]
    %v864 = vld [vmem:[#allocation2 + $0x1a48] sm:$0xff]
    %v865 = vld [vmem:[#allocation2 + $0x1a50] sm:$0xff]
    %v866 = vld [vmem:[#allocation2 + $0x1a58] sm:$0xff]
    %v867 = vld [vmem:[#allocation2 + $0x1a60] sm:$0xff]
    %v868 = vld [vmem:[#allocation2 + $0x1a68] sm:$0xff]
    %v869 = vld [vmem:[#allocation2 + $0x1a70] sm:$0xff]
    %v870 = vld [vmem:[#allocation2 + $0x1a78] sm:$0xff]
    %v871 = vld [vmem:[#allocation2 + $0x1a80] sm:$0xff]
    %v872 = vld [vmem:[#allocation2 + $0x1a88] sm:$0xff]
    %v873 = vld [vmem:[#allocation2 + $0x1a90] sm:$0xff]
    %v874 = vld [vmem:[#allocation2 + $0x1a98] sm:$0xff]
    %v875 = vld [vmem:[#allocation2 + $0x1aa0] sm:$0xff]
    %v876 = vld [vmem:[#allocation2 + $0x1aa8] sm:$0xff]
    %v877 = vld [vmem:[#allocation2 + $0x1ab0] sm:$0xff]
    %v878 = vld [vmem:[#allocation2 + $0x1ab8] sm:$0xff]
    %v879 = vld [vmem:[#allocation2 + $0x1ac0] sm:$0xff]
    %v880 = vld [vmem:[#allocation2 + $0x1ac8] sm:$0xff]
    %v881 = vld [vmem:[#allocation2 + $0x1ad0] sm:$0xff]
    %v882 = vld [vmem:[#allocation2 + $0x1ad8] sm:$0xff]
    %v883 = vld [vmem:[#allocation2 + $0x1ae0] sm:$0xff]
    %v884 = vld [vmem:[#allocation2 + $0x1ae8] sm:$0xff]
    %v885 = vld [vmem:[#allocation2 + $0x1af0] sm:$0xff]
    %v886 = vld [vmem:[#allocation2 + $0x1af8] sm:$0xff]
    %v887 = vld [vmem:[#allocation2 + $0x1b00] sm:$0xff]
    %v888 = vld [vmem:[#allocation2 + $0x1b08] sm:$0xff]
    %v889 = vld [vmem:[#allocation2 + $0x1b10] sm:$0xff]
    %v890 = vld [vmem:[#allocation2 + $0x1b18] sm:$0xff]
    %v891 = vld [vmem:[#allocation2 + $0x1b20] sm:$0xff]
    %v892 = vld [vmem:[#allocation2 + $0x1b28] sm:$0xff]
    %v893 = vld [vmem:[#allocation2 + $0x1b30] sm:$0xff]
    %v894 = vld [vmem:[#allocation2 + $0x1b38] sm:$0xff]
    %v895 = vld [vmem:[#allocation2 + $0x1b40] sm:$0xff]
    %v896 = vld [vmem:[#allocation2 + $0x1b48] sm:$0xff]
    %v897 = vld [vmem:[#allocation2 + $0x1b50] sm:$0xff]
    %v898 = vld [vmem:[#allocation2 + $0x1b58] sm:$0xff]
    %v899 = vld [vmem:[#allocation2 + $0x1b60] sm:$0xff]
    %v900 = vld [vmem:[#allocation2 + $0x1b68] sm:$0xff]
    %v901 = vld [vmem:[#allocation2 + $0x1b70] sm:$0xff]
    %v902 = vld [vmem:[#allocation2 + $0x1b78] sm:$0xff]
    %v903 = vld [vmem:[#allocation2 + $0x1b80] sm:$0xff]
    %v904 = vld [vmem:[#allocation2 + $0x1b88] sm:$0xff]
    %v905 = vld [vmem:[#allocation2 + $0x1b90] sm:$0xff]
    %v906 = vld [vmem:[#allocation2 + $0x1b98] sm:$0xff]
    %v907 = vld [vmem:[#allocation2 + $0x1ba0] sm:$0xff]
    %v908 = vld [vmem:[#allocation2 + $0x1ba8] sm:$0xff]
    %v909 = vld [vmem:[#allocation2 + $0x1bb0] sm:$0xff]
    %v910 = vld [vmem:[#allocation2 + $0x1bb8] sm:$0xff]
    %v911 = vld [vmem:[#allocation2 + $0x1bc0] sm:$0xff]
    %v912 = vld [vmem:[#allocation2 + $0x1bc8] sm:$0xff]
    %v913 = vld [vmem:[#allocation2 + $0x1bd0] sm:$0xff]
    %v914 = vld [vmem:[#allocation2 + $0x1bd8] sm:$0xff]
    %v915 = vld [vmem:[#allocation2 + $0x1be0] sm:$0xff]
    %v916 = vld [vmem:[#allocation2 + $0x1be8] sm:$0xff]
    %v917 = vld [vmem:[#allocation2 + $0x1bf0] sm:$0xff]
    %v918 = vld [vmem:[#allocation2 + $0x1bf8] sm:$0xff]
    %v919 = vld [vmem:[#allocation2 + $0x1c00] sm:$0xff]
    %v920 = vld [vmem:[#allocation2 + $0x1c08] sm:$0xff]
    %v921 = vld [vmem:[#allocation2 + $0x1c10] sm:$0xff]
    %v922 = vld [vmem:[#allocation2 + $0x1c18] sm:$0xff]
    %v923 = vld [vmem:[#allocation2 + $0x1c20] sm:$0xff]
    %v924 = vld [vmem:[#allocation2 + $0x1c28] sm:$0xff]
    %v925 = vld [vmem:[#allocation2 + $0x1c30] sm:$0xff]
    %v926 = vld [vmem:[#allocation2 + $0x1c38] sm:$0xff]
    %v927 = vld [vmem:[#allocation2 + $0x1c40] sm:$0xff]
    %v928 = vld [vmem:[#allocation2 + $0x1c48] sm:$0xff]
    %v929 = vld [vmem:[#allocation2 + $0x1c50] sm:$0xff]
    %v930 = vld [vmem:[#allocation2 + $0x1c58] sm:$0xff]
    %v931 = vld [vmem:[#allocation2 + $0x1c60] sm:$0xff]
    %v932 = vld [vmem:[#allocation2 + $0x1c68] sm:$0xff]
    %v933 = vld [vmem:[#allocation2 + $0x1c70] sm:$0xff]
    %v934 = vld [vmem:[#allocation2 + $0x1c78] sm:$0xff]
    %v935 = vld [vmem:[#allocation2 + $0x1c80] sm:$0xff]
    %v936 = vld [vmem:[#allocation2 + $0x1c88] sm:$0xff]
    %v937 = vld [vmem:[#allocation2 + $0x1c90] sm:$0xff]
    %v938 = vld [vmem:[#allocation2 + $0x1c98] sm:$0xff]
    %v939 = vld [vmem:[#allocation2 + $0x1ca0] sm:$0xff]
    %v940 = vld [vmem:[#allocation2 + $0x1ca8] sm:$0xff]
    %v941 = vld [vmem:[#allocation2 + $0x1cb0] sm:$0xff]
    %v942 = vld [vmem:[#allocation2 + $0x1cb8] sm:$0xff]
    %v943 = vld [vmem:[#allocation2 + $0x1cc0] sm:$0xff]
    %v944 = vld [vmem:[#allocation2 + $0x1cc8] sm:$0xff]
    %v945 = vld [vmem:[#allocation2 + $0x1cd0] sm:$0xff]
    %v946 = vld [vmem:[#allocation2 + $0x1cd8] sm:$0xff]
    %v947 = vld [vmem:[#allocation2 + $0x1ce0] sm:$0xff]
    %v948 = vld [vmem:[#allocation2 + $0x1ce8] sm:$0xff]
    %v949 = vld [vmem:[#allocation2 + $0x1cf0] sm:$0xff]
    %v950 = vld [vmem:[#allocation2 + $0x1cf8] sm:$0xff]
    %v951 = vld [vmem:[#allocation2 + $0x1d00] sm:$0xff]
    %v952 = vld [vmem:[#allocation2 + $0x1d08] sm:$0xff]
    %v953 = vld [vmem:[#allocation2 + $0x1d10] sm:$0xff]
    %v954 = vld [vmem:[#allocation2 + $0x1d18] sm:$0xff]
    %v955 = vld [vmem:[#allocation2 + $0x1d20] sm:$0xff]
    %v956 = vld [vmem:[#allocation2 + $0x1d28] sm:$0xff]
    %v957 = vld [vmem:[#allocation2 + $0x1d30] sm:$0xff]
    %v958 = vld [vmem:[#allocation2 + $0x1d38] sm:$0xff]
    %v959 = vld [vmem:[#allocation2 + $0x1d40] sm:$0xff]
    %v960 = vld [vmem:[#allocation2 + $0x1d48] sm:$0xff]
    %v961 = vld [vmem:[#allocation2 + $0x1d50] sm:$0xff]
    %v962 = vld [vmem:[#allocation2 + $0x1d58] sm:$0xff]
    %v963 = vld [vmem:[#allocation2 + $0x1d60] sm:$0xff]
    %v964 = vld [vmem:[#allocation2 + $0x1d68] sm:$0xff]
    %v965 = vld [vmem:[#allocation2 + $0x1d70] sm:$0xff]
    %v966 = vld [vmem:[#allocation2 + $0x1d78] sm:$0xff]
    %v967 = vld [vmem:[#allocation2 + $0x1d80] sm:$0xff]
    %v968 = vld [vmem:[#allocation2 + $0x1d88] sm:$0xff]
    %v969 = vld [vmem:[#allocation2 + $0x1d90] sm:$0xff]
    %v970 = vld [vmem:[#allocation2 + $0x1d98] sm:$0xff]
    %v971 = vld [vmem:[#allocation2 + $0x1da0] sm:$0xff]
    %v972 = vld [vmem:[#allocation2 + $0x1da8] sm:$0xff]
    %v973 = vld [vmem:[#allocation2 + $0x1db0] sm:$0xff]
    %v974 = vld [vmem:[#allocation2 + $0x1db8] sm:$0xff]
    %v975 = vld [vmem:[#allocation2 + $0x1dc0] sm:$0xff]
    %v976 = vld [vmem:[#allocation2 + $0x1dc8] sm:$0xff]
    %v977 = vld [vmem:[#allocation2 + $0x1dd0] sm:$0xff]
    %v978 = vld [vmem:[#allocation2 + $0x1dd8] sm:$0xff]
    %v979 = vld [vmem:[#allocation2 + $0x1de0] sm:$0xff]
    %v980 = vld [vmem:[#allocation2 + $0x1de8] sm:$0xff]
    %v981 = vld [vmem:[#allocation2 + $0x1df0] sm:$0xff]
    %v982 = vld [vmem:[#allocation2 + $0x1df8] sm:$0xff]
    %v983 = vld [vmem:[#allocation2 + $0x1e00] sm:$0xff]
    %v984 = vld [vmem:[#allocation2 + $0x1e08] sm:$0xff]
    %v985 = vld [vmem:[#allocation2 + $0x1e10] sm:$0xff]
    %v986 = vld [vmem:[#allocation2 + $0x1e18] sm:$0xff]
    %v987 = vld [vmem:[#allocation2 + $0x1e20] sm:$0xff]
    %v988 = vld [vmem:[#allocation2 + $0x1e28] sm:$0xff]
    %v989 = vld [vmem:[#allocation2 + $0x1e30] sm:$0xff]
    %v990 = vld [vmem:[#allocation2 + $0x1e38] sm:$0xff]
    %v991 = vld [vmem:[#allocation2 + $0x1e40] sm:$0xff]
    %v992 = vld [vmem:[#allocation2 + $0x1e48] sm:$0xff]
    %v993 = vld [vmem:[#allocation2 + $0x1e50] sm:$0xff]
    %v994 = vld [vmem:[#allocation2 + $0x1e58] sm:$0xff]
    %v995 = vld [vmem:[#allocation2 + $0x1e60] sm:$0xff]
    %v996 = vld [vmem:[#allocation2 + $0x1e68] sm:$0xff]
    %v997 = vld [vmem:[#allocation2 + $0x1e70] sm:$0xff]
    %v998 = vld [vmem:[#allocation2 + $0x1e78] sm:$0xff]
    %v999 = vld [vmem:[#allocation2 + $0x1e80] sm:$0xff]
    %v1000 = vld [vmem:[#allocation2 + $0x1e88] sm:$0xff]
    %v1001 = vld [vmem:[#allocation2 + $0x1e90] sm:$0xff]
    %v1002 = vld [vmem:[#allocation2 + $0x1e98] sm:$0xff]
    %v1003 = vld [vmem:[#allocation2 + $0x1ea0] sm:$0xff]
    %v1004 = vld [vmem:[#allocation2 + $0x1ea8] sm:$0xff]
    %v1005 = vld [vmem:[#allocation2 + $0x1eb0] sm:$0xff]
    %v1006 = vld [vmem:[#allocation2 + $0x1eb8] sm:$0xff]
    %v1007 = vld [vmem:[#allocation2 + $0x1ec0] sm:$0xff]
    %v1008 = vld [vmem:[#allocation2 + $0x1ec8] sm:$0xff]
    %v1009 = vld [vmem:[#allocation2 + $0x1ed0] sm:$0xff]
    %v1010 = vld [vmem:[#allocation2 + $0x1ed8] sm:$0xff]
    %v1011 = vld [vmem:[#allocation2 + $0x1ee0] sm:$0xff]
    %v1012 = vld [vmem:[#allocation2 + $0x1ee8] sm:$0xff]
    %v1013 = vld [vmem:[#allocation2 + $0x1ef0] sm:$0xff]
    %v1014 = vld [vmem:[#allocation2 + $0x1ef8] sm:$0xff]
    %v1015 = vld [vmem:[#allocation2 + $0x1f00] sm:$0xff]
    %v1016 = vld [vmem:[#allocation2 + $0x1f08] sm:$0xff]
    %v1017 = vld [vmem:[#allocation2 + $0x1f10] sm:$0xff]
    %v1018 = vld [vmem:[#allocation2 + $0x1f18] sm:$0xff]
    %v1019 = vld [vmem:[#allocation2 + $0x1f20] sm:$0xff]
    %v1020 = vld [vmem:[#allocation2 + $0x1f28] sm:$0xff]
    %v1021 = vld [vmem:[#allocation2 + $0x1f30] sm:$0xff]
    %v1022 = vld [vmem:[#allocation2 + $0x1f38] sm:$0xff]
    %v1023 = vld [vmem:[#allocation2 + $0x1f40] sm:$0xff]
    %v1024 = vld [vmem:[#allocation2 + $0x1f48] sm:$0xff]
    %v1025 = vld [vmem:[#allocation2 + $0x1f50] sm:$0xff]
    %v1026 = vld [vmem:[#allocation2 + $0x1f58] sm:$0xff]
    %v1027 = vld [vmem:[#allocation2 + $0x1f60] sm:$0xff]
    %v1028 = vld [vmem:[#allocation2 + $0x1f68] sm:$0xff]
    %v1029 = vld [vmem:[#allocation2 + $0x1f70] sm:$0xff]
    %v1030 = vld [vmem:[#allocation2 + $0x1f78] sm:$0xff]
    %v1031 = vld [vmem:[#allocation2 + $0x1f80] sm:$0xff]
    %v1032 = vld [vmem:[#allocation2 + $0x1f88] sm:$0xff]
    %v1033 = vld [vmem:[#allocation2 + $0x1f90] sm:$0xff]
    %v1034 = vld [vmem:[#allocation2 + $0x1f98] sm:$0xff]
    %v1035 = vld [vmem:[#allocation2 + $0x1fa0] sm:$0xff]
    %v1036 = vld [vmem:[#allocation2 + $0x1fa8] sm:$0xff]
    %v1037 = vld [vmem:[#allocation2 + $0x1fb0] sm:$0xff]
    %v1038 = vld [vmem:[#allocation2 + $0x1fb8] sm:$0xff]
    %v1039 = vld [vmem:[#allocation2 + $0x1fc0] sm:$0xff]
    %v1040 = vld [vmem:[#allocation2 + $0x1fc8] sm:$0xff]
    %v1041 = vld [vmem:[#allocation2 + $0x1fd0] sm:$0xff]
    %v1042 = vld [vmem:[#allocation2 + $0x1fd8] sm:$0xff]
    %v1043 = vld [vmem:[#allocation2 + $0x1fe0] sm:$0xff]
    %v1044 = vld [vmem:[#allocation2 + $0x1fe8] sm:$0xff]
    %v1045 = vld [vmem:[#allocation2 + $0x1ff0] sm:$0xff]
    %v1046 = vld [vmem:[#allocation2 + $0x1ff8] sm:$0xff]
    %vm1047 = vcmp.ge.f32.partialorder %v23, 0.0
    %vm1048 = vcmp.ge.f32.partialorder %v24, 0.0
    %vm1049 = vcmp.ge.f32.partialorder %v25, 0.0
    %vm1050 = vcmp.ge.f32.partialorder %v26, 0.0
    %vm1051 = vcmp.ge.f32.partialorder %v27, 0.0
    %vm1052 = vcmp.ge.f32.partialorder %v28, 0.0
    %vm1053 = vcmp.ge.f32.partialorder %v29, 0.0
    %vm1054 = vcmp.ge.f32.partialorder %v30, 0.0
    %vm1055 = vcmp.ge.f32.partialorder %v31, 0.0
    %vm1056 = vcmp.ge.f32.partialorder %v32, 0.0
    %vm1057 = vcmp.ge.f32.partialorder %v33, 0.0
    %vm1058 = vcmp.ge.f32.partialorder %v34, 0.0
    %vm1059 = vcmp.ge.f32.partialorder %v35, 0.0
    %vm1060 = vcmp.ge.f32.partialorder %v36, 0.0
    %vm1061 = vcmp.ge.f32.partialorder %v37, 0.0
    %vm1062 = vcmp.ge.f32.partialorder %v38, 0.0
    %vm1063 = vcmp.ge.f32.partialorder %v39, 0.0
    %vm1064 = vcmp.ge.f32.partialorder %v40, 0.0
    %vm1065 = vcmp.ge.f32.partialorder %v41, 0.0
    %vm1066 = vcmp.ge.f32.partialorder %v42, 0.0
    %vm1067 = vcmp.ge.f32.partialorder %v43, 0.0
    %vm1068 = vcmp.ge.f32.partialorder %v44, 0.0
    %vm1069 = vcmp.ge.f32.partialorder %v45, 0.0
    %vm1070 = vcmp.ge.f32.partialorder %v46, 0.0
    %vm1071 = vcmp.ge.f32.partialorder %v47, 0.0
    %vm1072 = vcmp.ge.f32.partialorder %v48, 0.0
    %vm1073 = vcmp.ge.f32.partialorder %v49, 0.0
    %vm1074 = vcmp.ge.f32.partialorder %v50, 0.0
    %vm1075 = vcmp.ge.f32.partialorder %v51, 0.0
    %vm1076 = vcmp.ge.f32.partialorder %v52, 0.0
    %vm1077 = vcmp.ge.f32.partialorder %v53, 0.0
    %vm1078 = vcmp.ge.f32.partialorder %v54, 0.0
    %vm1079 = vcmp.ge.f32.partialorder %v55, 0.0
    %vm1080 = vcmp.ge.f32.partialorder %v56, 0.0
    %vm1081 = vcmp.ge.f32.partialorder %v57, 0.0
    %vm1082 = vcmp.ge.f32.partialorder %v58, 0.0
    %vm1083 = vcmp.ge.f32.partialorder %v59, 0.0
    %vm1084 = vcmp.ge.f32.partialorder %v60, 0.0
    %vm1085 = vcmp.ge.f32.partialorder %v61, 0.0
    %vm1086 = vcmp.ge.f32.partialorder %v62, 0.0
    %vm1087 = vcmp.ge.f32.partialorder %v63, 0.0
    %vm1088 = vcmp.ge.f32.partialorder %v64, 0.0
    %vm1089 = vcmp.ge.f32.partialorder %v65, 0.0
    %vm1090 = vcmp.ge.f32.partialorder %v66, 0.0
    %vm1091 = vcmp.ge.f32.partialorder %v67, 0.0
    %vm1092 = vcmp.ge.f32.partialorder %v68, 0.0
    %vm1093 = vcmp.ge.f32.partialorder %v69, 0.0
    %vm1094 = vcmp.ge.f32.partialorder %v70, 0.0
    %vm1095 = vcmp.ge.f32.partialorder %v71, 0.0
    %vm1096 = vcmp.ge.f32.partialorder %v72, 0.0
    %vm1097 = vcmp.ge.f32.partialorder %v73, 0.0
    %vm1098 = vcmp.ge.f32.partialorder %v74, 0.0
    %vm1099 = vcmp.ge.f32.partialorder %v75, 0.0
    %vm1100 = vcmp.ge.f32.partialorder %v76, 0.0
    %vm1101 = vcmp.ge.f32.partialorder %v77, 0.0
    %vm1102 = vcmp.ge.f32.partialorder %v78, 0.0
    %vm1103 = vcmp.ge.f32.partialorder %v79, 0.0
    %vm1104 = vcmp.ge.f32.partialorder %v80, 0.0
    %vm1105 = vcmp.ge.f32.partialorder %v81, 0.0
    %vm1106 = vcmp.ge.f32.partialorder %v82, 0.0
    %vm1107 = vcmp.ge.f32.partialorder %v83, 0.0
    %vm1108 = vcmp.ge.f32.partialorder %v84, 0.0
    %vm1109 = vcmp.ge.f32.partialorder %v85, 0.0
    %vm1110 = vcmp.ge.f32.partialorder %v86, 0.0
    %vm1111 = vcmp.ge.f32.partialorder %v87, 0.0
    %vm1112 = vcmp.ge.f32.partialorder %v88, 0.0
    %vm1113 = vcmp.ge.f32.partialorder %v89, 0.0
    %vm1114 = vcmp.ge.f32.partialorder %v90, 0.0
    %vm1115 = vcmp.ge.f32.partialorder %v91, 0.0
    %vm1116 = vcmp.ge.f32.partialorder %v92, 0.0
    %vm1117 = vcmp.ge.f32.partialorder %v93, 0.0
    %vm1118 = vcmp.ge.f32.partialorder %v94, 0.0
    %vm1119 = vcmp.ge.f32.partialorder %v95, 0.0
    %vm1120 = vcmp.ge.f32.partialorder %v96, 0.0
    %vm1121 = vcmp.ge.f32.partialorder %v97, 0.0
    %vm1122 = vcmp.ge.f32.partialorder %v98, 0.0
    %vm1123 = vcmp.ge.f32.partialorder %v99, 0.0
    %vm1124 = vcmp.ge.f32.partialorder %v100, 0.0
    %vm1125 = vcmp.ge.f32.partialorder %v101, 0.0
    %vm1126 = vcmp.ge.f32.partialorder %v102, 0.0
    %vm1127 = vcmp.ge.f32.partialorder %v103, 0.0
    %vm1128 = vcmp.ge.f32.partialorder %v104, 0.0
    %vm1129 = vcmp.ge.f32.partialorder %v105, 0.0
    %vm1130 = vcmp.ge.f32.partialorder %v106, 0.0
    %vm1131 = vcmp.ge.f32.partialorder %v107, 0.0
    %vm1132 = vcmp.ge.f32.partialorder %v108, 0.0
    %vm1133 = vcmp.ge.f32.partialorder %v109, 0.0
    %vm1134 = vcmp.ge.f32.partialorder %v110, 0.0
    %vm1135 = vcmp.ge.f32.partialorder %v111, 0.0
    %vm1136 = vcmp.ge.f32.partialorder %v112, 0.0
    %vm1137 = vcmp.ge.f32.partialorder %v113, 0.0
    %vm1138 = vcmp.ge.f32.partialorder %v114, 0.0
    %vm1139 = vcmp.ge.f32.partialorder %v115, 0.0
    %vm1140 = vcmp.ge.f32.partialorder %v116, 0.0
    %vm1141 = vcmp.ge.f32.partialorder %v117, 0.0
    %vm1142 = vcmp.ge.f32.partialorder %v118, 0.0
    %vm1143 = vcmp.ge.f32.partialorder %v119, 0.0
    %vm1144 = vcmp.ge.f32.partialorder %v120, 0.0
    %vm1145 = vcmp.ge.f32.partialorder %v121, 0.0
    %vm1146 = vcmp.ge.f32.partialorder %v122, 0.0
    %vm1147 = vcmp.ge.f32.partialorder %v123, 0.0
    %vm1148 = vcmp.ge.f32.partialorder %v124, 0.0
    %vm1149 = vcmp.ge.f32.partialorder %v125, 0.0
    %vm1150 = vcmp.ge.f32.partialorder %v126, 0.0
    %vm1151 = vcmp.ge.f32.partialorder %v127, 0.0
    %vm1152 = vcmp.ge.f32.partialorder %v128, 0.0
    %vm1153 = vcmp.ge.f32.partialorder %v129, 0.0
    %vm1154 = vcmp.ge.f32.partialorder %v130, 0.0
    %vm1155 = vcmp.ge.f32.partialorder %v131, 0.0
    %vm1156 = vcmp.ge.f32.partialorder %v132, 0.0
    %vm1157 = vcmp.ge.f32.partialorder %v133, 0.0
    %vm1158 = vcmp.ge.f32.partialorder %v134, 0.0
    %vm1159 = vcmp.ge.f32.partialorder %v135, 0.0
    %vm1160 = vcmp.ge.f32.partialorder %v136, 0.0
    %vm1161 = vcmp.ge.f32.partialorder %v137, 0.0
    %vm1162 = vcmp.ge.f32.partialorder %v138, 0.0
    %vm1163 = vcmp.ge.f32.partialorder %v139, 0.0
    %vm1164 = vcmp.ge.f32.partialorder %v140, 0.0
    %vm1165 = vcmp.ge.f32.partialorder %v141, 0.0
    %vm1166 = vcmp.ge.f32.partialorder %v142, 0.0
    %vm1167 = vcmp.ge.f32.partialorder %v143, 0.0
    %vm1168 = vcmp.ge.f32.partialorder %v144, 0.0
    %vm1169 = vcmp.ge.f32.partialorder %v145, 0.0
    %vm1170 = vcmp.ge.f32.partialorder %v146, 0.0
    %vm1171 = vcmp.ge.f32.partialorder %v147, 0.0
    %vm1172 = vcmp.ge.f32.partialorder %v148, 0.0
    %vm1173 = vcmp.ge.f32.partialorder %v149, 0.0
    %vm1174 = vcmp.ge.f32.partialorder %v150, 0.0
    %vm1175 = vcmp.ge.f32.partialorder %v151, 0.0
    %vm1176 = vcmp.ge.f32.partialorder %v152, 0.0
    %vm1177 = vcmp.ge.f32.partialorder %v153, 0.0
    %vm1178 = vcmp.ge.f32.partialorder %v154, 0.0
    %vm1179 = vcmp.ge.f32.partialorder %v155, 0.0
    %vm1180 = vcmp.ge.f32.partialorder %v156, 0.0
    %vm1181 = vcmp.ge.f32.partialorder %v157, 0.0
    %vm1182 = vcmp.ge.f32.partialorder %v158, 0.0
    %vm1183 = vcmp.ge.f32.partialorder %v159, 0.0
    %vm1184 = vcmp.ge.f32.partialorder %v160, 0.0
    %vm1185 = vcmp.ge.f32.partialorder %v161, 0.0
    %vm1186 = vcmp.ge.f32.partialorder %v162, 0.0
    %vm1187 = vcmp.ge.f32.partialorder %v163, 0.0
    %vm1188 = vcmp.ge.f32.partialorder %v164, 0.0
    %vm1189 = vcmp.ge.f32.partialorder %v165, 0.0
    %vm1190 = vcmp.ge.f32.partialorder %v166, 0.0
    %vm1191 = vcmp.ge.f32.partialorder %v167, 0.0
    %vm1192 = vcmp.ge.f32.partialorder %v168, 0.0
    %vm1193 = vcmp.ge.f32.partialorder %v169, 0.0
    %vm1194 = vcmp.ge.f32.partialorder %v170, 0.0
    %vm1195 = vcmp.ge.f32.partialorder %v171, 0.0
    %vm1196 = vcmp.ge.f32.partialorder %v172, 0.0
    %vm1197 = vcmp.ge.f32.partialorder %v173, 0.0
    %vm1198 = vcmp.ge.f32.partialorder %v174, 0.0
    %vm1199 = vcmp.ge.f32.partialorder %v175, 0.0
    %vm1200 = vcmp.ge.f32.partialorder %v176, 0.0
    %vm1201 = vcmp.ge.f32.partialorder %v177, 0.0
    %vm1202 = vcmp.ge.f32.partialorder %v178, 0.0
    %vm1203 = vcmp.ge.f32.partialorder %v179, 0.0
    %vm1204 = vcmp.ge.f32.partialorder %v180, 0.0
    %vm1205 = vcmp.ge.f32.partialorder %v181, 0.0
    %vm1206 = vcmp.ge.f32.partialorder %v182, 0.0
    %vm1207 = vcmp.ge.f32.partialorder %v183, 0.0
    %vm1208 = vcmp.ge.f32.partialorder %v184, 0.0
    %vm1209 = vcmp.ge.f32.partialorder %v185, 0.0
    %vm1210 = vcmp.ge.f32.partialorder %v186, 0.0
    %vm1211 = vcmp.ge.f32.partialorder %v187, 0.0
    %vm1212 = vcmp.ge.f32.partialorder %v188, 0.0
    %vm1213 = vcmp.ge.f32.partialorder %v189, 0.0
    %vm1214 = vcmp.ge.f32.partialorder %v190, 0.0
    %vm1215 = vcmp.ge.f32.partialorder %v191, 0.0
    %vm1216 = vcmp.ge.f32.partialorder %v192, 0.0
    %vm1217 = vcmp.ge.f32.partialorder %v193, 0.0
    %vm1218 = vcmp.ge.f32.partialorder %v194, 0.0
    %vm1219 = vcmp.ge.f32.partialorder %v195, 0.0
    %vm1220 = vcmp.ge.f32.partialorder %v196, 0.0
    %vm1221 = vcmp.ge.f32.partialorder %v197, 0.0
    %vm1222 = vcmp.ge.f32.partialorder %v198, 0.0
    %vm1223 = vcmp.ge.f32.partialorder %v199, 0.0
    %vm1224 = vcmp.ge.f32.partialorder %v200, 0.0
    %vm1225 = vcmp.ge.f32.partialorder %v201, 0.0
    %vm1226 = vcmp.ge.f32.partialorder %v202, 0.0
    %vm1227 = vcmp.ge.f32.partialorder %v203, 0.0
    %vm1228 = vcmp.ge.f32.partialorder %v204, 0.0
    %vm1229 = vcmp.ge.f32.partialorder %v205, 0.0
    %vm1230 = vcmp.ge.f32.partialorder %v206, 0.0
    %vm1231 = vcmp.ge.f32.partialorder %v207, 0.0
    %vm1232 = vcmp.ge.f32.partialorder %v208, 0.0
    %vm1233 = vcmp.ge.f32.partialorder %v209, 0.0
    %vm1234 = vcmp.ge.f32.partialorder %v210, 0.0
    %vm1235 = vcmp.ge.f32.partialorder %v211, 0.0
    %vm1236 = vcmp.ge.f32.partialorder %v212, 0.0
    %vm1237 = vcmp.ge.f32.partialorder %v213, 0.0
    %vm1238 = vcmp.ge.f32.partialorder %v214, 0.0
    %vm1239 = vcmp.ge.f32.partialorder %v215, 0.0
    %vm1240 = vcmp.ge.f32.partialorder %v216, 0.0
    %vm1241 = vcmp.ge.f32.partialorder %v217, 0.0
    %vm1242 = vcmp.ge.f32.partialorder %v218, 0.0
    %vm1243 = vcmp.ge.f32.partialorder %v219, 0.0
    %vm1244 = vcmp.ge.f32.partialorder %v220, 0.0
    %vm1245 = vcmp.ge.f32.partialorder %v221, 0.0
    %vm1246 = vcmp.ge.f32.partialorder %v222, 0.0
    %vm1247 = vcmp.ge.f32.partialorder %v223, 0.0
    %vm1248 = vcmp.ge.f32.partialorder %v224, 0.0
    %vm1249 = vcmp.ge.f32.partialorder %v225, 0.0
    %vm1250 = vcmp.ge.f32.partialorder %v226, 0.0
    %vm1251 = vcmp.ge.f32.partialorder %v227, 0.0
    %vm1252 = vcmp.ge.f32.partialorder %v228, 0.0
    %vm1253 = vcmp.ge.f32.partialorder %v229, 0.0
    %vm1254 = vcmp.ge.f32.partialorder %v230, 0.0
    %vm1255 = vcmp.ge.f32.partialorder %v231, 0.0
    %vm1256 = vcmp.ge.f32.partialorder %v232, 0.0
    %vm1257 = vcmp.ge.f32.partialorder %v233, 0.0
    %vm1258 = vcmp.ge.f32.partialorder %v234, 0.0
    %vm1259 = vcmp.ge.f32.partialorder %v235, 0.0
    %vm1260 = vcmp.ge.f32.partialorder %v236, 0.0
    %vm1261 = vcmp.ge.f32.partialorder %v237, 0.0
    %vm1262 = vcmp.ge.f32.partialorder %v238, 0.0
    %vm1263 = vcmp.ge.f32.partialorder %v239, 0.0
    %vm1264 = vcmp.ge.f32.partialorder %v240, 0.0
    %vm1265 = vcmp.ge.f32.partialorder %v241, 0.0
    %vm1266 = vcmp.ge.f32.partialorder %v242, 0.0
    %vm1267 = vcmp.ge.f32.partialorder %v243, 0.0
    %vm1268 = vcmp.ge.f32.partialorder %v244, 0.0
    %vm1269 = vcmp.ge.f32.partialorder %v245, 0.0
    %vm1270 = vcmp.ge.f32.partialorder %v246, 0.0
    %vm1271 = vcmp.ge.f32.partialorder %v247, 0.0
    %vm1272 = vcmp.ge.f32.partialorder %v248, 0.0
    %vm1273 = vcmp.ge.f32.partialorder %v249, 0.0
    %vm1274 = vcmp.ge.f32.partialorder %v250, 0.0
    %vm1275 = vcmp.ge.f32.partialorder %v251, 0.0
    %vm1276 = vcmp.ge.f32.partialorder %v252, 0.0
    %vm1277 = vcmp.ge.f32.partialorder %v253, 0.0
    %vm1278 = vcmp.ge.f32.partialorder %v254, 0.0
    %vm1279 = vcmp.ge.f32.partialorder %v255, 0.0
    %vm1280 = vcmp.ge.f32.partialorder %v256, 0.0
    %vm1281 = vcmp.ge.f32.partialorder %v257, 0.0
    %vm1282 = vcmp.ge.f32.partialorder %v258, 0.0
    %vm1283 = vcmp.ge.f32.partialorder %v259, 0.0
    %vm1284 = vcmp.ge.f32.partialorder %v260, 0.0
    %vm1285 = vcmp.ge.f32.partialorder %v261, 0.0
    %vm1286 = vcmp.ge.f32.partialorder %v262, 0.0
    %vm1287 = vcmp.ge.f32.partialorder %v263, 0.0
    %vm1288 = vcmp.ge.f32.partialorder %v264, 0.0
    %vm1289 = vcmp.ge.f32.partialorder %v265, 0.0
    %vm1290 = vcmp.ge.f32.partialorder %v266, 0.0
    %vm1291 = vcmp.ge.f32.partialorder %v267, 0.0
    %vm1292 = vcmp.ge.f32.partialorder %v268, 0.0
    %vm1293 = vcmp.ge.f32.partialorder %v269, 0.0
    %vm1294 = vcmp.ge.f32.partialorder %v270, 0.0
    %vm1295 = vcmp.ge.f32.partialorder %v271, 0.0
    %vm1296 = vcmp.ge.f32.partialorder %v272, 0.0
    %vm1297 = vcmp.ge.f32.partialorder %v273, 0.0
    %vm1298 = vcmp.ge.f32.partialorder %v274, 0.0
    %vm1299 = vcmp.ge.f32.partialorder %v275, 0.0
    %vm1300 = vcmp.ge.f32.partialorder %v276, 0.0
    %vm1301 = vcmp.ge.f32.partialorder %v277, 0.0
    %vm1302 = vcmp.ge.f32.partialorder %v278, 0.0
    %vm1303 = vcmp.ge.f32.partialorder %v279, 0.0
    %vm1304 = vcmp.ge.f32.partialorder %v280, 0.0
    %vm1305 = vcmp.ge.f32.partialorder %v281, 0.0
    %vm1306 = vcmp.ge.f32.partialorder %v282, 0.0
    %vm1307 = vcmp.ge.f32.partialorder %v283, 0.0
    %vm1308 = vcmp.ge.f32.partialorder %v284, 0.0
    %vm1309 = vcmp.ge.f32.partialorder %v285, 0.0
    %vm1310 = vcmp.ge.f32.partialorder %v286, 0.0
    %vm1311 = vcmp.ge.f32.partialorder %v287, 0.0
    %vm1312 = vcmp.ge.f32.partialorder %v288, 0.0
    %vm1313 = vcmp.ge.f32.partialorder %v289, 0.0
    %vm1314 = vcmp.ge.f32.partialorder %v290, 0.0
    %vm1315 = vcmp.ge.f32.partialorder %v291, 0.0
    %vm1316 = vcmp.ge.f32.partialorder %v292, 0.0
    %vm1317 = vcmp.ge.f32.partialorder %v293, 0.0
    %vm1318 = vcmp.ge.f32.partialorder %v294, 0.0
    %vm1319 = vcmp.ge.f32.partialorder %v295, 0.0
    %vm1320 = vcmp.ge.f32.partialorder %v296, 0.0
    %vm1321 = vcmp.ge.f32.partialorder %v297, 0.0
    %vm1322 = vcmp.ge.f32.partialorder %v298, 0.0
    %vm1323 = vcmp.ge.f32.partialorder %v299, 0.0
    %vm1324 = vcmp.ge.f32.partialorder %v300, 0.0
    %vm1325 = vcmp.ge.f32.partialorder %v301, 0.0
    %vm1326 = vcmp.ge.f32.partialorder %v302, 0.0
    %vm1327 = vcmp.ge.f32.partialorder %v303, 0.0
    %vm1328 = vcmp.ge.f32.partialorder %v304, 0.0
    %vm1329 = vcmp.ge.f32.partialorder %v305, 0.0
    %vm1330 = vcmp.ge.f32.partialorder %v306, 0.0
    %vm1331 = vcmp.ge.f32.partialorder %v307, 0.0
    %vm1332 = vcmp.ge.f32.partialorder %v308, 0.0
    %vm1333 = vcmp.ge.f32.partialorder %v309, 0.0
    %vm1334 = vcmp.ge.f32.partialorder %v310, 0.0
    %vm1335 = vcmp.ge.f32.partialorder %v311, 0.0
    %vm1336 = vcmp.ge.f32.partialorder %v312, 0.0
    %vm1337 = vcmp.ge.f32.partialorder %v313, 0.0
    %vm1338 = vcmp.ge.f32.partialorder %v314, 0.0
    %vm1339 = vcmp.ge.f32.partialorder %v315, 0.0
    %vm1340 = vcmp.ge.f32.partialorder %v316, 0.0
    %vm1341 = vcmp.ge.f32.partialorder %v317, 0.0
    %vm1342 = vcmp.ge.f32.partialorder %v318, 0.0
    %vm1343 = vcmp.ge.f32.partialorder %v319, 0.0
    %vm1344 = vcmp.ge.f32.partialorder %v320, 0.0
    %vm1345 = vcmp.ge.f32.partialorder %v321, 0.0
    %vm1346 = vcmp.ge.f32.partialorder %v322, 0.0
    %vm1347 = vcmp.ge.f32.partialorder %v323, 0.0
    %vm1348 = vcmp.ge.f32.partialorder %v324, 0.0
    %vm1349 = vcmp.ge.f32.partialorder %v325, 0.0
    %vm1350 = vcmp.ge.f32.partialorder %v326, 0.0
    %vm1351 = vcmp.ge.f32.partialorder %v327, 0.0
    %vm1352 = vcmp.ge.f32.partialorder %v328, 0.0
    %vm1353 = vcmp.ge.f32.partialorder %v329, 0.0
    %vm1354 = vcmp.ge.f32.partialorder %v330, 0.0
    %vm1355 = vcmp.ge.f32.partialorder %v331, 0.0
    %vm1356 = vcmp.ge.f32.partialorder %v332, 0.0
    %vm1357 = vcmp.ge.f32.partialorder %v333, 0.0
    %vm1358 = vcmp.ge.f32.partialorder %v334, 0.0
    %vm1359 = vcmp.ge.f32.partialorder %v335, 0.0
    %vm1360 = vcmp.ge.f32.partialorder %v336, 0.0
    %vm1361 = vcmp.ge.f32.partialorder %v337, 0.0
    %vm1362 = vcmp.ge.f32.partialorder %v338, 0.0
    %vm1363 = vcmp.ge.f32.partialorder %v339, 0.0
    %vm1364 = vcmp.ge.f32.partialorder %v340, 0.0
    %vm1365 = vcmp.ge.f32.partialorder %v341, 0.0
    %vm1366 = vcmp.ge.f32.partialorder %v342, 0.0
    %vm1367 = vcmp.ge.f32.partialorder %v343, 0.0
    %vm1368 = vcmp.ge.f32.partialorder %v344, 0.0
    %vm1369 = vcmp.ge.f32.partialorder %v345, 0.0
    %vm1370 = vcmp.ge.f32.partialorder %v346, 0.0
    %vm1371 = vcmp.ge.f32.partialorder %v347, 0.0
    %vm1372 = vcmp.ge.f32.partialorder %v348, 0.0
    %vm1373 = vcmp.ge.f32.partialorder %v349, 0.0
    %vm1374 = vcmp.ge.f32.partialorder %v350, 0.0
    %vm1375 = vcmp.ge.f32.partialorder %v351, 0.0
    %vm1376 = vcmp.ge.f32.partialorder %v352, 0.0
    %vm1377 = vcmp.ge.f32.partialorder %v353, 0.0
    %vm1378 = vcmp.ge.f32.partialorder %v354, 0.0
    %vm1379 = vcmp.ge.f32.partialorder %v355, 0.0
    %vm1380 = vcmp.ge.f32.partialorder %v356, 0.0
    %vm1381 = vcmp.ge.f32.partialorder %v357, 0.0
    %vm1382 = vcmp.ge.f32.partialorder %v358, 0.0
    %vm1383 = vcmp.ge.f32.partialorder %v359, 0.0
    %vm1384 = vcmp.ge.f32.partialorder %v360, 0.0
    %vm1385 = vcmp.ge.f32.partialorder %v361, 0.0
    %vm1386 = vcmp.ge.f32.partialorder %v362, 0.0
    %vm1387 = vcmp.ge.f32.partialorder %v363, 0.0
    %vm1388 = vcmp.ge.f32.partialorder %v364, 0.0
    %vm1389 = vcmp.ge.f32.partialorder %v365, 0.0
    %vm1390 = vcmp.ge.f32.partialorder %v366, 0.0
    %vm1391 = vcmp.ge.f32.partialorder %v367, 0.0
    %vm1392 = vcmp.ge.f32.partialorder %v368, 0.0
    %vm1393 = vcmp.ge.f32.partialorder %v369, 0.0
    %vm1394 = vcmp.ge.f32.partialorder %v370, 0.0
    %vm1395 = vcmp.ge.f32.partialorder %v371, 0.0
    %vm1396 = vcmp.ge.f32.partialorder %v372, 0.0
    %vm1397 = vcmp.ge.f32.partialorder %v373, 0.0
    %vm1398 = vcmp.ge.f32.partialorder %v374, 0.0
    %vm1399 = vcmp.ge.f32.partialorder %v375, 0.0
    %vm1400 = vcmp.ge.f32.partialorder %v376, 0.0
    %vm1401 = vcmp.ge.f32.partialorder %v377, 0.0
    %vm1402 = vcmp.ge.f32.partialorder %v378, 0.0
    %vm1403 = vcmp.ge.f32.partialorder %v379, 0.0
    %vm1404 = vcmp.ge.f32.partialorder %v380, 0.0
    %vm1405 = vcmp.ge.f32.partialorder %v381, 0.0
    %vm1406 = vcmp.ge.f32.partialorder %v382, 0.0
    %vm1407 = vcmp.ge.f32.partialorder %v383, 0.0
    %vm1408 = vcmp.ge.f32.partialorder %v384, 0.0
    %vm1409 = vcmp.ge.f32.partialorder %v385, 0.0
    %vm1410 = vcmp.ge.f32.partialorder %v386, 0.0
    %vm1411 = vcmp.ge.f32.partialorder %v387, 0.0
    %vm1412 = vcmp.ge.f32.partialorder %v388, 0.0
    %vm1413 = vcmp.ge.f32.partialorder %v389, 0.0
    %vm1414 = vcmp.ge.f32.partialorder %v390, 0.0
    %vm1415 = vcmp.ge.f32.partialorder %v391, 0.0
    %vm1416 = vcmp.ge.f32.partialorder %v392, 0.0
    %vm1417 = vcmp.ge.f32.partialorder %v393, 0.0
    %vm1418 = vcmp.ge.f32.partialorder %v394, 0.0
    %vm1419 = vcmp.ge.f32.partialorder %v395, 0.0
    %vm1420 = vcmp.ge.f32.partialorder %v396, 0.0
    %vm1421 = vcmp.ge.f32.partialorder %v397, 0.0
    %vm1422 = vcmp.ge.f32.partialorder %v398, 0.0
    %vm1423 = vcmp.ge.f32.partialorder %v399, 0.0
    %vm1424 = vcmp.ge.f32.partialorder %v400, 0.0
    %vm1425 = vcmp.ge.f32.partialorder %v401, 0.0
    %vm1426 = vcmp.ge.f32.partialorder %v402, 0.0
    %vm1427 = vcmp.ge.f32.partialorder %v403, 0.0
    %vm1428 = vcmp.ge.f32.partialorder %v404, 0.0
    %vm1429 = vcmp.ge.f32.partialorder %v405, 0.0
    %vm1430 = vcmp.ge.f32.partialorder %v406, 0.0
    %vm1431 = vcmp.ge.f32.partialorder %v407, 0.0
    %vm1432 = vcmp.ge.f32.partialorder %v408, 0.0
    %vm1433 = vcmp.ge.f32.partialorder %v409, 0.0
    %vm1434 = vcmp.ge.f32.partialorder %v410, 0.0
    %vm1435 = vcmp.ge.f32.partialorder %v411, 0.0
    %vm1436 = vcmp.ge.f32.partialorder %v412, 0.0
    %vm1437 = vcmp.ge.f32.partialorder %v413, 0.0
    %vm1438 = vcmp.ge.f32.partialorder %v414, 0.0
    %vm1439 = vcmp.ge.f32.partialorder %v415, 0.0
    %vm1440 = vcmp.ge.f32.partialorder %v416, 0.0
    %vm1441 = vcmp.ge.f32.partialorder %v417, 0.0
    %vm1442 = vcmp.ge.f32.partialorder %v418, 0.0
    %vm1443 = vcmp.ge.f32.partialorder %v419, 0.0
    %vm1444 = vcmp.ge.f32.partialorder %v420, 0.0
    %vm1445 = vcmp.ge.f32.partialorder %v421, 0.0
    %vm1446 = vcmp.ge.f32.partialorder %v422, 0.0
    %vm1447 = vcmp.ge.f32.partialorder %v423, 0.0
    %vm1448 = vcmp.ge.f32.partialorder %v424, 0.0
    %vm1449 = vcmp.ge.f32.partialorder %v425, 0.0
    %vm1450 = vcmp.ge.f32.partialorder %v426, 0.0
    %vm1451 = vcmp.ge.f32.partialorder %v427, 0.0
    %vm1452 = vcmp.ge.f32.partialorder %v428, 0.0
    %vm1453 = vcmp.ge.f32.partialorder %v429, 0.0
    %vm1454 = vcmp.ge.f32.partialorder %v430, 0.0
    %vm1455 = vcmp.ge.f32.partialorder %v431, 0.0
    %vm1456 = vcmp.ge.f32.partialorder %v432, 0.0
    %vm1457 = vcmp.ge.f32.partialorder %v433, 0.0
    %vm1458 = vcmp.ge.f32.partialorder %v434, 0.0
    %vm1459 = vcmp.ge.f32.partialorder %v435, 0.0
    %vm1460 = vcmp.ge.f32.partialorder %v436, 0.0
    %vm1461 = vcmp.ge.f32.partialorder %v437, 0.0
    %vm1462 = vcmp.ge.f32.partialorder %v438, 0.0
    %vm1463 = vcmp.ge.f32.partialorder %v439, 0.0
    %vm1464 = vcmp.ge.f32.partialorder %v440, 0.0
    %vm1465 = vcmp.ge.f32.partialorder %v441, 0.0
    %vm1466 = vcmp.ge.f32.partialorder %v442, 0.0
    %vm1467 = vcmp.ge.f32.partialorder %v443, 0.0
    %vm1468 = vcmp.ge.f32.partialorder %v444, 0.0
    %vm1469 = vcmp.ge.f32.partialorder %v445, 0.0
    %vm1470 = vcmp.ge.f32.partialorder %v446, 0.0
    %vm1471 = vcmp.ge.f32.partialorder %v447, 0.0
    %vm1472 = vcmp.ge.f32.partialorder %v448, 0.0
    %vm1473 = vcmp.ge.f32.partialorder %v449, 0.0
    %vm1474 = vcmp.ge.f32.partialorder %v450, 0.0
    %vm1475 = vcmp.ge.f32.partialorder %v451, 0.0
    %vm1476 = vcmp.ge.f32.partialorder %v452, 0.0
    %vm1477 = vcmp.ge.f32.partialorder %v453, 0.0
    %vm1478 = vcmp.ge.f32.partialorder %v454, 0.0
    %vm1479 = vcmp.ge.f32.partialorder %v455, 0.0
    %vm1480 = vcmp.ge.f32.partialorder %v456, 0.0
    %vm1481 = vcmp.ge.f32.partialorder %v457, 0.0
    %vm1482 = vcmp.ge.f32.partialorder %v458, 0.0
    %vm1483 = vcmp.ge.f32.partialorder %v459, 0.0
    %vm1484 = vcmp.ge.f32.partialorder %v460, 0.0
    %vm1485 = vcmp.ge.f32.partialorder %v461, 0.0
    %vm1486 = vcmp.ge.f32.partialorder %v462, 0.0
    %vm1487 = vcmp.ge.f32.partialorder %v463, 0.0
    %vm1488 = vcmp.ge.f32.partialorder %v464, 0.0
    %vm1489 = vcmp.ge.f32.partialorder %v465, 0.0
    %vm1490 = vcmp.ge.f32.partialorder %v466, 0.0
    %vm1491 = vcmp.ge.f32.partialorder %v467, 0.0
    %vm1492 = vcmp.ge.f32.partialorder %v468, 0.0
    %vm1493 = vcmp.ge.f32.partialorder %v469, 0.0
    %vm1494 = vcmp.ge.f32.partialorder %v470, 0.0
    %vm1495 = vcmp.ge.f32.partialorder %v471, 0.0
    %vm1496 = vcmp.ge.f32.partialorder %v472, 0.0
    %vm1497 = vcmp.ge.f32.partialorder %v473, 0.0
    %vm1498 = vcmp.ge.f32.partialorder %v474, 0.0
    %vm1499 = vcmp.ge.f32.partialorder %v475, 0.0
    %vm1500 = vcmp.ge.f32.partialorder %v476, 0.0
    %vm1501 = vcmp.ge.f32.partialorder %v477, 0.0
    %vm1502 = vcmp.ge.f32.partialorder %v478, 0.0
    %vm1503 = vcmp.ge.f32.partialorder %v479, 0.0
    %vm1504 = vcmp.ge.f32.partialorder %v480, 0.0
    %vm1505 = vcmp.ge.f32.partialorder %v481, 0.0
    %vm1506 = vcmp.ge.f32.partialorder %v482, 0.0
    %vm1507 = vcmp.ge.f32.partialorder %v483, 0.0
    %vm1508 = vcmp.ge.f32.partialorder %v484, 0.0
    %vm1509 = vcmp.ge.f32.partialorder %v485, 0.0
    %vm1510 = vcmp.ge.f32.partialorder %v486, 0.0
    %vm1511 = vcmp.ge.f32.partialorder %v487, 0.0
    %vm1512 = vcmp.ge.f32.partialorder %v488, 0.0
    %vm1513 = vcmp.ge.f32.partialorder %v489, 0.0
    %vm1514 = vcmp.ge.f32.partialorder %v490, 0.0
    %vm1515 = vcmp.ge.f32.partialorder %v491, 0.0
    %vm1516 = vcmp.ge.f32.partialorder %v492, 0.0
    %vm1517 = vcmp.ge.f32.partialorder %v493, 0.0
    %vm1518 = vcmp.ge.f32.partialorder %v494, 0.0
    %vm1519 = vcmp.ge.f32.partialorder %v495, 0.0
    %vm1520 = vcmp.ge.f32.partialorder %v496, 0.0
    %vm1521 = vcmp.ge.f32.partialorder %v497, 0.0
    %vm1522 = vcmp.ge.f32.partialorder %v498, 0.0
    %vm1523 = vcmp.ge.f32.partialorder %v499, 0.0
    %vm1524 = vcmp.ge.f32.partialorder %v500, 0.0
    %vm1525 = vcmp.ge.f32.partialorder %v501, 0.0
    %vm1526 = vcmp.ge.f32.partialorder %v502, 0.0
    %vm1527 = vcmp.ge.f32.partialorder %v503, 0.0
    %vm1528 = vcmp.ge.f32.partialorder %v504, 0.0
    %vm1529 = vcmp.ge.f32.partialorder %v505, 0.0
    %vm1530 = vcmp.ge.f32.partialorder %v506, 0.0
    %vm1531 = vcmp.ge.f32.partialorder %v507, 0.0
    %vm1532 = vcmp.ge.f32.partialorder %v508, 0.0
    %vm1533 = vcmp.ge.f32.partialorder %v509, 0.0
    %vm1534 = vcmp.ge.f32.partialorder %v510, 0.0
    %vm1535 = vcmp.ge.f32.partialorder %v511, 0.0
    %vm1536 = vcmp.ge.f32.partialorder %v512, 0.0
    %vm1537 = vcmp.ge.f32.partialorder %v513, 0.0
    %vm1538 = vcmp.ge.f32.partialorder %v514, 0.0
    %vm1539 = vcmp.ge.f32.partialorder %v515, 0.0
    %vm1540 = vcmp.ge.f32.partialorder %v516, 0.0
    %vm1541 = vcmp.ge.f32.partialorder %v517, 0.0
    %vm1542 = vcmp.ge.f32.partialorder %v518, 0.0
    %vm1543 = vcmp.ge.f32.partialorder %v519, 0.0
    %vm1544 = vcmp.ge.f32.partialorder %v520, 0.0
    %vm1545 = vcmp.ge.f32.partialorder %v521, 0.0
    %vm1546 = vcmp.ge.f32.partialorder %v522, 0.0
    %vm1547 = vcmp.ge.f32.partialorder %v523, 0.0
    %vm1548 = vcmp.ge.f32.partialorder %v524, 0.0
    %vm1549 = vcmp.ge.f32.partialorder %v525, 0.0
    %vm1550 = vcmp.ge.f32.partialorder %v526, 0.0
    %vm1551 = vcmp.ge.f32.partialorder %v527, 0.0
    %vm1552 = vcmp.ge.f32.partialorder %v528, 0.0
    %vm1553 = vcmp.ge.f32.partialorder %v529, 0.0
    %vm1554 = vcmp.ge.f32.partialorder %v530, 0.0
    %vm1555 = vcmp.ge.f32.partialorder %v531, 0.0
    %vm1556 = vcmp.ge.f32.partialorder %v532, 0.0
    %vm1557 = vcmp.ge.f32.partialorder %v533, 0.0
    %vm1558 = vcmp.ge.f32.partialorder %v534, 0.0
    %vm1559 = vcmp.ge.f32.partialorder %v535, 0.0
    %vm1560 = vcmp.ge.f32.partialorder %v536, 0.0
    %vm1561 = vcmp.ge.f32.partialorder %v537, 0.0
    %vm1562 = vcmp.ge.f32.partialorder %v538, 0.0
    %vm1563 = vcmp.ge.f32.partialorder %v539, 0.0
    %vm1564 = vcmp.ge.f32.partialorder %v540, 0.0
    %vm1565 = vcmp.ge.f32.partialorder %v541, 0.0
    %vm1566 = vcmp.ge.f32.partialorder %v542, 0.0
    %vm1567 = vcmp.ge.f32.partialorder %v543, 0.0
    %vm1568 = vcmp.ge.f32.partialorder %v544, 0.0
    %vm1569 = vcmp.ge.f32.partialorder %v545, 0.0
    %vm1570 = vcmp.ge.f32.partialorder %v546, 0.0
    %vm1571 = vcmp.ge.f32.partialorder %v547, 0.0
    %vm1572 = vcmp.ge.f32.partialorder %v548, 0.0
    %vm1573 = vcmp.ge.f32.partialorder %v549, 0.0
    %vm1574 = vcmp.ge.f32.partialorder %v550, 0.0
    %vm1575 = vcmp.ge.f32.partialorder %v551, 0.0
    %vm1576 = vcmp.ge.f32.partialorder %v552, 0.0
    %vm1577 = vcmp.ge.f32.partialorder %v553, 0.0
    %vm1578 = vcmp.ge.f32.partialorder %v554, 0.0
    %vm1579 = vcmp.ge.f32.partialorder %v555, 0.0
    %vm1580 = vcmp.ge.f32.partialorder %v556, 0.0
    %vm1581 = vcmp.ge.f32.partialorder %v557, 0.0
    %vm1582 = vcmp.ge.f32.partialorder %v558, 0.0
    %vm1583 = vcmp.ge.f32.partialorder %v559, 0.0
    %vm1584 = vcmp.ge.f32.partialorder %v560, 0.0
    %vm1585 = vcmp.ge.f32.partialorder %v561, 0.0
    %vm1586 = vcmp.ge.f32.partialorder %v562, 0.0
    %vm1587 = vcmp.ge.f32.partialorder %v563, 0.0
    %vm1588 = vcmp.ge.f32.partialorder %v564, 0.0
    %vm1589 = vcmp.ge.f32.partialorder %v565, 0.0
    %vm1590 = vcmp.ge.f32.partialorder %v566, 0.0
    %vm1591 = vcmp.ge.f32.partialorder %v567, 0.0
    %vm1592 = vcmp.ge.f32.partialorder %v568, 0.0
    %vm1593 = vcmp.ge.f32.partialorder %v569, 0.0
    %vm1594 = vcmp.ge.f32.partialorder %v570, 0.0
    %vm1595 = vcmp.ge.f32.partialorder %v571, 0.0
    %vm1596 = vcmp.ge.f32.partialorder %v572, 0.0
    %vm1597 = vcmp.ge.f32.partialorder %v573, 0.0
    %vm1598 = vcmp.ge.f32.partialorder %v574, 0.0
    %vm1599 = vcmp.ge.f32.partialorder %v575, 0.0
    %vm1600 = vcmp.ge.f32.partialorder %v576, 0.0
    %vm1601 = vcmp.ge.f32.partialorder %v577, 0.0
    %vm1602 = vcmp.ge.f32.partialorder %v578, 0.0
    %vm1603 = vcmp.ge.f32.partialorder %v579, 0.0
    %vm1604 = vcmp.ge.f32.partialorder %v580, 0.0
    %vm1605 = vcmp.ge.f32.partialorder %v581, 0.0
    %vm1606 = vcmp.ge.f32.partialorder %v582, 0.0
    %vm1607 = vcmp.ge.f32.partialorder %v583, 0.0
    %vm1608 = vcmp.ge.f32.partialorder %v584, 0.0
    %vm1609 = vcmp.ge.f32.partialorder %v585, 0.0
    %vm1610 = vcmp.ge.f32.partialorder %v586, 0.0
    %vm1611 = vcmp.ge.f32.partialorder %v587, 0.0
    %vm1612 = vcmp.ge.f32.partialorder %v588, 0.0
    %vm1613 = vcmp.ge.f32.partialorder %v589, 0.0
    %vm1614 = vcmp.ge.f32.partialorder %v590, 0.0
    %vm1615 = vcmp.ge.f32.partialorder %v591, 0.0
    %vm1616 = vcmp.ge.f32.partialorder %v592, 0.0
    %vm1617 = vcmp.ge.f32.partialorder %v593, 0.0
    %vm1618 = vcmp.ge.f32.partialorder %v594, 0.0
    %vm1619 = vcmp.ge.f32.partialorder %v595, 0.0
    %vm1620 = vcmp.ge.f32.partialorder %v596, 0.0
    %vm1621 = vcmp.ge.f32.partialorder %v597, 0.0
    %vm1622 = vcmp.ge.f32.partialorder %v598, 0.0
    %vm1623 = vcmp.ge.f32.partialorder %v599, 0.0
    %vm1624 = vcmp.ge.f32.partialorder %v600, 0.0
    %vm1625 = vcmp.ge.f32.partialorder %v601, 0.0
    %vm1626 = vcmp.ge.f32.partialorder %v602, 0.0
    %vm1627 = vcmp.ge.f32.partialorder %v603, 0.0
    %vm1628 = vcmp.ge.f32.partialorder %v604, 0.0
    %vm1629 = vcmp.ge.f32.partialorder %v605, 0.0
    %vm1630 = vcmp.ge.f32.partialorder %v606, 0.0
    %vm1631 = vcmp.ge.f32.partialorder %v607, 0.0
    %vm1632 = vcmp.ge.f32.partialorder %v608, 0.0
    %vm1633 = vcmp.ge.f32.partialorder %v609, 0.0
    %vm1634 = vcmp.ge.f32.partialorder %v610, 0.0
    %vm1635 = vcmp.ge.f32.partialorder %v611, 0.0
    %vm1636 = vcmp.ge.f32.partialorder %v612, 0.0
    %vm1637 = vcmp.ge.f32.partialorder %v613, 0.0
    %vm1638 = vcmp.ge.f32.partialorder %v614, 0.0
    %vm1639 = vcmp.ge.f32.partialorder %v615, 0.0
    %vm1640 = vcmp.ge.f32.partialorder %v616, 0.0
    %vm1641 = vcmp.ge.f32.partialorder %v617, 0.0
    %vm1642 = vcmp.ge.f32.partialorder %v618, 0.0
    %vm1643 = vcmp.ge.f32.partialorder %v619, 0.0
    %vm1644 = vcmp.ge.f32.partialorder %v620, 0.0
    %vm1645 = vcmp.ge.f32.partialorder %v621, 0.0
    %vm1646 = vcmp.ge.f32.partialorder %v622, 0.0
    %vm1647 = vcmp.ge.f32.partialorder %v623, 0.0
    %vm1648 = vcmp.ge.f32.partialorder %v624, 0.0
    %vm1649 = vcmp.ge.f32.partialorder %v625, 0.0
    %vm1650 = vcmp.ge.f32.partialorder %v626, 0.0
    %vm1651 = vcmp.ge.f32.partialorder %v627, 0.0
    %vm1652 = vcmp.ge.f32.partialorder %v628, 0.0
    %vm1653 = vcmp.ge.f32.partialorder %v629, 0.0
    %vm1654 = vcmp.ge.f32.partialorder %v630, 0.0
    %vm1655 = vcmp.ge.f32.partialorder %v631, 0.0
    %vm1656 = vcmp.ge.f32.partialorder %v632, 0.0
    %vm1657 = vcmp.ge.f32.partialorder %v633, 0.0
    %vm1658 = vcmp.ge.f32.partialorder %v634, 0.0
    %vm1659 = vcmp.ge.f32.partialorder %v635, 0.0
    %vm1660 = vcmp.ge.f32.partialorder %v636, 0.0
    %vm1661 = vcmp.ge.f32.partialorder %v637, 0.0
    %vm1662 = vcmp.ge.f32.partialorder %v638, 0.0
    %vm1663 = vcmp.ge.f32.partialorder %v639, 0.0
    %vm1664 = vcmp.ge.f32.partialorder %v640, 0.0
    %vm1665 = vcmp.ge.f32.partialorder %v641, 0.0
    %vm1666 = vcmp.ge.f32.partialorder %v642, 0.0
    %vm1667 = vcmp.ge.f32.partialorder %v643, 0.0
    %vm1668 = vcmp.ge.f32.partialorder %v644, 0.0
    %vm1669 = vcmp.ge.f32.partialorder %v645, 0.0
    %vm1670 = vcmp.ge.f32.partialorder %v646, 0.0
    %vm1671 = vcmp.ge.f32.partialorder %v647, 0.0
    %vm1672 = vcmp.ge.f32.partialorder %v648, 0.0
    %vm1673 = vcmp.ge.f32.partialorder %v649, 0.0
    %vm1674 = vcmp.ge.f32.partialorder %v650, 0.0
    %vm1675 = vcmp.ge.f32.partialorder %v651, 0.0
    %vm1676 = vcmp.ge.f32.partialorder %v652, 0.0
    %vm1677 = vcmp.ge.f32.partialorder %v653, 0.0
    %vm1678 = vcmp.ge.f32.partialorder %v654, 0.0
    %vm1679 = vcmp.ge.f32.partialorder %v655, 0.0
    %vm1680 = vcmp.ge.f32.partialorder %v656, 0.0
    %vm1681 = vcmp.ge.f32.partialorder %v657, 0.0
    %vm1682 = vcmp.ge.f32.partialorder %v658, 0.0
    %vm1683 = vcmp.ge.f32.partialorder %v659, 0.0
    %vm1684 = vcmp.ge.f32.partialorder %v660, 0.0
    %vm1685 = vcmp.ge.f32.partialorder %v661, 0.0
    %vm1686 = vcmp.ge.f32.partialorder %v662, 0.0
    %vm1687 = vcmp.ge.f32.partialorder %v663, 0.0
    %vm1688 = vcmp.ge.f32.partialorder %v664, 0.0
    %vm1689 = vcmp.ge.f32.partialorder %v665, 0.0
    %vm1690 = vcmp.ge.f32.partialorder %v666, 0.0
    %vm1691 = vcmp.ge.f32.partialorder %v667, 0.0
    %vm1692 = vcmp.ge.f32.partialorder %v668, 0.0
    %vm1693 = vcmp.ge.f32.partialorder %v669, 0.0
    %vm1694 = vcmp.ge.f32.partialorder %v670, 0.0
    %vm1695 = vcmp.ge.f32.partialorder %v671, 0.0
    %vm1696 = vcmp.ge.f32.partialorder %v672, 0.0
    %vm1697 = vcmp.ge.f32.partialorder %v673, 0.0
    %vm1698 = vcmp.ge.f32.partialorder %v674, 0.0
    %vm1699 = vcmp.ge.f32.partialorder %v675, 0.0
    %vm1700 = vcmp.ge.f32.partialorder %v676, 0.0
    %vm1701 = vcmp.ge.f32.partialorder %v677, 0.0
    %vm1702 = vcmp.ge.f32.partialorder %v678, 0.0
    %vm1703 = vcmp.ge.f32.partialorder %v679, 0.0
    %vm1704 = vcmp.ge.f32.partialorder %v680, 0.0
    %vm1705 = vcmp.ge.f32.partialorder %v681, 0.0
    %vm1706 = vcmp.ge.f32.partialorder %v682, 0.0
    %vm1707 = vcmp.ge.f32.partialorder %v683, 0.0
    %vm1708 = vcmp.ge.f32.partialorder %v684, 0.0
    %vm1709 = vcmp.ge.f32.partialorder %v685, 0.0
    %vm1710 = vcmp.ge.f32.partialorder %v686, 0.0
    %vm1711 = vcmp.ge.f32.partialorder %v687, 0.0
    %vm1712 = vcmp.ge.f32.partialorder %v688, 0.0
    %vm1713 = vcmp.ge.f32.partialorder %v689, 0.0
    %vm1714 = vcmp.ge.f32.partialorder %v690, 0.0
    %vm1715 = vcmp.ge.f32.partialorder %v691, 0.0
    %vm1716 = vcmp.ge.f32.partialorder %v692, 0.0
    %vm1717 = vcmp.ge.f32.partialorder %v693, 0.0
    %vm1718 = vcmp.ge.f32.partialorder %v694, 0.0
    %vm1719 = vcmp.ge.f32.partialorder %v695, 0.0
    %vm1720 = vcmp.ge.f32.partialorder %v696, 0.0
    %vm1721 = vcmp.ge.f32.partialorder %v697, 0.0
    %vm1722 = vcmp.ge.f32.partialorder %v698, 0.0
    %vm1723 = vcmp.ge.f32.partialorder %v699, 0.0
    %vm1724 = vcmp.ge.f32.partialorder %v700, 0.0
    %vm1725 = vcmp.ge.f32.partialorder %v701, 0.0
    %vm1726 = vcmp.ge.f32.partialorder %v702, 0.0
    %vm1727 = vcmp.ge.f32.partialorder %v703, 0.0
    %vm1728 = vcmp.ge.f32.partialorder %v704, 0.0
    %vm1729 = vcmp.ge.f32.partialorder %v705, 0.0
    %vm1730 = vcmp.ge.f32.partialorder %v706, 0.0
    %vm1731 = vcmp.ge.f32.partialorder %v707, 0.0
    %vm1732 = vcmp.ge.f32.partialorder %v708, 0.0
    %vm1733 = vcmp.ge.f32.partialorder %v709, 0.0
    %vm1734 = vcmp.ge.f32.partialorder %v710, 0.0
    %vm1735 = vcmp.ge.f32.partialorder %v711, 0.0
    %vm1736 = vcmp.ge.f32.partialorder %v712, 0.0
    %vm1737 = vcmp.ge.f32.partialorder %v713, 0.0
    %vm1738 = vcmp.ge.f32.partialorder %v714, 0.0
    %vm1739 = vcmp.ge.f32.partialorder %v715, 0.0
    %vm1740 = vcmp.ge.f32.partialorder %v716, 0.0
    %vm1741 = vcmp.ge.f32.partialorder %v717, 0.0
    %vm1742 = vcmp.ge.f32.partialorder %v718, 0.0
    %vm1743 = vcmp.ge.f32.partialorder %v719, 0.0
    %vm1744 = vcmp.ge.f32.partialorder %v720, 0.0
    %vm1745 = vcmp.ge.f32.partialorder %v721, 0.0
    %vm1746 = vcmp.ge.f32.partialorder %v722, 0.0
    %vm1747 = vcmp.ge.f32.partialorder %v723, 0.0
    %vm1748 = vcmp.ge.f32.partialorder %v724, 0.0
    %vm1749 = vcmp.ge.f32.partialorder %v725, 0.0
    %vm1750 = vcmp.ge.f32.partialorder %v726, 0.0
    %vm1751 = vcmp.ge.f32.partialorder %v727, 0.0
    %vm1752 = vcmp.ge.f32.partialorder %v728, 0.0
    %vm1753 = vcmp.ge.f32.partialorder %v729, 0.0
    %vm1754 = vcmp.ge.f32.partialorder %v730, 0.0
    %vm1755 = vcmp.ge.f32.partialorder %v731, 0.0
    %vm1756 = vcmp.ge.f32.partialorder %v732, 0.0
    %vm1757 = vcmp.ge.f32.partialorder %v733, 0.0
    %vm1758 = vcmp.ge.f32.partialorder %v734, 0.0
    %vm1759 = vcmp.ge.f32.partialorder %v735, 0.0
    %vm1760 = vcmp.ge.f32.partialorder %v736, 0.0
    %vm1761 = vcmp.ge.f32.partialorder %v737, 0.0
    %vm1762 = vcmp.ge.f32.partialorder %v738, 0.0
    %vm1763 = vcmp.ge.f32.partialorder %v739, 0.0
    %vm1764 = vcmp.ge.f32.partialorder %v740, 0.0
    %vm1765 = vcmp.ge.f32.partialorder %v741, 0.0
    %vm1766 = vcmp.ge.f32.partialorder %v742, 0.0
    %vm1767 = vcmp.ge.f32.partialorder %v743, 0.0
    %vm1768 = vcmp.ge.f32.partialorder %v744, 0.0
    %vm1769 = vcmp.ge.f32.partialorder %v745, 0.0
    %vm1770 = vcmp.ge.f32.partialorder %v746, 0.0
    %vm1771 = vcmp.ge.f32.partialorder %v747, 0.0
    %vm1772 = vcmp.ge.f32.partialorder %v748, 0.0
    %vm1773 = vcmp.ge.f32.partialorder %v749, 0.0
    %vm1774 = vcmp.ge.f32.partialorder %v750, 0.0
    %vm1775 = vcmp.ge.f32.partialorder %v751, 0.0
    %vm1776 = vcmp.ge.f32.partialorder %v752, 0.0
    %vm1777 = vcmp.ge.f32.partialorder %v753, 0.0
    %vm1778 = vcmp.ge.f32.partialorder %v754, 0.0
    %vm1779 = vcmp.ge.f32.partialorder %v755, 0.0
    %vm1780 = vcmp.ge.f32.partialorder %v756, 0.0
    %vm1781 = vcmp.ge.f32.partialorder %v757, 0.0
    %vm1782 = vcmp.ge.f32.partialorder %v758, 0.0
    %vm1783 = vcmp.ge.f32.partialorder %v759, 0.0
    %vm1784 = vcmp.ge.f32.partialorder %v760, 0.0
    %vm1785 = vcmp.ge.f32.partialorder %v761, 0.0
    %vm1786 = vcmp.ge.f32.partialorder %v762, 0.0
    %vm1787 = vcmp.ge.f32.partialorder %v763, 0.0
    %vm1788 = vcmp.ge.f32.partialorder %v764, 0.0
    %vm1789 = vcmp.ge.f32.partialorder %v765, 0.0
    %vm1790 = vcmp.ge.f32.partialorder %v766, 0.0
    %vm1791 = vcmp.ge.f32.partialorder %v767, 0.0
    %vm1792 = vcmp.ge.f32.partialorder %v768, 0.0
    %vm1793 = vcmp.ge.f32.partialorder %v769, 0.0
    %vm1794 = vcmp.ge.f32.partialorder %v770, 0.0
    %vm1795 = vcmp.ge.f32.partialorder %v771, 0.0
    %vm1796 = vcmp.ge.f32.partialorder %v772, 0.0
    %vm1797 = vcmp.ge.f32.partialorder %v773, 0.0
    %vm1798 = vcmp.ge.f32.partialorder %v774, 0.0
    %vm1799 = vcmp.ge.f32.partialorder %v775, 0.0
    %vm1800 = vcmp.ge.f32.partialorder %v776, 0.0
    %vm1801 = vcmp.ge.f32.partialorder %v777, 0.0
    %vm1802 = vcmp.ge.f32.partialorder %v778, 0.0
    %vm1803 = vcmp.ge.f32.partialorder %v779, 0.0
    %vm1804 = vcmp.ge.f32.partialorder %v780, 0.0
    %vm1805 = vcmp.ge.f32.partialorder %v781, 0.0
    %vm1806 = vcmp.ge.f32.partialorder %v782, 0.0
    %vm1807 = vcmp.ge.f32.partialorder %v783, 0.0
    %vm1808 = vcmp.ge.f32.partialorder %v784, 0.0
    %vm1809 = vcmp.ge.f32.partialorder %v785, 0.0
    %vm1810 = vcmp.ge.f32.partialorder %v786, 0.0
    %vm1811 = vcmp.ge.f32.partialorder %v787, 0.0
    %vm1812 = vcmp.ge.f32.partialorder %v788, 0.0
    %vm1813 = vcmp.ge.f32.partialorder %v789, 0.0
    %vm1814 = vcmp.ge.f32.partialorder %v790, 0.0
    %vm1815 = vcmp.ge.f32.partialorder %v791, 0.0
    %vm1816 = vcmp.ge.f32.partialorder %v792, 0.0
    %vm1817 = vcmp.ge.f32.partialorder %v793, 0.0
    %vm1818 = vcmp.ge.f32.partialorder %v794, 0.0
    %vm1819 = vcmp.ge.f32.partialorder %v795, 0.0
    %vm1820 = vcmp.ge.f32.partialorder %v796, 0.0
    %vm1821 = vcmp.ge.f32.partialorder %v797, 0.0
    %vm1822 = vcmp.ge.f32.partialorder %v798, 0.0
    %vm1823 = vcmp.ge.f32.partialorder %v799, 0.0
    %vm1824 = vcmp.ge.f32.partialorder %v800, 0.0
    %vm1825 = vcmp.ge.f32.partialorder %v801, 0.0
    %vm1826 = vcmp.ge.f32.partialorder %v802, 0.0
    %vm1827 = vcmp.ge.f32.partialorder %v803, 0.0
    %vm1828 = vcmp.ge.f32.partialorder %v804, 0.0
    %vm1829 = vcmp.ge.f32.partialorder %v805, 0.0
    %vm1830 = vcmp.ge.f32.partialorder %v806, 0.0
    %vm1831 = vcmp.ge.f32.partialorder %v807, 0.0
    %vm1832 = vcmp.ge.f32.partialorder %v808, 0.0
    %vm1833 = vcmp.ge.f32.partialorder %v809, 0.0
    %vm1834 = vcmp.ge.f32.partialorder %v810, 0.0
    %vm1835 = vcmp.ge.f32.partialorder %v811, 0.0
    %vm1836 = vcmp.ge.f32.partialorder %v812, 0.0
    %vm1837 = vcmp.ge.f32.partialorder %v813, 0.0
    %vm1838 = vcmp.ge.f32.partialorder %v814, 0.0
    %vm1839 = vcmp.ge.f32.partialorder %v815, 0.0
    %vm1840 = vcmp.ge.f32.partialorder %v816, 0.0
    %vm1841 = vcmp.ge.f32.partialorder %v817, 0.0
    %vm1842 = vcmp.ge.f32.partialorder %v818, 0.0
    %vm1843 = vcmp.ge.f32.partialorder %v819, 0.0
    %vm1844 = vcmp.ge.f32.partialorder %v820, 0.0
    %vm1845 = vcmp.ge.f32.partialorder %v821, 0.0
    %vm1846 = vcmp.ge.f32.partialorder %v822, 0.0
    %vm1847 = vcmp.ge.f32.partialorder %v823, 0.0
    %vm1848 = vcmp.ge.f32.partialorder %v824, 0.0
    %vm1849 = vcmp.ge.f32.partialorder %v825, 0.0
    %vm1850 = vcmp.ge.f32.partialorder %v826, 0.0
    %vm1851 = vcmp.ge.f32.partialorder %v827, 0.0
    %vm1852 = vcmp.ge.f32.partialorder %v828, 0.0
    %vm1853 = vcmp.ge.f32.partialorder %v829, 0.0
    %vm1854 = vcmp.ge.f32.partialorder %v830, 0.0
    %vm1855 = vcmp.ge.f32.partialorder %v831, 0.0
    %vm1856 = vcmp.ge.f32.partialorder %v832, 0.0
    %vm1857 = vcmp.ge.f32.partialorder %v833, 0.0
    %vm1858 = vcmp.ge.f32.partialorder %v834, 0.0
    %vm1859 = vcmp.ge.f32.partialorder %v835, 0.0
    %vm1860 = vcmp.ge.f32.partialorder %v836, 0.0
    %vm1861 = vcmp.ge.f32.partialorder %v837, 0.0
    %vm1862 = vcmp.ge.f32.partialorder %v838, 0.0
    %vm1863 = vcmp.ge.f32.partialorder %v839, 0.0
    %vm1864 = vcmp.ge.f32.partialorder %v840, 0.0
    %vm1865 = vcmp.ge.f32.partialorder %v841, 0.0
    %vm1866 = vcmp.ge.f32.partialorder %v842, 0.0
    %vm1867 = vcmp.ge.f32.partialorder %v843, 0.0
    %vm1868 = vcmp.ge.f32.partialorder %v844, 0.0
    %vm1869 = vcmp.ge.f32.partialorder %v845, 0.0
    %vm1870 = vcmp.ge.f32.partialorder %v846, 0.0
    %vm1871 = vcmp.ge.f32.partialorder %v847, 0.0
    %vm1872 = vcmp.ge.f32.partialorder %v848, 0.0
    %vm1873 = vcmp.ge.f32.partialorder %v849, 0.0
    %vm1874 = vcmp.ge.f32.partialorder %v850, 0.0
    %vm1875 = vcmp.ge.f32.partialorder %v851, 0.0
    %vm1876 = vcmp.ge.f32.partialorder %v852, 0.0
    %vm1877 = vcmp.ge.f32.partialorder %v853, 0.0
    %vm1878 = vcmp.ge.f32.partialorder %v854, 0.0
    %vm1879 = vcmp.ge.f32.partialorder %v855, 0.0
    %vm1880 = vcmp.ge.f32.partialorder %v856, 0.0
    %vm1881 = vcmp.ge.f32.partialorder %v857, 0.0
    %vm1882 = vcmp.ge.f32.partialorder %v858, 0.0
    %vm1883 = vcmp.ge.f32.partialorder %v859, 0.0
    %vm1884 = vcmp.ge.f32.partialorder %v860, 0.0
    %vm1885 = vcmp.ge.f32.partialorder %v861, 0.0
    %vm1886 = vcmp.ge.f32.partialorder %v862, 0.0
    %vm1887 = vcmp.ge.f32.partialorder %v863, 0.0
    %vm1888 = vcmp.ge.f32.partialorder %v864, 0.0
    %vm1889 = vcmp.ge.f32.partialorder %v865, 0.0
    %vm1890 = vcmp.ge.f32.partialorder %v866, 0.0
    %vm1891 = vcmp.ge.f32.partialorder %v867, 0.0
    %vm1892 = vcmp.ge.f32.partialorder %v868, 0.0
    %vm1893 = vcmp.ge.f32.partialorder %v869, 0.0
    %vm1894 = vcmp.ge.f32.partialorder %v870, 0.0
    %vm1895 = vcmp.ge.f32.partialorder %v871, 0.0
    %vm1896 = vcmp.ge.f32.partialorder %v872, 0.0
    %vm1897 = vcmp.ge.f32.partialorder %v873, 0.0
    %vm1898 = vcmp.ge.f32.partialorder %v874, 0.0
    %vm1899 = vcmp.ge.f32.partialorder %v875, 0.0
    %vm1900 = vcmp.ge.f32.partialorder %v876, 0.0
    %vm1901 = vcmp.ge.f32.partialorder %v877, 0.0
    %vm1902 = vcmp.ge.f32.partialorder %v878, 0.0
    %vm1903 = vcmp.ge.f32.partialorder %v879, 0.0
    %vm1904 = vcmp.ge.f32.partialorder %v880, 0.0
    %vm1905 = vcmp.ge.f32.partialorder %v881, 0.0
    %vm1906 = vcmp.ge.f32.partialorder %v882, 0.0
    %vm1907 = vcmp.ge.f32.partialorder %v883, 0.0
    %vm1908 = vcmp.ge.f32.partialorder %v884, 0.0
    %vm1909 = vcmp.ge.f32.partialorder %v885, 0.0
    %vm1910 = vcmp.ge.f32.partialorder %v886, 0.0
    %vm1911 = vcmp.ge.f32.partialorder %v887, 0.0
    %vm1912 = vcmp.ge.f32.partialorder %v888, 0.0
    %vm1913 = vcmp.ge.f32.partialorder %v889, 0.0
    %vm1914 = vcmp.ge.f32.partialorder %v890, 0.0
    %vm1915 = vcmp.ge.f32.partialorder %v891, 0.0
    %vm1916 = vcmp.ge.f32.partialorder %v892, 0.0
    %vm1917 = vcmp.ge.f32.partialorder %v893, 0.0
    %vm1918 = vcmp.ge.f32.partialorder %v894, 0.0
    %vm1919 = vcmp.ge.f32.partialorder %v895, 0.0
    %vm1920 = vcmp.ge.f32.partialorder %v896, 0.0
    %vm1921 = vcmp.ge.f32.partialorder %v897, 0.0
    %vm1922 = vcmp.ge.f32.partialorder %v898, 0.0
    %vm1923 = vcmp.ge.f32.partialorder %v899, 0.0
    %vm1924 = vcmp.ge.f32.partialorder %v900, 0.0
    %vm1925 = vcmp.ge.f32.partialorder %v901, 0.0
    %vm1926 = vcmp.ge.f32.partialorder %v902, 0.0
    %vm1927 = vcmp.ge.f32.partialorder %v903, 0.0
    %vm1928 = vcmp.ge.f32.partialorder %v904, 0.0
    %vm1929 = vcmp.ge.f32.partialorder %v905, 0.0
    %vm1930 = vcmp.ge.f32.partialorder %v906, 0.0
    %vm1931 = vcmp.ge.f32.partialorder %v907, 0.0
    %vm1932 = vcmp.ge.f32.partialorder %v908, 0.0
    %vm1933 = vcmp.ge.f32.partialorder %v909, 0.0
    %vm1934 = vcmp.ge.f32.partialorder %v910, 0.0
    %vm1935 = vcmp.ge.f32.partialorder %v911, 0.0
    %vm1936 = vcmp.ge.f32.partialorder %v912, 0.0
    %vm1937 = vcmp.ge.f32.partialorder %v913, 0.0
    %vm1938 = vcmp.ge.f32.partialorder %v914, 0.0
    %vm1939 = vcmp.ge.f32.partialorder %v915, 0.0
    %vm1940 = vcmp.ge.f32.partialorder %v916, 0.0
    %vm1941 = vcmp.ge.f32.partialorder %v917, 0.0
    %vm1942 = vcmp.ge.f32.partialorder %v918, 0.0
    %vm1943 = vcmp.ge.f32.partialorder %v919, 0.0
    %vm1944 = vcmp.ge.f32.partialorder %v920, 0.0
    %vm1945 = vcmp.ge.f32.partialorder %v921, 0.0
    %vm1946 = vcmp.ge.f32.partialorder %v922, 0.0
    %vm1947 = vcmp.ge.f32.partialorder %v923, 0.0
    %vm1948 = vcmp.ge.f32.partialorder %v924, 0.0
    %vm1949 = vcmp.ge.f32.partialorder %v925, 0.0
    %vm1950 = vcmp.ge.f32.partialorder %v926, 0.0
    %vm1951 = vcmp.ge.f32.partialorder %v927, 0.0
    %vm1952 = vcmp.ge.f32.partialorder %v928, 0.0
    %vm1953 = vcmp.ge.f32.partialorder %v929, 0.0
    %vm1954 = vcmp.ge.f32.partialorder %v930, 0.0
    %vm1955 = vcmp.ge.f32.partialorder %v931, 0.0
    %vm1956 = vcmp.ge.f32.partialorder %v932, 0.0
    %vm1957 = vcmp.ge.f32.partialorder %v933, 0.0
    %vm1958 = vcmp.ge.f32.partialorder %v934, 0.0
    %vm1959 = vcmp.ge.f32.partialorder %v935, 0.0
    %vm1960 = vcmp.ge.f32.partialorder %v936, 0.0
    %vm1961 = vcmp.ge.f32.partialorder %v937, 0.0
    %vm1962 = vcmp.ge.f32.partialorder %v938, 0.0
    %vm1963 = vcmp.ge.f32.partialorder %v939, 0.0
    %vm1964 = vcmp.ge.f32.partialorder %v940, 0.0
    %vm1965 = vcmp.ge.f32.partialorder %v941, 0.0
    %vm1966 = vcmp.ge.f32.partialorder %v942, 0.0
    %vm1967 = vcmp.ge.f32.partialorder %v943, 0.0
    %vm1968 = vcmp.ge.f32.partialorder %v944, 0.0
    %vm1969 = vcmp.ge.f32.partialorder %v945, 0.0
    %vm1970 = vcmp.ge.f32.partialorder %v946, 0.0
    %vm1971 = vcmp.ge.f32.partialorder %v947, 0.0
    %vm1972 = vcmp.ge.f32.partialorder %v948, 0.0
    %vm1973 = vcmp.ge.f32.partialorder %v949, 0.0
    %vm1974 = vcmp.ge.f32.partialorder %v950, 0.0
    %vm1975 = vcmp.ge.f32.partialorder %v951, 0.0
    %vm1976 = vcmp.ge.f32.partialorder %v952, 0.0
    %vm1977 = vcmp.ge.f32.partialorder %v953, 0.0
    %vm1978 = vcmp.ge.f32.partialorder %v954, 0.0
    %vm1979 = vcmp.ge.f32.partialorder %v955, 0.0
    %vm1980 = vcmp.ge.f32.partialorder %v956, 0.0
    %vm1981 = vcmp.ge.f32.partialorder %v957, 0.0
    %vm1982 = vcmp.ge.f32.partialorder %v958, 0.0
    %vm1983 = vcmp.ge.f32.partialorder %v959, 0.0
    %vm1984 = vcmp.ge.f32.partialorder %v960, 0.0
    %vm1985 = vcmp.ge.f32.partialorder %v961, 0.0
    %vm1986 = vcmp.ge.f32.partialorder %v962, 0.0
    %vm1987 = vcmp.ge.f32.partialorder %v963, 0.0
    %vm1988 = vcmp.ge.f32.partialorder %v964, 0.0
    %vm1989 = vcmp.ge.f32.partialorder %v965, 0.0
    %vm1990 = vcmp.ge.f32.partialorder %v966, 0.0
    %vm1991 = vcmp.ge.f32.partialorder %v967, 0.0
    %vm1992 = vcmp.ge.f32.partialorder %v968, 0.0
    %vm1993 = vcmp.ge.f32.partialorder %v969, 0.0
    %vm1994 = vcmp.ge.f32.partialorder %v970, 0.0
    %vm1995 = vcmp.ge.f32.partialorder %v971, 0.0
    %vm1996 = vcmp.ge.f32.partialorder %v972, 0.0
    %vm1997 = vcmp.ge.f32.partialorder %v973, 0.0
    %vm1998 = vcmp.ge.f32.partialorder %v974, 0.0
    %vm1999 = vcmp.ge.f32.partialorder %v975, 0.0
    %vm2000 = vcmp.ge.f32.partialorder %v976, 0.0
    %vm2001 = vcmp.ge.f32.partialorder %v977, 0.0
    %vm2002 = vcmp.ge.f32.partialorder %v978, 0.0
    %vm2003 = vcmp.ge.f32.partialorder %v979, 0.0
    %vm2004 = vcmp.ge.f32.partialorder %v980, 0.0
    %vm2005 = vcmp.ge.f32.partialorder %v981, 0.0
    %vm2006 = vcmp.ge.f32.partialorder %v982, 0.0
    %vm2007 = vcmp.ge.f32.partialorder %v983, 0.0
    %vm2008 = vcmp.ge.f32.partialorder %v984, 0.0
    %vm2009 = vcmp.ge.f32.partialorder %v985, 0.0
    %vm2010 = vcmp.ge.f32.partialorder %v986, 0.0
    %vm2011 = vcmp.ge.f32.partialorder %v987, 0.0
    %vm2012 = vcmp.ge.f32.partialorder %v988, 0.0
    %vm2013 = vcmp.ge.f32.partialorder %v989, 0.0
    %vm2014 = vcmp.ge.f32.partialorder %v990, 0.0
    %vm2015 = vcmp.ge.f32.partialorder %v991, 0.0
    %vm2016 = vcmp.ge.f32.partialorder %v992, 0.0
    %vm2017 = vcmp.ge.f32.partialorder %v993, 0.0
    %vm2018 = vcmp.ge.f32.partialorder %v994, 0.0
    %vm2019 = vcmp.ge.f32.partialorder %v995, 0.0
    %vm2020 = vcmp.ge.f32.partialorder %v996, 0.0
    %vm2021 = vcmp.ge.f32.partialorder %v997, 0.0
    %vm2022 = vcmp.ge.f32.partialorder %v998, 0.0
    %vm2023 = vcmp.ge.f32.partialorder %v999, 0.0
    %vm2024 = vcmp.ge.f32.partialorder %v1000, 0.0
    %vm2025 = vcmp.ge.f32.partialorder %v1001, 0.0
    %vm2026 = vcmp.ge.f32.partialorder %v1002, 0.0
    %vm2027 = vcmp.ge.f32.partialorder %v1003, 0.0
    %vm2028 = vcmp.ge.f32.partialorder %v1004, 0.0
    %vm2029 = vcmp.ge.f32.partialorder %v1005, 0.0
    %vm2030 = vcmp.ge.f32.partialorder %v1006, 0.0
    %vm2031 = vcmp.ge.f32.partialorder %v1007, 0.0
    %vm2032 = vcmp.ge.f32.partialorder %v1008, 0.0
    %vm2033 = vcmp.ge.f32.partialorder %v1009, 0.0
    %vm2034 = vcmp.ge.f32.partialorder %v1010, 0.0
    %vm2035 = vcmp.ge.f32.partialorder %v1011, 0.0
    %vm2036 = vcmp.ge.f32.partialorder %v1012, 0.0
    %vm2037 = vcmp.ge.f32.partialorder %v1013, 0.0
    %vm2038 = vcmp.ge.f32.partialorder %v1014, 0.0
    %vm2039 = vcmp.ge.f32.partialorder %v1015, 0.0
    %vm2040 = vcmp.ge.f32.partialorder %v1016, 0.0
    %vm2041 = vcmp.ge.f32.partialorder %v1017, 0.0
    %vm2042 = vcmp.ge.f32.partialorder %v1018, 0.0
    %vm2043 = vcmp.ge.f32.partialorder %v1019, 0.0
    %vm2044 = vcmp.ge.f32.partialorder %v1020, 0.0
    %vm2045 = vcmp.ge.f32.partialorder %v1021, 0.0
    %vm2046 = vcmp.ge.f32.partialorder %v1022, 0.0
    %vm2047 = vcmp.ge.f32.partialorder %v1023, 0.0
    %vm2048 = vcmp.ge.f32.partialorder %v1024, 0.0
    %vm2049 = vcmp.ge.f32.partialorder %v1025, 0.0
    %vm2050 = vcmp.ge.f32.partialorder %v1026, 0.0
    %vm2051 = vcmp.ge.f32.partialorder %v1027, 0.0
    %vm2052 = vcmp.ge.f32.partialorder %v1028, 0.0
    %vm2053 = vcmp.ge.f32.partialorder %v1029, 0.0
    %vm2054 = vcmp.ge.f32.partialorder %v1030, 0.0
    %vm2055 = vcmp.ge.f32.partialorder %v1031, 0.0
    %vm2056 = vcmp.ge.f32.partialorder %v1032, 0.0
    %vm2057 = vcmp.ge.f32.partialorder %v1033, 0.0
    %vm2058 = vcmp.ge.f32.partialorder %v1034, 0.0
    %vm2059 = vcmp.ge.f32.partialorder %v1035, 0.0
    %vm2060 = vcmp.ge.f32.partialorder %v1036, 0.0
    %vm2061 = vcmp.ge.f32.partialorder %v1037, 0.0
    %vm2062 = vcmp.ge.f32.partialorder %v1038, 0.0
    %vm2063 = vcmp.ge.f32.partialorder %v1039, 0.0
    %vm2064 = vcmp.ge.f32.partialorder %v1040, 0.0
    %vm2065 = vcmp.ge.f32.partialorder %v1041, 0.0
    %vm2066 = vcmp.ge.f32.partialorder %v1042, 0.0
    %vm2067 = vcmp.ge.f32.partialorder %v1043, 0.0
    %vm2068 = vcmp.ge.f32.partialorder %v1044, 0.0
    %vm2069 = vcmp.ge.f32.partialorder %v1045, 0.0
    %vm2070 = vcmp.ge.f32.partialorder %v1046, 0.0
    %v2071 = vmul.f32 %v23, 0.01
    %v2072 = vmul.f32 %v24, 0.01
    %v2073 = vmul.f32 %v25, 0.01
    %v2074 = vmul.f32 %v26, 0.01
    %v2075 = vmul.f32 %v27, 0.01
    %v2076 = vmul.f32 %v28, 0.01
    %v2077 = vmul.f32 %v29, 0.01
    %v2078 = vmul.f32 %v30, 0.01
    %v2079 = vmul.f32 %v31, 0.01
    %v2080 = vmul.f32 %v32, 0.01
    %v2081 = vmul.f32 %v33, 0.01
    %v2082 = vmul.f32 %v34, 0.01
    %v2083 = vmul.f32 %v35, 0.01
    %v2084 = vmul.f32 %v36, 0.01
    %v2085 = vmul.f32 %v37, 0.01
    %v2086 = vmul.f32 %v38, 0.01
    %v2087 = vmul.f32 %v39, 0.01
    %v2088 = vmul.f32 %v40, 0.01
    %v2089 = vmul.f32 %v41, 0.01
    %v2090 = vmul.f32 %v42, 0.01
    %v2091 = vmul.f32 %v43, 0.01
    %v2092 = vmul.f32 %v44, 0.01
    %v2093 = vmul.f32 %v45, 0.01
    %v2094 = vmul.f32 %v46, 0.01
    %v2095 = vmul.f32 %v47, 0.01
    %v2096 = vmul.f32 %v48, 0.01
    %v2097 = vmul.f32 %v49, 0.01
    %v2098 = vmul.f32 %v50, 0.01
    %v2099 = vmul.f32 %v51, 0.01
    %v2100 = vmul.f32 %v52, 0.01
    %v2101 = vmul.f32 %v53, 0.01
    %v2102 = vmul.f32 %v54, 0.01
    %v2103 = vmul.f32 %v55, 0.01
    %v2104 = vmul.f32 %v56, 0.01
    %v2105 = vmul.f32 %v57, 0.01
    %v2106 = vmul.f32 %v58, 0.01
    %v2107 = vmul.f32 %v59, 0.01
    %v2108 = vmul.f32 %v60, 0.01
    %v2109 = vmul.f32 %v61, 0.01
    %v2110 = vmul.f32 %v62, 0.01
    %v2111 = vmul.f32 %v63, 0.01
    %v2112 = vmul.f32 %v64, 0.01
    %v2113 = vmul.f32 %v65, 0.01
    %v2114 = vmul.f32 %v66, 0.01
    %v2115 = vmul.f32 %v67, 0.01
    %v2116 = vmul.f32 %v68, 0.01
    %v2117 = vmul.f32 %v69, 0.01
    %v2118 = vmul.f32 %v70, 0.01
    %v2119 = vmul.f32 %v71, 0.01
    %v2120 = vmul.f32 %v72, 0.01
    %v2121 = vmul.f32 %v73, 0.01
    %v2122 = vmul.f32 %v74, 0.01
    %v2123 = vmul.f32 %v75, 0.01
    %v2124 = vmul.f32 %v76, 0.01
    %v2125 = vmul.f32 %v77, 0.01
    %v2126 = vmul.f32 %v78, 0.01
    %v2127 = vmul.f32 %v79, 0.01
    %v2128 = vmul.f32 %v80, 0.01
    %v2129 = vmul.f32 %v81, 0.01
    %v2130 = vmul.f32 %v82, 0.01
    %v2131 = vmul.f32 %v83, 0.01
    %v2132 = vmul.f32 %v84, 0.01
    %v2133 = vmul.f32 %v85, 0.01
    %v2134 = vmul.f32 %v86, 0.01
    %v2135 = vmul.f32 %v87, 0.01
    %v2136 = vmul.f32 %v88, 0.01
    %v2137 = vmul.f32 %v89, 0.01
    %v2138 = vmul.f32 %v90, 0.01
    %v2139 = vmul.f32 %v91, 0.01
    %v2140 = vmul.f32 %v92, 0.01
    %v2141 = vmul.f32 %v93, 0.01
    %v2142 = vmul.f32 %v94, 0.01
    %v2143 = vmul.f32 %v95, 0.01
    %v2144 = vmul.f32 %v96, 0.01
    %v2145 = vmul.f32 %v97, 0.01
    %v2146 = vmul.f32 %v98, 0.01
    %v2147 = vmul.f32 %v99, 0.01
    %v2148 = vmul.f32 %v100, 0.01
    %v2149 = vmul.f32 %v101, 0.01
    %v2150 = vmul.f32 %v102, 0.01
    %v2151 = vmul.f32 %v103, 0.01
    %v2152 = vmul.f32 %v104, 0.01
    %v2153 = vmul.f32 %v105, 0.01
    %v2154 = vmul.f32 %v106, 0.01
    %v2155 = vmul.f32 %v107, 0.01
    %v2156 = vmul.f32 %v108, 0.01
    %v2157 = vmul.f32 %v109, 0.01
    %v2158 = vmul.f32 %v110, 0.01
    %v2159 = vmul.f32 %v111, 0.01
    %v2160 = vmul.f32 %v112, 0.01
    %v2161 = vmul.f32 %v113, 0.01
    %v2162 = vmul.f32 %v114, 0.01
    %v2163 = vmul.f32 %v115, 0.01
    %v2164 = vmul.f32 %v116, 0.01
    %v2165 = vmul.f32 %v117, 0.01
    %v2166 = vmul.f32 %v118, 0.01
    %v2167 = vmul.f32 %v119, 0.01
    %v2168 = vmul.f32 %v120, 0.01
    %v2169 = vmul.f32 %v121, 0.01
    %v2170 = vmul.f32 %v122, 0.01
    %v2171 = vmul.f32 %v123, 0.01
    %v2172 = vmul.f32 %v124, 0.01
    %v2173 = vmul.f32 %v125, 0.01
    %v2174 = vmul.f32 %v126, 0.01
    %v2175 = vmul.f32 %v127, 0.01
    %v2176 = vmul.f32 %v128, 0.01
    %v2177 = vmul.f32 %v129, 0.01
    %v2178 = vmul.f32 %v130, 0.01
    %v2179 = vmul.f32 %v131, 0.01
    %v2180 = vmul.f32 %v132, 0.01
    %v2181 = vmul.f32 %v133, 0.01
    %v2182 = vmul.f32 %v134, 0.01
    %v2183 = vmul.f32 %v135, 0.01
    %v2184 = vmul.f32 %v136, 0.01
    %v2185 = vmul.f32 %v137, 0.01
    %v2186 = vmul.f32 %v138, 0.01
    %v2187 = vmul.f32 %v139, 0.01
    %v2188 = vmul.f32 %v140, 0.01
    %v2189 = vmul.f32 %v141, 0.01
    %v2190 = vmul.f32 %v142, 0.01
    %v2191 = vmul.f32 %v143, 0.01
    %v2192 = vmul.f32 %v144, 0.01
    %v2193 = vmul.f32 %v145, 0.01
    %v2194 = vmul.f32 %v146, 0.01
    %v2195 = vmul.f32 %v147, 0.01
    %v2196 = vmul.f32 %v148, 0.01
    %v2197 = vmul.f32 %v149, 0.01
    %v2198 = vmul.f32 %v150, 0.01
    %v2199 = vmul.f32 %v151, 0.01
    %v2200 = vmul.f32 %v152, 0.01
    %v2201 = vmul.f32 %v153, 0.01
    %v2202 = vmul.f32 %v154, 0.01
    %v2203 = vmul.f32 %v155, 0.01
    %v2204 = vmul.f32 %v156, 0.01
    %v2205 = vmul.f32 %v157, 0.01
    %v2206 = vmul.f32 %v158, 0.01
    %v2207 = vmul.f32 %v159, 0.01
    %v2208 = vmul.f32 %v160, 0.01
    %v2209 = vmul.f32 %v161, 0.01
    %v2210 = vmul.f32 %v162, 0.01
    %v2211 = vmul.f32 %v163, 0.01
    %v2212 = vmul.f32 %v164, 0.01
    %v2213 = vmul.f32 %v165, 0.01
    %v2214 = vmul.f32 %v166, 0.01
    %v2215 = vmul.f32 %v167, 0.01
    %v2216 = vmul.f32 %v168, 0.01
    %v2217 = vmul.f32 %v169, 0.01
    %v2218 = vmul.f32 %v170, 0.01
    %v2219 = vmul.f32 %v171, 0.01
    %v2220 = vmul.f32 %v172, 0.01
    %v2221 = vmul.f32 %v173, 0.01
    %v2222 = vmul.f32 %v174, 0.01
    %v2223 = vmul.f32 %v175, 0.01
    %v2224 = vmul.f32 %v176, 0.01
    %v2225 = vmul.f32 %v177, 0.01
    %v2226 = vmul.f32 %v178, 0.01
    %v2227 = vmul.f32 %v179, 0.01
    %v2228 = vmul.f32 %v180, 0.01
    %v2229 = vmul.f32 %v181, 0.01
    %v2230 = vmul.f32 %v182, 0.01
    %v2231 = vmul.f32 %v183, 0.01
    %v2232 = vmul.f32 %v184, 0.01
    %v2233 = vmul.f32 %v185, 0.01
    %v2234 = vmul.f32 %v186, 0.01
    %v2235 = vmul.f32 %v187, 0.01
    %v2236 = vmul.f32 %v188, 0.01
    %v2237 = vmul.f32 %v189, 0.01
    %v2238 = vmul.f32 %v190, 0.01
    %v2239 = vmul.f32 %v191, 0.01
    %v2240 = vmul.f32 %v192, 0.01
    %v2241 = vmul.f32 %v193, 0.01
    %v2242 = vmul.f32 %v194, 0.01
    %v2243 = vmul.f32 %v195, 0.01
    %v2244 = vmul.f32 %v196, 0.01
    %v2245 = vmul.f32 %v197, 0.01
    %v2246 = vmul.f32 %v198, 0.01
    %v2247 = vmul.f32 %v199, 0.01
    %v2248 = vmul.f32 %v200, 0.01
    %v2249 = vmul.f32 %v201, 0.01
    %v2250 = vmul.f32 %v202, 0.01
    %v2251 = vmul.f32 %v203, 0.01
    %v2252 = vmul.f32 %v204, 0.01
    %v2253 = vmul.f32 %v205, 0.01
    %v2254 = vmul.f32 %v206, 0.01
    %v2255 = vmul.f32 %v207, 0.01
    %v2256 = vmul.f32 %v208, 0.01
    %v2257 = vmul.f32 %v209, 0.01
    %v2258 = vmul.f32 %v210, 0.01
    %v2259 = vmul.f32 %v211, 0.01
    %v2260 = vmul.f32 %v212, 0.01
    %v2261 = vmul.f32 %v213, 0.01
    %v2262 = vmul.f32 %v214, 0.01
    %v2263 = vmul.f32 %v215, 0.01
    %v2264 = vmul.f32 %v216, 0.01
    %v2265 = vmul.f32 %v217, 0.01
    %v2266 = vmul.f32 %v218, 0.01
    %v2267 = vmul.f32 %v219, 0.01
    %v2268 = vmul.f32 %v220, 0.01
    %v2269 = vmul.f32 %v221, 0.01
    %v2270 = vmul.f32 %v222, 0.01
    %v2271 = vmul.f32 %v223, 0.01
    %v2272 = vmul.f32 %v224, 0.01
    %v2273 = vmul.f32 %v225, 0.01
    %v2274 = vmul.f32 %v226, 0.01
    %v2275 = vmul.f32 %v227, 0.01
    %v2276 = vmul.f32 %v228, 0.01
    %v2277 = vmul.f32 %v229, 0.01
    %v2278 = vmul.f32 %v230, 0.01
    %v2279 = vmul.f32 %v231, 0.01
    %v2280 = vmul.f32 %v232, 0.01
    %v2281 = vmul.f32 %v233, 0.01
    %v2282 = vmul.f32 %v234, 0.01
    %v2283 = vmul.f32 %v235, 0.01
    %v2284 = vmul.f32 %v236, 0.01
    %v2285 = vmul.f32 %v237, 0.01
    %v2286 = vmul.f32 %v238, 0.01
    %v2287 = vmul.f32 %v239, 0.01
    %v2288 = vmul.f32 %v240, 0.01
    %v2289 = vmul.f32 %v241, 0.01
    %v2290 = vmul.f32 %v242, 0.01
    %v2291 = vmul.f32 %v243, 0.01
    %v2292 = vmul.f32 %v244, 0.01
    %v2293 = vmul.f32 %v245, 0.01
    %v2294 = vmul.f32 %v246, 0.01
    %v2295 = vmul.f32 %v247, 0.01
    %v2296 = vmul.f32 %v248, 0.01
    %v2297 = vmul.f32 %v249, 0.01
    %v2298 = vmul.f32 %v250, 0.01
    %v2299 = vmul.f32 %v251, 0.01
    %v2300 = vmul.f32 %v252, 0.01
    %v2301 = vmul.f32 %v253, 0.01
    %v2302 = vmul.f32 %v254, 0.01
    %v2303 = vmul.f32 %v255, 0.01
    %v2304 = vmul.f32 %v256, 0.01
    %v2305 = vmul.f32 %v257, 0.01
    %v2306 = vmul.f32 %v258, 0.01
    %v2307 = vmul.f32 %v259, 0.01
    %v2308 = vmul.f32 %v260, 0.01
    %v2309 = vmul.f32 %v261, 0.01
    %v2310 = vmul.f32 %v262, 0.01
    %v2311 = vmul.f32 %v263, 0.01
    %v2312 = vmul.f32 %v264, 0.01
    %v2313 = vmul.f32 %v265, 0.01
    %v2314 = vmul.f32 %v266, 0.01
    %v2315 = vmul.f32 %v267, 0.01
    %v2316 = vmul.f32 %v268, 0.01
    %v2317 = vmul.f32 %v269, 0.01
    %v2318 = vmul.f32 %v270, 0.01
    %v2319 = vmul.f32 %v271, 0.01
    %v2320 = vmul.f32 %v272, 0.01
    %v2321 = vmul.f32 %v273, 0.01
    %v2322 = vmul.f32 %v274, 0.01
    %v2323 = vmul.f32 %v275, 0.01
    %v2324 = vmul.f32 %v276, 0.01
    %v2325 = vmul.f32 %v277, 0.01
    %v2326 = vmul.f32 %v278, 0.01
    %v2327 = vmul.f32 %v279, 0.01
    %v2328 = vmul.f32 %v280, 0.01
    %v2329 = vmul.f32 %v281, 0.01
    %v2330 = vmul.f32 %v282, 0.01
    %v2331 = vmul.f32 %v283, 0.01
    %v2332 = vmul.f32 %v284, 0.01
    %v2333 = vmul.f32 %v285, 0.01
    %v2334 = vmul.f32 %v286, 0.01
    %v2335 = vmul.f32 %v287, 0.01
    %v2336 = vmul.f32 %v288, 0.01
    %v2337 = vmul.f32 %v289, 0.01
    %v2338 = vmul.f32 %v290, 0.01
    %v2339 = vmul.f32 %v291, 0.01
    %v2340 = vmul.f32 %v292, 0.01
    %v2341 = vmul.f32 %v293, 0.01
    %v2342 = vmul.f32 %v294, 0.01
    %v2343 = vmul.f32 %v295, 0.01
    %v2344 = vmul.f32 %v296, 0.01
    %v2345 = vmul.f32 %v297, 0.01
    %v2346 = vmul.f32 %v298, 0.01
    %v2347 = vmul.f32 %v299, 0.01
    %v2348 = vmul.f32 %v300, 0.01
    %v2349 = vmul.f32 %v301, 0.01
    %v2350 = vmul.f32 %v302, 0.01
    %v2351 = vmul.f32 %v303, 0.01
    %v2352 = vmul.f32 %v304, 0.01
    %v2353 = vmul.f32 %v305, 0.01
    %v2354 = vmul.f32 %v306, 0.01
    %v2355 = vmul.f32 %v307, 0.01
    %v2356 = vmul.f32 %v308, 0.01
    %v2357 = vmul.f32 %v309, 0.01
    %v2358 = vmul.f32 %v310, 0.01
    %v2359 = vmul.f32 %v311, 0.01
    %v2360 = vmul.f32 %v312, 0.01
    %v2361 = vmul.f32 %v313, 0.01
    %v2362 = vmul.f32 %v314, 0.01
    %v2363 = vmul.f32 %v315, 0.01
    %v2364 = vmul.f32 %v316, 0.01
    %v2365 = vmul.f32 %v317, 0.01
    %v2366 = vmul.f32 %v318, 0.01
    %v2367 = vmul.f32 %v319, 0.01
    %v2368 = vmul.f32 %v320, 0.01
    %v2369 = vmul.f32 %v321, 0.01
    %v2370 = vmul.f32 %v322, 0.01
    %v2371 = vmul.f32 %v323, 0.01
    %v2372 = vmul.f32 %v324, 0.01
    %v2373 = vmul.f32 %v325, 0.01
    %v2374 = vmul.f32 %v326, 0.01
    %v2375 = vmul.f32 %v327, 0.01
    %v2376 = vmul.f32 %v328, 0.01
    %v2377 = vmul.f32 %v329, 0.01
    %v2378 = vmul.f32 %v330, 0.01
    %v2379 = vmul.f32 %v331, 0.01
    %v2380 = vmul.f32 %v332, 0.01
    %v2381 = vmul.f32 %v333, 0.01
    %v2382 = vmul.f32 %v334, 0.01
    %v2383 = vmul.f32 %v335, 0.01
    %v2384 = vmul.f32 %v336, 0.01
    %v2385 = vmul.f32 %v337, 0.01
    %v2386 = vmul.f32 %v338, 0.01
    %v2387 = vmul.f32 %v339, 0.01
    %v2388 = vmul.f32 %v340, 0.01
    %v2389 = vmul.f32 %v341, 0.01
    %v2390 = vmul.f32 %v342, 0.01
    %v2391 = vmul.f32 %v343, 0.01
    %v2392 = vmul.f32 %v344, 0.01
    %v2393 = vmul.f32 %v345, 0.01
    %v2394 = vmul.f32 %v346, 0.01
    %v2395 = vmul.f32 %v347, 0.01
    %v2396 = vmul.f32 %v348, 0.01
    %v2397 = vmul.f32 %v349, 0.01
    %v2398 = vmul.f32 %v350, 0.01
    %v2399 = vmul.f32 %v351, 0.01
    %v2400 = vmul.f32 %v352, 0.01
    %v2401 = vmul.f32 %v353, 0.01
    %v2402 = vmul.f32 %v354, 0.01
    %v2403 = vmul.f32 %v355, 0.01
    %v2404 = vmul.f32 %v356, 0.01
    %v2405 = vmul.f32 %v357, 0.01
    %v2406 = vmul.f32 %v358, 0.01
    %v2407 = vmul.f32 %v359, 0.01
    %v2408 = vmul.f32 %v360, 0.01
    %v2409 = vmul.f32 %v361, 0.01
    %v2410 = vmul.f32 %v362, 0.01
    %v2411 = vmul.f32 %v363, 0.01
    %v2412 = vmul.f32 %v364, 0.01
    %v2413 = vmul.f32 %v365, 0.01
    %v2414 = vmul.f32 %v366, 0.01
    %v2415 = vmul.f32 %v367, 0.01
    %v2416 = vmul.f32 %v368, 0.01
    %v2417 = vmul.f32 %v369, 0.01
    %v2418 = vmul.f32 %v370, 0.01
    %v2419 = vmul.f32 %v371, 0.01
    %v2420 = vmul.f32 %v372, 0.01
    %v2421 = vmul.f32 %v373, 0.01
    %v2422 = vmul.f32 %v374, 0.01
    %v2423 = vmul.f32 %v375, 0.01
    %v2424 = vmul.f32 %v376, 0.01
    %v2425 = vmul.f32 %v377, 0.01
    %v2426 = vmul.f32 %v378, 0.01
    %v2427 = vmul.f32 %v379, 0.01
    %v2428 = vmul.f32 %v380, 0.01
    %v2429 = vmul.f32 %v381, 0.01
    %v2430 = vmul.f32 %v382, 0.01
    %v2431 = vmul.f32 %v383, 0.01
    %v2432 = vmul.f32 %v384, 0.01
    %v2433 = vmul.f32 %v385, 0.01
    %v2434 = vmul.f32 %v386, 0.01
    %v2435 = vmul.f32 %v387, 0.01
    %v2436 = vmul.f32 %v388, 0.01
    %v2437 = vmul.f32 %v389, 0.01
    %v2438 = vmul.f32 %v390, 0.01
    %v2439 = vmul.f32 %v391, 0.01
    %v2440 = vmul.f32 %v392, 0.01
    %v2441 = vmul.f32 %v393, 0.01
    %v2442 = vmul.f32 %v394, 0.01
    %v2443 = vmul.f32 %v395, 0.01
    %v2444 = vmul.f32 %v396, 0.01
    %v2445 = vmul.f32 %v397, 0.01
    %v2446 = vmul.f32 %v398, 0.01
    %v2447 = vmul.f32 %v399, 0.01
    %v2448 = vmul.f32 %v400, 0.01
    %v2449 = vmul.f32 %v401, 0.01
    %v2450 = vmul.f32 %v402, 0.01
    %v2451 = vmul.f32 %v403, 0.01
    %v2452 = vmul.f32 %v404, 0.01
    %v2453 = vmul.f32 %v405, 0.01
    %v2454 = vmul.f32 %v406, 0.01
    %v2455 = vmul.f32 %v407, 0.01
    %v2456 = vmul.f32 %v408, 0.01
    %v2457 = vmul.f32 %v409, 0.01
    %v2458 = vmul.f32 %v410, 0.01
    %v2459 = vmul.f32 %v411, 0.01
    %v2460 = vmul.f32 %v412, 0.01
    %v2461 = vmul.f32 %v413, 0.01
    %v2462 = vmul.f32 %v414, 0.01
    %v2463 = vmul.f32 %v415, 0.01
    %v2464 = vmul.f32 %v416, 0.01
    %v2465 = vmul.f32 %v417, 0.01
    %v2466 = vmul.f32 %v418, 0.01
    %v2467 = vmul.f32 %v419, 0.01
    %v2468 = vmul.f32 %v420, 0.01
    %v2469 = vmul.f32 %v421, 0.01
    %v2470 = vmul.f32 %v422, 0.01
    %v2471 = vmul.f32 %v423, 0.01
    %v2472 = vmul.f32 %v424, 0.01
    %v2473 = vmul.f32 %v425, 0.01
    %v2474 = vmul.f32 %v426, 0.01
    %v2475 = vmul.f32 %v427, 0.01
    %v2476 = vmul.f32 %v428, 0.01
    %v2477 = vmul.f32 %v429, 0.01
    %v2478 = vmul.f32 %v430, 0.01
    %v2479 = vmul.f32 %v431, 0.01
    %v2480 = vmul.f32 %v432, 0.01
    %v2481 = vmul.f32 %v433, 0.01
    %v2482 = vmul.f32 %v434, 0.01
    %v2483 = vmul.f32 %v435, 0.01
    %v2484 = vmul.f32 %v436, 0.01
    %v2485 = vmul.f32 %v437, 0.01
    %v2486 = vmul.f32 %v438, 0.01
    %v2487 = vmul.f32 %v439, 0.01
    %v2488 = vmul.f32 %v440, 0.01
    %v2489 = vmul.f32 %v441, 0.01
    %v2490 = vmul.f32 %v442, 0.01
    %v2491 = vmul.f32 %v443, 0.01
    %v2492 = vmul.f32 %v444, 0.01
    %v2493 = vmul.f32 %v445, 0.01
    %v2494 = vmul.f32 %v446, 0.01
    %v2495 = vmul.f32 %v447, 0.01
    %v2496 = vmul.f32 %v448, 0.01
    %v2497 = vmul.f32 %v449, 0.01
    %v2498 = vmul.f32 %v450, 0.01
    %v2499 = vmul.f32 %v451, 0.01
    %v2500 = vmul.f32 %v452, 0.01
    %v2501 = vmul.f32 %v453, 0.01
    %v2502 = vmul.f32 %v454, 0.01
    %v2503 = vmul.f32 %v455, 0.01
    %v2504 = vmul.f32 %v456, 0.01
    %v2505 = vmul.f32 %v457, 0.01
    %v2506 = vmul.f32 %v458, 0.01
    %v2507 = vmul.f32 %v459, 0.01
    %v2508 = vmul.f32 %v460, 0.01
    %v2509 = vmul.f32 %v461, 0.01
    %v2510 = vmul.f32 %v462, 0.01
    %v2511 = vmul.f32 %v463, 0.01
    %v2512 = vmul.f32 %v464, 0.01
    %v2513 = vmul.f32 %v465, 0.01
    %v2514 = vmul.f32 %v466, 0.01
    %v2515 = vmul.f32 %v467, 0.01
    %v2516 = vmul.f32 %v468, 0.01
    %v2517 = vmul.f32 %v469, 0.01
    %v2518 = vmul.f32 %v470, 0.01
    %v2519 = vmul.f32 %v471, 0.01
    %v2520 = vmul.f32 %v472, 0.01
    %v2521 = vmul.f32 %v473, 0.01
    %v2522 = vmul.f32 %v474, 0.01
    %v2523 = vmul.f32 %v475, 0.01
    %v2524 = vmul.f32 %v476, 0.01
    %v2525 = vmul.f32 %v477, 0.01
    %v2526 = vmul.f32 %v478, 0.01
    %v2527 = vmul.f32 %v479, 0.01
    %v2528 = vmul.f32 %v480, 0.01
    %v2529 = vmul.f32 %v481, 0.01
    %v2530 = vmul.f32 %v482, 0.01
    %v2531 = vmul.f32 %v483, 0.01
    %v2532 = vmul.f32 %v484, 0.01
    %v2533 = vmul.f32 %v485, 0.01
    %v2534 = vmul.f32 %v486, 0.01
    %v2535 = vmul.f32 %v487, 0.01
    %v2536 = vmul.f32 %v488, 0.01
    %v2537 = vmul.f32 %v489, 0.01
    %v2538 = vmul.f32 %v490, 0.01
    %v2539 = vmul.f32 %v491, 0.01
    %v2540 = vmul.f32 %v492, 0.01
    %v2541 = vmul.f32 %v493, 0.01
    %v2542 = vmul.f32 %v494, 0.01
    %v2543 = vmul.f32 %v495, 0.01
    %v2544 = vmul.f32 %v496, 0.01
    %v2545 = vmul.f32 %v497, 0.01
    %v2546 = vmul.f32 %v498, 0.01
    %v2547 = vmul.f32 %v499, 0.01
    %v2548 = vmul.f32 %v500, 0.01
    %v2549 = vmul.f32 %v501, 0.01
    %v2550 = vmul.f32 %v502, 0.01
    %v2551 = vmul.f32 %v503, 0.01
    %v2552 = vmul.f32 %v504, 0.01
    %v2553 = vmul.f32 %v505, 0.01
    %v2554 = vmul.f32 %v506, 0.01
    %v2555 = vmul.f32 %v507, 0.01
    %v2556 = vmul.f32 %v508, 0.01
    %v2557 = vmul.f32 %v509, 0.01
    %v2558 = vmul.f32 %v510, 0.01
    %v2559 = vmul.f32 %v511, 0.01
    %v2560 = vmul.f32 %v512, 0.01
    %v2561 = vmul.f32 %v513, 0.01
    %v2562 = vmul.f32 %v514, 0.01
    %v2563 = vmul.f32 %v515, 0.01
    %v2564 = vmul.f32 %v516, 0.01
    %v2565 = vmul.f32 %v517, 0.01
    %v2566 = vmul.f32 %v518, 0.01
    %v2567 = vmul.f32 %v519, 0.01
    %v2568 = vmul.f32 %v520, 0.01
    %v2569 = vmul.f32 %v521, 0.01
    %v2570 = vmul.f32 %v522, 0.01
    %v2571 = vmul.f32 %v523, 0.01
    %v2572 = vmul.f32 %v524, 0.01
    %v2573 = vmul.f32 %v525, 0.01
    %v2574 = vmul.f32 %v526, 0.01
    %v2575 = vmul.f32 %v527, 0.01
    %v2576 = vmul.f32 %v528, 0.01
    %v2577 = vmul.f32 %v529, 0.01
    %v2578 = vmul.f32 %v530, 0.01
    %v2579 = vmul.f32 %v531, 0.01
    %v2580 = vmul.f32 %v532, 0.01
    %v2581 = vmul.f32 %v533, 0.01
    %v2582 = vmul.f32 %v534, 0.01
    %v2583 = vmul.f32 %v535, 0.01
    %v2584 = vmul.f32 %v536, 0.01
    %v2585 = vmul.f32 %v537, 0.01
    %v2586 = vmul.f32 %v538, 0.01
    %v2587 = vmul.f32 %v539, 0.01
    %v2588 = vmul.f32 %v540, 0.01
    %v2589 = vmul.f32 %v541, 0.01
    %v2590 = vmul.f32 %v542, 0.01
    %v2591 = vmul.f32 %v543, 0.01
    %v2592 = vmul.f32 %v544, 0.01
    %v2593 = vmul.f32 %v545, 0.01
    %v2594 = vmul.f32 %v546, 0.01
    %v2595 = vmul.f32 %v547, 0.01
    %v2596 = vmul.f32 %v548, 0.01
    %v2597 = vmul.f32 %v549, 0.01
    %v2598 = vmul.f32 %v550, 0.01
    %v2599 = vmul.f32 %v551, 0.01
    %v2600 = vmul.f32 %v552, 0.01
    %v2601 = vmul.f32 %v553, 0.01
    %v2602 = vmul.f32 %v554, 0.01
    %v2603 = vmul.f32 %v555, 0.01
    %v2604 = vmul.f32 %v556, 0.01
    %v2605 = vmul.f32 %v557, 0.01
    %v2606 = vmul.f32 %v558, 0.01
    %v2607 = vmul.f32 %v559, 0.01
    %v2608 = vmul.f32 %v560, 0.01
    %v2609 = vmul.f32 %v561, 0.01
    %v2610 = vmul.f32 %v562, 0.01
    %v2611 = vmul.f32 %v563, 0.01
    %v2612 = vmul.f32 %v564, 0.01
    %v2613 = vmul.f32 %v565, 0.01
    %v2614 = vmul.f32 %v566, 0.01
    %v2615 = vmul.f32 %v567, 0.01
    %v2616 = vmul.f32 %v568, 0.01
    %v2617 = vmul.f32 %v569, 0.01
    %v2618 = vmul.f32 %v570, 0.01
    %v2619 = vmul.f32 %v571, 0.01
    %v2620 = vmul.f32 %v572, 0.01
    %v2621 = vmul.f32 %v573, 0.01
    %v2622 = vmul.f32 %v574, 0.01
    %v2623 = vmul.f32 %v575, 0.01
    %v2624 = vmul.f32 %v576, 0.01
    %v2625 = vmul.f32 %v577, 0.01
    %v2626 = vmul.f32 %v578, 0.01
    %v2627 = vmul.f32 %v579, 0.01
    %v2628 = vmul.f32 %v580, 0.01
    %v2629 = vmul.f32 %v581, 0.01
    %v2630 = vmul.f32 %v582, 0.01
    %v2631 = vmul.f32 %v583, 0.01
    %v2632 = vmul.f32 %v584, 0.01
    %v2633 = vmul.f32 %v585, 0.01
    %v2634 = vmul.f32 %v586, 0.01
    %v2635 = vmul.f32 %v587, 0.01
    %v2636 = vmul.f32 %v588, 0.01
    %v2637 = vmul.f32 %v589, 0.01
    %v2638 = vmul.f32 %v590, 0.01
    %v2639 = vmul.f32 %v591, 0.01
    %v2640 = vmul.f32 %v592, 0.01
    %v2641 = vmul.f32 %v593, 0.01
    %v2642 = vmul.f32 %v594, 0.01
    %v2643 = vmul.f32 %v595, 0.01
    %v2644 = vmul.f32 %v596, 0.01
    %v2645 = vmul.f32 %v597, 0.01
    %v2646 = vmul.f32 %v598, 0.01
    %v2647 = vmul.f32 %v599, 0.01
    %v2648 = vmul.f32 %v600, 0.01
    %v2649 = vmul.f32 %v601, 0.01
    %v2650 = vmul.f32 %v602, 0.01
    %v2651 = vmul.f32 %v603, 0.01
    %v2652 = vmul.f32 %v604, 0.01
    %v2653 = vmul.f32 %v605, 0.01
    %v2654 = vmul.f32 %v606, 0.01
    %v2655 = vmul.f32 %v607, 0.01
    %v2656 = vmul.f32 %v608, 0.01
    %v2657 = vmul.f32 %v609, 0.01
    %v2658 = vmul.f32 %v610, 0.01
    %v2659 = vmul.f32 %v611, 0.01
    %v2660 = vmul.f32 %v612, 0.01
    %v2661 = vmul.f32 %v613, 0.01
    %v2662 = vmul.f32 %v614, 0.01
    %v2663 = vmul.f32 %v615, 0.01
    %v2664 = vmul.f32 %v616, 0.01
    %v2665 = vmul.f32 %v617, 0.01
    %v2666 = vmul.f32 %v618, 0.01
    %v2667 = vmul.f32 %v619, 0.01
    %v2668 = vmul.f32 %v620, 0.01
    %v2669 = vmul.f32 %v621, 0.01
    %v2670 = vmul.f32 %v622, 0.01
    %v2671 = vmul.f32 %v623, 0.01
    %v2672 = vmul.f32 %v624, 0.01
    %v2673 = vmul.f32 %v625, 0.01
    %v2674 = vmul.f32 %v626, 0.01
    %v2675 = vmul.f32 %v627, 0.01
    %v2676 = vmul.f32 %v628, 0.01
    %v2677 = vmul.f32 %v629, 0.01
    %v2678 = vmul.f32 %v630, 0.01
    %v2679 = vmul.f32 %v631, 0.01
    %v2680 = vmul.f32 %v632, 0.01
    %v2681 = vmul.f32 %v633, 0.01
    %v2682 = vmul.f32 %v634, 0.01
    %v2683 = vmul.f32 %v635, 0.01
    %v2684 = vmul.f32 %v636, 0.01
    %v2685 = vmul.f32 %v637, 0.01
    %v2686 = vmul.f32 %v638, 0.01
    %v2687 = vmul.f32 %v639, 0.01
    %v2688 = vmul.f32 %v640, 0.01
    %v2689 = vmul.f32 %v641, 0.01
    %v2690 = vmul.f32 %v642, 0.01
    %v2691 = vmul.f32 %v643, 0.01
    %v2692 = vmul.f32 %v644, 0.01
    %v2693 = vmul.f32 %v645, 0.01
    %v2694 = vmul.f32 %v646, 0.01
    %v2695 = vmul.f32 %v647, 0.01
    %v2696 = vmul.f32 %v648, 0.01
    %v2697 = vmul.f32 %v649, 0.01
    %v2698 = vmul.f32 %v650, 0.01
    %v2699 = vmul.f32 %v651, 0.01
    %v2700 = vmul.f32 %v652, 0.01
    %v2701 = vmul.f32 %v653, 0.01
    %v2702 = vmul.f32 %v654, 0.01
    %v2703 = vmul.f32 %v655, 0.01
    %v2704 = vmul.f32 %v656, 0.01
    %v2705 = vmul.f32 %v657, 0.01
    %v2706 = vmul.f32 %v658, 0.01
    %v2707 = vmul.f32 %v659, 0.01
    %v2708 = vmul.f32 %v660, 0.01
    %v2709 = vmul.f32 %v661, 0.01
    %v2710 = vmul.f32 %v662, 0.01
    %v2711 = vmul.f32 %v663, 0.01
    %v2712 = vmul.f32 %v664, 0.01
    %v2713 = vmul.f32 %v665, 0.01
    %v2714 = vmul.f32 %v666, 0.01
    %v2715 = vmul.f32 %v667, 0.01
    %v2716 = vmul.f32 %v668, 0.01
    %v2717 = vmul.f32 %v669, 0.01
    %v2718 = vmul.f32 %v670, 0.01
    %v2719 = vmul.f32 %v671, 0.01
    %v2720 = vmul.f32 %v672, 0.01
    %v2721 = vmul.f32 %v673, 0.01
    %v2722 = vmul.f32 %v674, 0.01
    %v2723 = vmul.f32 %v675, 0.01
    %v2724 = vmul.f32 %v676, 0.01
    %v2725 = vmul.f32 %v677, 0.01
    %v2726 = vmul.f32 %v678, 0.01
    %v2727 = vmul.f32 %v679, 0.01
    %v2728 = vmul.f32 %v680, 0.01
    %v2729 = vmul.f32 %v681, 0.01
    %v2730 = vmul.f32 %v682, 0.01
    %v2731 = vmul.f32 %v683, 0.01
    %v2732 = vmul.f32 %v684, 0.01
    %v2733 = vmul.f32 %v685, 0.01
    %v2734 = vmul.f32 %v686, 0.01
    %v2735 = vmul.f32 %v687, 0.01
    %v2736 = vmul.f32 %v688, 0.01
    %v2737 = vmul.f32 %v689, 0.01
    %v2738 = vmul.f32 %v690, 0.01
    %v2739 = vmul.f32 %v691, 0.01
    %v2740 = vmul.f32 %v692, 0.01
    %v2741 = vmul.f32 %v693, 0.01
    %v2742 = vmul.f32 %v694, 0.01
    %v2743 = vmul.f32 %v695, 0.01
    %v2744 = vmul.f32 %v696, 0.01
    %v2745 = vmul.f32 %v697, 0.01
    %v2746 = vmul.f32 %v698, 0.01
    %v2747 = vmul.f32 %v699, 0.01
    %v2748 = vmul.f32 %v700, 0.01
    %v2749 = vmul.f32 %v701, 0.01
    %v2750 = vmul.f32 %v702, 0.01
    %v2751 = vmul.f32 %v703, 0.01
    %v2752 = vmul.f32 %v704, 0.01
    %v2753 = vmul.f32 %v705, 0.01
    %v2754 = vmul.f32 %v706, 0.01
    %v2755 = vmul.f32 %v707, 0.01
    %v2756 = vmul.f32 %v708, 0.01
    %v2757 = vmul.f32 %v709, 0.01
    %v2758 = vmul.f32 %v710, 0.01
    %v2759 = vmul.f32 %v711, 0.01
    %v2760 = vmul.f32 %v712, 0.01
    %v2761 = vmul.f32 %v713, 0.01
    %v2762 = vmul.f32 %v714, 0.01
    %v2763 = vmul.f32 %v715, 0.01
    %v2764 = vmul.f32 %v716, 0.01
    %v2765 = vmul.f32 %v717, 0.01
    %v2766 = vmul.f32 %v718, 0.01
    %v2767 = vmul.f32 %v719, 0.01
    %v2768 = vmul.f32 %v720, 0.01
    %v2769 = vmul.f32 %v721, 0.01
    %v2770 = vmul.f32 %v722, 0.01
    %v2771 = vmul.f32 %v723, 0.01
    %v2772 = vmul.f32 %v724, 0.01
    %v2773 = vmul.f32 %v725, 0.01
    %v2774 = vmul.f32 %v726, 0.01
    %v2775 = vmul.f32 %v727, 0.01
    %v2776 = vmul.f32 %v728, 0.01
    %v2777 = vmul.f32 %v729, 0.01
    %v2778 = vmul.f32 %v730, 0.01
    %v2779 = vmul.f32 %v731, 0.01
    %v2780 = vmul.f32 %v732, 0.01
    %v2781 = vmul.f32 %v733, 0.01
    %v2782 = vmul.f32 %v734, 0.01
    %v2783 = vmul.f32 %v735, 0.01
    %v2784 = vmul.f32 %v736, 0.01
    %v2785 = vmul.f32 %v737, 0.01
    %v2786 = vmul.f32 %v738, 0.01
    %v2787 = vmul.f32 %v739, 0.01
    %v2788 = vmul.f32 %v740, 0.01
    %v2789 = vmul.f32 %v741, 0.01
    %v2790 = vmul.f32 %v742, 0.01
    %v2791 = vmul.f32 %v743, 0.01
    %v2792 = vmul.f32 %v744, 0.01
    %v2793 = vmul.f32 %v745, 0.01
    %v2794 = vmul.f32 %v746, 0.01
    %v2795 = vmul.f32 %v747, 0.01
    %v2796 = vmul.f32 %v748, 0.01
    %v2797 = vmul.f32 %v749, 0.01
    %v2798 = vmul.f32 %v750, 0.01
    %v2799 = vmul.f32 %v751, 0.01
    %v2800 = vmul.f32 %v752, 0.01
    %v2801 = vmul.f32 %v753, 0.01
    %v2802 = vmul.f32 %v754, 0.01
    %v2803 = vmul.f32 %v755, 0.01
    %v2804 = vmul.f32 %v756, 0.01
    %v2805 = vmul.f32 %v757, 0.01
    %v2806 = vmul.f32 %v758, 0.01
    %v2807 = vmul.f32 %v759, 0.01
    %v2808 = vmul.f32 %v760, 0.01
    %v2809 = vmul.f32 %v761, 0.01
    %v2810 = vmul.f32 %v762, 0.01
    %v2811 = vmul.f32 %v763, 0.01
    %v2812 = vmul.f32 %v764, 0.01
    %v2813 = vmul.f32 %v765, 0.01
    %v2814 = vmul.f32 %v766, 0.01
    %v2815 = vmul.f32 %v767, 0.01
    %v2816 = vmul.f32 %v768, 0.01
    %v2817 = vmul.f32 %v769, 0.01
    %v2818 = vmul.f32 %v770, 0.01
    %v2819 = vmul.f32 %v771, 0.01
    %v2820 = vmul.f32 %v772, 0.01
    %v2821 = vmul.f32 %v773, 0.01
    %v2822 = vmul.f32 %v774, 0.01
    %v2823 = vmul.f32 %v775, 0.01
    %v2824 = vmul.f32 %v776, 0.01
    %v2825 = vmul.f32 %v777, 0.01
    %v2826 = vmul.f32 %v778, 0.01
    %v2827 = vmul.f32 %v779, 0.01
    %v2828 = vmul.f32 %v780, 0.01
    %v2829 = vmul.f32 %v781, 0.01
    %v2830 = vmul.f32 %v782, 0.01
    %v2831 = vmul.f32 %v783, 0.01
    %v2832 = vmul.f32 %v784, 0.01
    %v2833 = vmul.f32 %v785, 0.01
    %v2834 = vmul.f32 %v786, 0.01
    %v2835 = vmul.f32 %v787, 0.01
    %v2836 = vmul.f32 %v788, 0.01
    %v2837 = vmul.f32 %v789, 0.01
    %v2838 = vmul.f32 %v790, 0.01
    %v2839 = vmul.f32 %v791, 0.01
    %v2840 = vmul.f32 %v792, 0.01
    %v2841 = vmul.f32 %v793, 0.01
    %v2842 = vmul.f32 %v794, 0.01
    %v2843 = vmul.f32 %v795, 0.01
    %v2844 = vmul.f32 %v796, 0.01
    %v2845 = vmul.f32 %v797, 0.01
    %v2846 = vmul.f32 %v798, 0.01
    %v2847 = vmul.f32 %v799, 0.01
    %v2848 = vmul.f32 %v800, 0.01
    %v2849 = vmul.f32 %v801, 0.01
    %v2850 = vmul.f32 %v802, 0.01
    %v2851 = vmul.f32 %v803, 0.01
    %v2852 = vmul.f32 %v804, 0.01
    %v2853 = vmul.f32 %v805, 0.01
    %v2854 = vmul.f32 %v806, 0.01
    %v2855 = vmul.f32 %v807, 0.01
    %v2856 = vmul.f32 %v808, 0.01
    %v2857 = vmul.f32 %v809, 0.01
    %v2858 = vmul.f32 %v810, 0.01
    %v2859 = vmul.f32 %v811, 0.01
    %v2860 = vmul.f32 %v812, 0.01
    %v2861 = vmul.f32 %v813, 0.01
    %v2862 = vmul.f32 %v814, 0.01
    %v2863 = vmul.f32 %v815, 0.01
    %v2864 = vmul.f32 %v816, 0.01
    %v2865 = vmul.f32 %v817, 0.01
    %v2866 = vmul.f32 %v818, 0.01
    %v2867 = vmul.f32 %v819, 0.01
    %v2868 = vmul.f32 %v820, 0.01
    %v2869 = vmul.f32 %v821, 0.01
    %v2870 = vmul.f32 %v822, 0.01
    %v2871 = vmul.f32 %v823, 0.01
    %v2872 = vmul.f32 %v824, 0.01
    %v2873 = vmul.f32 %v825, 0.01
    %v2874 = vmul.f32 %v826, 0.01
    %v2875 = vmul.f32 %v827, 0.01
    %v2876 = vmul.f32 %v828, 0.01
    %v2877 = vmul.f32 %v829, 0.01
    %v2878 = vmul.f32 %v830, 0.01
    %v2879 = vmul.f32 %v831, 0.01
    %v2880 = vmul.f32 %v832, 0.01
    %v2881 = vmul.f32 %v833, 0.01
    %v2882 = vmul.f32 %v834, 0.01
    %v2883 = vmul.f32 %v835, 0.01
    %v2884 = vmul.f32 %v836, 0.01
    %v2885 = vmul.f32 %v837, 0.01
    %v2886 = vmul.f32 %v838, 0.01
    %v2887 = vmul.f32 %v839, 0.01
    %v2888 = vmul.f32 %v840, 0.01
    %v2889 = vmul.f32 %v841, 0.01
    %v2890 = vmul.f32 %v842, 0.01
    %v2891 = vmul.f32 %v843, 0.01
    %v2892 = vmul.f32 %v844, 0.01
    %v2893 = vmul.f32 %v845, 0.01
    %v2894 = vmul.f32 %v846, 0.01
    %v2895 = vmul.f32 %v847, 0.01
    %v2896 = vmul.f32 %v848, 0.01
    %v2897 = vmul.f32 %v849, 0.01
    %v2898 = vmul.f32 %v850, 0.01
    %v2899 = vmul.f32 %v851, 0.01
    %v2900 = vmul.f32 %v852, 0.01
    %v2901 = vmul.f32 %v853, 0.01
    %v2902 = vmul.f32 %v854, 0.01
    %v2903 = vmul.f32 %v855, 0.01
    %v2904 = vmul.f32 %v856, 0.01
    %v2905 = vmul.f32 %v857, 0.01
    %v2906 = vmul.f32 %v858, 0.01
    %v2907 = vmul.f32 %v859, 0.01
    %v2908 = vmul.f32 %v860, 0.01
    %v2909 = vmul.f32 %v861, 0.01
    %v2910 = vmul.f32 %v862, 0.01
    %v2911 = vmul.f32 %v863, 0.01
    %v2912 = vmul.f32 %v864, 0.01
    %v2913 = vmul.f32 %v865, 0.01
    %v2914 = vmul.f32 %v866, 0.01
    %v2915 = vmul.f32 %v867, 0.01
    %v2916 = vmul.f32 %v868, 0.01
    %v2917 = vmul.f32 %v869, 0.01
    %v2918 = vmul.f32 %v870, 0.01
    %v2919 = vmul.f32 %v871, 0.01
    %v2920 = vmul.f32 %v872, 0.01
    %v2921 = vmul.f32 %v873, 0.01
    %v2922 = vmul.f32 %v874, 0.01
    %v2923 = vmul.f32 %v875, 0.01
    %v2924 = vmul.f32 %v876, 0.01
    %v2925 = vmul.f32 %v877, 0.01
    %v2926 = vmul.f32 %v878, 0.01
    %v2927 = vmul.f32 %v879, 0.01
    %v2928 = vmul.f32 %v880, 0.01
    %v2929 = vmul.f32 %v881, 0.01
    %v2930 = vmul.f32 %v882, 0.01
    %v2931 = vmul.f32 %v883, 0.01
    %v2932 = vmul.f32 %v884, 0.01
    %v2933 = vmul.f32 %v885, 0.01
    %v2934 = vmul.f32 %v886, 0.01
    %v2935 = vmul.f32 %v887, 0.01
    %v2936 = vmul.f32 %v888, 0.01
    %v2937 = vmul.f32 %v889, 0.01
    %v2938 = vmul.f32 %v890, 0.01
    %v2939 = vmul.f32 %v891, 0.01
    %v2940 = vmul.f32 %v892, 0.01
    %v2941 = vmul.f32 %v893, 0.01
    %v2942 = vmul.f32 %v894, 0.01
    %v2943 = vmul.f32 %v895, 0.01
    %v2944 = vmul.f32 %v896, 0.01
    %v2945 = vmul.f32 %v897, 0.01
    %v2946 = vmul.f32 %v898, 0.01
    %v2947 = vmul.f32 %v899, 0.01
    %v2948 = vmul.f32 %v900, 0.01
    %v2949 = vmul.f32 %v901, 0.01
    %v2950 = vmul.f32 %v902, 0.01
    %v2951 = vmul.f32 %v903, 0.01
    %v2952 = vmul.f32 %v904, 0.01
    %v2953 = vmul.f32 %v905, 0.01
    %v2954 = vmul.f32 %v906, 0.01
    %v2955 = vmul.f32 %v907, 0.01
    %v2956 = vmul.f32 %v908, 0.01
    %v2957 = vmul.f32 %v909, 0.01
    %v2958 = vmul.f32 %v910, 0.01
    %v2959 = vmul.f32 %v911, 0.01
    %v2960 = vmul.f32 %v912, 0.01
    %v2961 = vmul.f32 %v913, 0.01
    %v2962 = vmul.f32 %v914, 0.01
    %v2963 = vmul.f32 %v915, 0.01
    %v2964 = vmul.f32 %v916, 0.01
    %v2965 = vmul.f32 %v917, 0.01
    %v2966 = vmul.f32 %v918, 0.01
    %v2967 = vmul.f32 %v919, 0.01
    %v2968 = vmul.f32 %v920, 0.01
    %v2969 = vmul.f32 %v921, 0.01
    %v2970 = vmul.f32 %v922, 0.01
    %v2971 = vmul.f32 %v923, 0.01
    %v2972 = vmul.f32 %v924, 0.01
    %v2973 = vmul.f32 %v925, 0.01
    %v2974 = vmul.f32 %v926, 0.01
    %v2975 = vmul.f32 %v927, 0.01
    %v2976 = vmul.f32 %v928, 0.01
    %v2977 = vmul.f32 %v929, 0.01
    %v2978 = vmul.f32 %v930, 0.01
    %v2979 = vmul.f32 %v931, 0.01
    %v2980 = vmul.f32 %v932, 0.01
    %v2981 = vmul.f32 %v933, 0.01
    %v2982 = vmul.f32 %v934, 0.01
    %v2983 = vmul.f32 %v935, 0.01
    %v2984 = vmul.f32 %v936, 0.01
    %v2985 = vmul.f32 %v937, 0.01
    %v2986 = vmul.f32 %v938, 0.01
    %v2987 = vmul.f32 %v939, 0.01
    %v2988 = vmul.f32 %v940, 0.01
    %v2989 = vmul.f32 %v941, 0.01
    %v2990 = vmul.f32 %v942, 0.01
    %v2991 = vmul.f32 %v943, 0.01
    %v2992 = vmul.f32 %v944, 0.01
    %v2993 = vmul.f32 %v945, 0.01
    %v2994 = vmul.f32 %v946, 0.01
    %v2995 = vmul.f32 %v947, 0.01
    %v2996 = vmul.f32 %v948, 0.01
    %v2997 = vmul.f32 %v949, 0.01
    %v2998 = vmul.f32 %v950, 0.01
    %v2999 = vmul.f32 %v951, 0.01
    %v3000 = vmul.f32 %v952, 0.01
    %v3001 = vmul.f32 %v953, 0.01
    %v3002 = vmul.f32 %v954, 0.01
    %v3003 = vmul.f32 %v955, 0.01
    %v3004 = vmul.f32 %v956, 0.01
    %v3005 = vmul.f32 %v957, 0.01
    %v3006 = vmul.f32 %v958, 0.01
    %v3007 = vmul.f32 %v959, 0.01
    %v3008 = vmul.f32 %v960, 0.01
    %v3009 = vmul.f32 %v961, 0.01
    %v3010 = vmul.f32 %v962, 0.01
    %v3011 = vmul.f32 %v963, 0.01
    %v3012 = vmul.f32 %v964, 0.01
    %v3013 = vmul.f32 %v965, 0.01
    %v3014 = vmul.f32 %v966, 0.01
    %v3015 = vmul.f32 %v967, 0.01
    %v3016 = vmul.f32 %v968, 0.01
    %v3017 = vmul.f32 %v969, 0.01
    %v3018 = vmul.f32 %v970, 0.01
    %v3019 = vmul.f32 %v971, 0.01
    %v3020 = vmul.f32 %v972, 0.01
    %v3021 = vmul.f32 %v973, 0.01
    %v3022 = vmul.f32 %v974, 0.01
    %v3023 = vmul.f32 %v975, 0.01
    %v3024 = vmul.f32 %v976, 0.01
    %v3025 = vmul.f32 %v977, 0.01
    %v3026 = vmul.f32 %v978, 0.01
    %v3027 = vmul.f32 %v979, 0.01
    %v3028 = vmul.f32 %v980, 0.01
    %v3029 = vmul.f32 %v981, 0.01
    %v3030 = vmul.f32 %v982, 0.01
    %v3031 = vmul.f32 %v983, 0.01
    %v3032 = vmul.f32 %v984, 0.01
    %v3033 = vmul.f32 %v985, 0.01
    %v3034 = vmul.f32 %v986, 0.01
    %v3035 = vmul.f32 %v987, 0.01
    %v3036 = vmul.f32 %v988, 0.01
    %v3037 = vmul.f32 %v989, 0.01
    %v3038 = vmul.f32 %v990, 0.01
    %v3039 = vmul.f32 %v991, 0.01
    %v3040 = vmul.f32 %v992, 0.01
    %v3041 = vmul.f32 %v993, 0.01
    %v3042 = vmul.f32 %v994, 0.01
    %v3043 = vmul.f32 %v995, 0.01
    %v3044 = vmul.f32 %v996, 0.01
    %v3045 = vmul.f32 %v997, 0.01
    %v3046 = vmul.f32 %v998, 0.01
    %v3047 = vmul.f32 %v999, 0.01
    %v3048 = vmul.f32 %v1000, 0.01
    %v3049 = vmul.f32 %v1001, 0.01
    %v3050 = vmul.f32 %v1002, 0.01
    %v3051 = vmul.f32 %v1003, 0.01
    %v3052 = vmul.f32 %v1004, 0.01
    %v3053 = vmul.f32 %v1005, 0.01
    %v3054 = vmul.f32 %v1006, 0.01
    %v3055 = vmul.f32 %v1007, 0.01
    %v3056 = vmul.f32 %v1008, 0.01
    %v3057 = vmul.f32 %v1009, 0.01
    %v3058 = vmul.f32 %v1010, 0.01
    %v3059 = vmul.f32 %v1011, 0.01
    %v3060 = vmul.f32 %v1012, 0.01
    %v3061 = vmul.f32 %v1013, 0.01
    %v3062 = vmul.f32 %v1014, 0.01
    %v3063 = vmul.f32 %v1015, 0.01
    %v3064 = vmul.f32 %v1016, 0.01
    %v3065 = vmul.f32 %v1017, 0.01
    %v3066 = vmul.f32 %v1018, 0.01
    %v3067 = vmul.f32 %v1019, 0.01
    %v3068 = vmul.f32 %v1020, 0.01
    %v3069 = vmul.f32 %v1021, 0.01
    %v3070 = vmul.f32 %v1022, 0.01
    %v3071 = vmul.f32 %v1023, 0.01
    %v3072 = vmul.f32 %v1024, 0.01
    %v3073 = vmul.f32 %v1025, 0.01
    %v3074 = vmul.f32 %v1026, 0.01
    %v3075 = vmul.f32 %v1027, 0.01
    %v3076 = vmul.f32 %v1028, 0.01
    %v3077 = vmul.f32 %v1029, 0.01
    %v3078 = vmul.f32 %v1030, 0.01
    %v3079 = vmul.f32 %v1031, 0.01
    %v3080 = vmul.f32 %v1032, 0.01
    %v3081 = vmul.f32 %v1033, 0.01
    %v3082 = vmul.f32 %v1034, 0.01
    %v3083 = vmul.f32 %v1035, 0.01
    %v3084 = vmul.f32 %v1036, 0.01
    %v3085 = vmul.f32 %v1037, 0.01
    %v3086 = vmul.f32 %v1038, 0.01
    %v3087 = vmul.f32 %v1039, 0.01
    %v3088 = vmul.f32 %v1040, 0.01
    %v3089 = vmul.f32 %v1041, 0.01
    %v3090 = vmul.f32 %v1042, 0.01
    %v3091 = vmul.f32 %v1043, 0.01
    %v3092 = vmul.f32 %v1044, 0.01
    %v3093 = vmul.f32 %v1045, 0.01
    %v3094 = vmul.f32 %v1046, 0.01
    %v3095 = vsel %vm1047, %v23, %v2071
    %v3096 = vsel %vm1048, %v24, %v2072
    %v3097 = vsel %vm1049, %v25, %v2073
    %v3098 = vsel %vm1050, %v26, %v2074
    %v3099 = vsel %vm1051, %v27, %v2075
    %v3100 = vsel %vm1052, %v28, %v2076
    %v3101 = vsel %vm1053, %v29, %v2077
    %v3102 = vsel %vm1054, %v30, %v2078
    %v3103 = vsel %vm1055, %v31, %v2079
    %v3104 = vsel %vm1056, %v32, %v2080
    %v3105 = vsel %vm1057, %v33, %v2081
    %v3106 = vsel %vm1058, %v34, %v2082
    %v3107 = vsel %vm1059, %v35, %v2083
    %v3108 = vsel %vm1060, %v36, %v2084
    %v3109 = vsel %vm1061, %v37, %v2085
    %v3110 = vsel %vm1062, %v38, %v2086
    %v3111 = vsel %vm1063, %v39, %v2087
    %v3112 = vsel %vm1064, %v40, %v2088
    %v3113 = vsel %vm1065, %v41, %v2089
    %v3114 = vsel %vm1066, %v42, %v2090
    %v3115 = vsel %vm1067, %v43, %v2091
    %v3116 = vsel %vm1068, %v44, %v2092
    %v3117 = vsel %vm1069, %v45, %v2093
    %v3118 = vsel %vm1070, %v46, %v2094
    %v3119 = vsel %vm1071, %v47, %v2095
    %v3120 = vsel %vm1072, %v48, %v2096
    %v3121 = vsel %vm1073, %v49, %v2097
    %v3122 = vsel %vm1074, %v50, %v2098
    %v3123 = vsel %vm1075, %v51, %v2099
    %v3124 = vsel %vm1076, %v52, %v2100
    %v3125 = vsel %vm1077, %v53, %v2101
    %v3126 = vsel %vm1078, %v54, %v2102
    %v3127 = vsel %vm1079, %v55, %v2103
    %v3128 = vsel %vm1080, %v56, %v2104
    %v3129 = vsel %vm1081, %v57, %v2105
    %v3130 = vsel %vm1082, %v58, %v2106
    %v3131 = vsel %vm1083, %v59, %v2107
    %v3132 = vsel %vm1084, %v60, %v2108
    %v3133 = vsel %vm1085, %v61, %v2109
    %v3134 = vsel %vm1086, %v62, %v2110
    %v3135 = vsel %vm1087, %v63, %v2111
    %v3136 = vsel %vm1088, %v64, %v2112
    %v3137 = vsel %vm1089, %v65, %v2113
    %v3138 = vsel %vm1090, %v66, %v2114
    %v3139 = vsel %vm1091, %v67, %v2115
    %v3140 = vsel %vm1092, %v68, %v2116
    %v3141 = vsel %vm1093, %v69, %v2117
    %v3142 = vsel %vm1094, %v70, %v2118
    %v3143 = vsel %vm1095, %v71, %v2119
    %v3144 = vsel %vm1096, %v72, %v2120
    %v3145 = vsel %vm1097, %v73, %v2121
    %v3146 = vsel %vm1098, %v74, %v2122
    %v3147 = vsel %vm1099, %v75, %v2123
    %v3148 = vsel %vm1100, %v76, %v2124
    %v3149 = vsel %vm1101, %v77, %v2125
    %v3150 = vsel %vm1102, %v78, %v2126
    %v3151 = vsel %vm1103, %v79, %v2127
    %v3152 = vsel %vm1104, %v80, %v2128
    %v3153 = vsel %vm1105, %v81, %v2129
    %v3154 = vsel %vm1106, %v82, %v2130
    %v3155 = vsel %vm1107, %v83, %v2131
    %v3156 = vsel %vm1108, %v84, %v2132
    %v3157 = vsel %vm1109, %v85, %v2133
    %v3158 = vsel %vm1110, %v86, %v2134
    %v3159 = vsel %vm1111, %v87, %v2135
    %v3160 = vsel %vm1112, %v88, %v2136
    %v3161 = vsel %vm1113, %v89, %v2137
    %v3162 = vsel %vm1114, %v90, %v2138
    %v3163 = vsel %vm1115, %v91, %v2139
    %v3164 = vsel %vm1116, %v92, %v2140
    %v3165 = vsel %vm1117, %v93, %v2141
    %v3166 = vsel %vm1118, %v94, %v2142
    %v3167 = vsel %vm1119, %v95, %v2143
    %v3168 = vsel %vm1120, %v96, %v2144
    %v3169 = vsel %vm1121, %v97, %v2145
    %v3170 = vsel %vm1122, %v98, %v2146
    %v3171 = vsel %vm1123, %v99, %v2147
    %v3172 = vsel %vm1124, %v100, %v2148
    %v3173 = vsel %vm1125, %v101, %v2149
    %v3174 = vsel %vm1126, %v102, %v2150
    %v3175 = vsel %vm1127, %v103, %v2151
    %v3176 = vsel %vm1128, %v104, %v2152
    %v3177 = vsel %vm1129, %v105, %v2153
    %v3178 = vsel %vm1130, %v106, %v2154
    %v3179 = vsel %vm1131, %v107, %v2155
    %v3180 = vsel %vm1132, %v108, %v2156
    %v3181 = vsel %vm1133, %v109, %v2157
    %v3182 = vsel %vm1134, %v110, %v2158
    %v3183 = vsel %vm1135, %v111, %v2159
    %v3184 = vsel %vm1136, %v112, %v2160
    %v3185 = vsel %vm1137, %v113, %v2161
    %v3186 = vsel %vm1138, %v114, %v2162
    %v3187 = vsel %vm1139, %v115, %v2163
    %v3188 = vsel %vm1140, %v116, %v2164
    %v3189 = vsel %vm1141, %v117, %v2165
    %v3190 = vsel %vm1142, %v118, %v2166
    %v3191 = vsel %vm1143, %v119, %v2167
    %v3192 = vsel %vm1144, %v120, %v2168
    %v3193 = vsel %vm1145, %v121, %v2169
    %v3194 = vsel %vm1146, %v122, %v2170
    %v3195 = vsel %vm1147, %v123, %v2171
    %v3196 = vsel %vm1148, %v124, %v2172
    %v3197 = vsel %vm1149, %v125, %v2173
    %v3198 = vsel %vm1150, %v126, %v2174
    %v3199 = vsel %vm1151, %v127, %v2175
    %v3200 = vsel %vm1152, %v128, %v2176
    %v3201 = vsel %vm1153, %v129, %v2177
    %v3202 = vsel %vm1154, %v130, %v2178
    %v3203 = vsel %vm1155, %v131, %v2179
    %v3204 = vsel %vm1156, %v132, %v2180
    %v3205 = vsel %vm1157, %v133, %v2181
    %v3206 = vsel %vm1158, %v134, %v2182
    %v3207 = vsel %vm1159, %v135, %v2183
    %v3208 = vsel %vm1160, %v136, %v2184
    %v3209 = vsel %vm1161, %v137, %v2185
    %v3210 = vsel %vm1162, %v138, %v2186
    %v3211 = vsel %vm1163, %v139, %v2187
    %v3212 = vsel %vm1164, %v140, %v2188
    %v3213 = vsel %vm1165, %v141, %v2189
    %v3214 = vsel %vm1166, %v142, %v2190
    %v3215 = vsel %vm1167, %v143, %v2191
    %v3216 = vsel %vm1168, %v144, %v2192
    %v3217 = vsel %vm1169, %v145, %v2193
    %v3218 = vsel %vm1170, %v146, %v2194
    %v3219 = vsel %vm1171, %v147, %v2195
    %v3220 = vsel %vm1172, %v148, %v2196
    %v3221 = vsel %vm1173, %v149, %v2197
    %v3222 = vsel %vm1174, %v150, %v2198
    %v3223 = vsel %vm1175, %v151, %v2199
    %v3224 = vsel %vm1176, %v152, %v2200
    %v3225 = vsel %vm1177, %v153, %v2201
    %v3226 = vsel %vm1178, %v154, %v2202
    %v3227 = vsel %vm1179, %v155, %v2203
    %v3228 = vsel %vm1180, %v156, %v2204
    %v3229 = vsel %vm1181, %v157, %v2205
    %v3230 = vsel %vm1182, %v158, %v2206
    %v3231 = vsel %vm1183, %v159, %v2207
    %v3232 = vsel %vm1184, %v160, %v2208
    %v3233 = vsel %vm1185, %v161, %v2209
    %v3234 = vsel %vm1186, %v162, %v2210
    %v3235 = vsel %vm1187, %v163, %v2211
    %v3236 = vsel %vm1188, %v164, %v2212
    %v3237 = vsel %vm1189, %v165, %v2213
    %v3238 = vsel %vm1190, %v166, %v2214
    %v3239 = vsel %vm1191, %v167, %v2215
    %v3240 = vsel %vm1192, %v168, %v2216
    %v3241 = vsel %vm1193, %v169, %v2217
    %v3242 = vsel %vm1194, %v170, %v2218
    %v3243 = vsel %vm1195, %v171, %v2219
    %v3244 = vsel %vm1196, %v172, %v2220
    %v3245 = vsel %vm1197, %v173, %v2221
    %v3246 = vsel %vm1198, %v174, %v2222
    %v3247 = vsel %vm1199, %v175, %v2223
    %v3248 = vsel %vm1200, %v176, %v2224
    %v3249 = vsel %vm1201, %v177, %v2225
    %v3250 = vsel %vm1202, %v178, %v2226
    %v3251 = vsel %vm1203, %v179, %v2227
    %v3252 = vsel %vm1204, %v180, %v2228
    %v3253 = vsel %vm1205, %v181, %v2229
    %v3254 = vsel %vm1206, %v182, %v2230
    %v3255 = vsel %vm1207, %v183, %v2231
    %v3256 = vsel %vm1208, %v184, %v2232
    %v3257 = vsel %vm1209, %v185, %v2233
    %v3258 = vsel %vm1210, %v186, %v2234
    %v3259 = vsel %vm1211, %v187, %v2235
    %v3260 = vsel %vm1212, %v188, %v2236
    %v3261 = vsel %vm1213, %v189, %v2237
    %v3262 = vsel %vm1214, %v190, %v2238
    %v3263 = vsel %vm1215, %v191, %v2239
    %v3264 = vsel %vm1216, %v192, %v2240
    %v3265 = vsel %vm1217, %v193, %v2241
    %v3266 = vsel %vm1218, %v194, %v2242
    %v3267 = vsel %vm1219, %v195, %v2243
    %v3268 = vsel %vm1220, %v196, %v2244
    %v3269 = vsel %vm1221, %v197, %v2245
    %v3270 = vsel %vm1222, %v198, %v2246
    %v3271 = vsel %vm1223, %v199, %v2247
    %v3272 = vsel %vm1224, %v200, %v2248
    %v3273 = vsel %vm1225, %v201, %v2249
    %v3274 = vsel %vm1226, %v202, %v2250
    %v3275 = vsel %vm1227, %v203, %v2251
    %v3276 = vsel %vm1228, %v204, %v2252
    %v3277 = vsel %vm1229, %v205, %v2253
    %v3278 = vsel %vm1230, %v206, %v2254
    %v3279 = vsel %vm1231, %v207, %v2255
    %v3280 = vsel %vm1232, %v208, %v2256
    %v3281 = vsel %vm1233, %v209, %v2257
    %v3282 = vsel %vm1234, %v210, %v2258
    %v3283 = vsel %vm1235, %v211, %v2259
    %v3284 = vsel %vm1236, %v212, %v2260
    %v3285 = vsel %vm1237, %v213, %v2261
    %v3286 = vsel %vm1238, %v214, %v2262
    %v3287 = vsel %vm1239, %v215, %v2263
    %v3288 = vsel %vm1240, %v216, %v2264
    %v3289 = vsel %vm1241, %v217, %v2265
    %v3290 = vsel %vm1242, %v218, %v2266
    %v3291 = vsel %vm1243, %v219, %v2267
    %v3292 = vsel %vm1244, %v220, %v2268
    %v3293 = vsel %vm1245, %v221, %v2269
    %v3294 = vsel %vm1246, %v222, %v2270
    %v3295 = vsel %vm1247, %v223, %v2271
    %v3296 = vsel %vm1248, %v224, %v2272
    %v3297 = vsel %vm1249, %v225, %v2273
    %v3298 = vsel %vm1250, %v226, %v2274
    %v3299 = vsel %vm1251, %v227, %v2275
    %v3300 = vsel %vm1252, %v228, %v2276
    %v3301 = vsel %vm1253, %v229, %v2277
    %v3302 = vsel %vm1254, %v230, %v2278
    %v3303 = vsel %vm1255, %v231, %v2279
    %v3304 = vsel %vm1256, %v232, %v2280
    %v3305 = vsel %vm1257, %v233, %v2281
    %v3306 = vsel %vm1258, %v234, %v2282
    %v3307 = vsel %vm1259, %v235, %v2283
    %v3308 = vsel %vm1260, %v236, %v2284
    %v3309 = vsel %vm1261, %v237, %v2285
    %v3310 = vsel %vm1262, %v238, %v2286
    %v3311 = vsel %vm1263, %v239, %v2287
    %v3312 = vsel %vm1264, %v240, %v2288
    %v3313 = vsel %vm1265, %v241, %v2289
    %v3314 = vsel %vm1266, %v242, %v2290
    %v3315 = vsel %vm1267, %v243, %v2291
    %v3316 = vsel %vm1268, %v244, %v2292
    %v3317 = vsel %vm1269, %v245, %v2293
    %v3318 = vsel %vm1270, %v246, %v2294
    %v3319 = vsel %vm1271, %v247, %v2295
    %v3320 = vsel %vm1272, %v248, %v2296
    %v3321 = vsel %vm1273, %v249, %v2297
    %v3322 = vsel %vm1274, %v250, %v2298
    %v3323 = vsel %vm1275, %v251, %v2299
    %v3324 = vsel %vm1276, %v252, %v2300
    %v3325 = vsel %vm1277, %v253, %v2301
    %v3326 = vsel %vm1278, %v254, %v2302
    %v3327 = vsel %vm1279, %v255, %v2303
    %v3328 = vsel %vm1280, %v256, %v2304
    %v3329 = vsel %vm1281, %v257, %v2305
    %v3330 = vsel %vm1282, %v258, %v2306
    %v3331 = vsel %vm1283, %v259, %v2307
    %v3332 = vsel %vm1284, %v260, %v2308
    %v3333 = vsel %vm1285, %v261, %v2309
    %v3334 = vsel %vm1286, %v262, %v2310
    %v3335 = vsel %vm1287, %v263, %v2311
    %v3336 = vsel %vm1288, %v264, %v2312
    %v3337 = vsel %vm1289, %v265, %v2313
    %v3338 = vsel %vm1290, %v266, %v2314
    %v3339 = vsel %vm1291, %v267, %v2315
    %v3340 = vsel %vm1292, %v268, %v2316
    %v3341 = vsel %vm1293, %v269, %v2317
    %v3342 = vsel %vm1294, %v270, %v2318
    %v3343 = vsel %vm1295, %v271, %v2319
    %v3344 = vsel %vm1296, %v272, %v2320
    %v3345 = vsel %vm1297, %v273, %v2321
    %v3346 = vsel %vm1298, %v274, %v2322
    %v3347 = vsel %vm1299, %v275, %v2323
    %v3348 = vsel %vm1300, %v276, %v2324
    %v3349 = vsel %vm1301, %v277, %v2325
    %v3350 = vsel %vm1302, %v278, %v2326
    %v3351 = vsel %vm1303, %v279, %v2327
    %v3352 = vsel %vm1304, %v280, %v2328
    %v3353 = vsel %vm1305, %v281, %v2329
    %v3354 = vsel %vm1306, %v282, %v2330
    %v3355 = vsel %vm1307, %v283, %v2331
    %v3356 = vsel %vm1308, %v284, %v2332
    %v3357 = vsel %vm1309, %v285, %v2333
    %v3358 = vsel %vm1310, %v286, %v2334
    %v3359 = vsel %vm1311, %v287, %v2335
    %v3360 = vsel %vm1312, %v288, %v2336
    %v3361 = vsel %vm1313, %v289, %v2337
    %v3362 = vsel %vm1314, %v290, %v2338
    %v3363 = vsel %vm1315, %v291, %v2339
    %v3364 = vsel %vm1316, %v292, %v2340
    %v3365 = vsel %vm1317, %v293, %v2341
    %v3366 = vsel %vm1318, %v294, %v2342
    %v3367 = vsel %vm1319, %v295, %v2343
    %v3368 = vsel %vm1320, %v296, %v2344
    %v3369 = vsel %vm1321, %v297, %v2345
    %v3370 = vsel %vm1322, %v298, %v2346
    %v3371 = vsel %vm1323, %v299, %v2347
    %v3372 = vsel %vm1324, %v300, %v2348
    %v3373 = vsel %vm1325, %v301, %v2349
    %v3374 = vsel %vm1326, %v302, %v2350
    %v3375 = vsel %vm1327, %v303, %v2351
    %v3376 = vsel %vm1328, %v304, %v2352
    %v3377 = vsel %vm1329, %v305, %v2353
    %v3378 = vsel %vm1330, %v306, %v2354
    %v3379 = vsel %vm1331, %v307, %v2355
    %v3380 = vsel %vm1332, %v308, %v2356
    %v3381 = vsel %vm1333, %v309, %v2357
    %v3382 = vsel %vm1334, %v310, %v2358
    %v3383 = vsel %vm1335, %v311, %v2359
    %v3384 = vsel %vm1336, %v312, %v2360
    %v3385 = vsel %vm1337, %v313, %v2361
    %v3386 = vsel %vm1338, %v314, %v2362
    %v3387 = vsel %vm1339, %v315, %v2363
    %v3388 = vsel %vm1340, %v316, %v2364
    %v3389 = vsel %vm1341, %v317, %v2365
    %v3390 = vsel %vm1342, %v318, %v2366
    %v3391 = vsel %vm1343, %v319, %v2367
    %v3392 = vsel %vm1344, %v320, %v2368
    %v3393 = vsel %vm1345, %v321, %v2369
    %v3394 = vsel %vm1346, %v322, %v2370
    %v3395 = vsel %vm1347, %v323, %v2371
    %v3396 = vsel %vm1348, %v324, %v2372
    %v3397 = vsel %vm1349, %v325, %v2373
    %v3398 = vsel %vm1350, %v326, %v2374
    %v3399 = vsel %vm1351, %v327, %v2375
    %v3400 = vsel %vm1352, %v328, %v2376
    %v3401 = vsel %vm1353, %v329, %v2377
    %v3402 = vsel %vm1354, %v330, %v2378
    %v3403 = vsel %vm1355, %v331, %v2379
    %v3404 = vsel %vm1356, %v332, %v2380
    %v3405 = vsel %vm1357, %v333, %v2381
    %v3406 = vsel %vm1358, %v334, %v2382
    %v3407 = vsel %vm1359, %v335, %v2383
    %v3408 = vsel %vm1360, %v336, %v2384
    %v3409 = vsel %vm1361, %v337, %v2385
    %v3410 = vsel %vm1362, %v338, %v2386
    %v3411 = vsel %vm1363, %v339, %v2387
    %v3412 = vsel %vm1364, %v340, %v2388
    %v3413 = vsel %vm1365, %v341, %v2389
    %v3414 = vsel %vm1366, %v342, %v2390
    %v3415 = vsel %vm1367, %v343, %v2391
    %v3416 = vsel %vm1368, %v344, %v2392
    %v3417 = vsel %vm1369, %v345, %v2393
    %v3418 = vsel %vm1370, %v346, %v2394
    %v3419 = vsel %vm1371, %v347, %v2395
    %v3420 = vsel %vm1372, %v348, %v2396
    %v3421 = vsel %vm1373, %v349, %v2397
    %v3422 = vsel %vm1374, %v350, %v2398
    %v3423 = vsel %vm1375, %v351, %v2399
    %v3424 = vsel %vm1376, %v352, %v2400
    %v3425 = vsel %vm1377, %v353, %v2401
    %v3426 = vsel %vm1378, %v354, %v2402
    %v3427 = vsel %vm1379, %v355, %v2403
    %v3428 = vsel %vm1380, %v356, %v2404
    %v3429 = vsel %vm1381, %v357, %v2405
    %v3430 = vsel %vm1382, %v358, %v2406
    %v3431 = vsel %vm1383, %v359, %v2407
    %v3432 = vsel %vm1384, %v360, %v2408
    %v3433 = vsel %vm1385, %v361, %v2409
    %v3434 = vsel %vm1386, %v362, %v2410
    %v3435 = vsel %vm1387, %v363, %v2411
    %v3436 = vsel %vm1388, %v364, %v2412
    %v3437 = vsel %vm1389, %v365, %v2413
    %v3438 = vsel %vm1390, %v366, %v2414
    %v3439 = vsel %vm1391, %v367, %v2415
    %v3440 = vsel %vm1392, %v368, %v2416
    %v3441 = vsel %vm1393, %v369, %v2417
    %v3442 = vsel %vm1394, %v370, %v2418
    %v3443 = vsel %vm1395, %v371, %v2419
    %v3444 = vsel %vm1396, %v372, %v2420
    %v3445 = vsel %vm1397, %v373, %v2421
    %v3446 = vsel %vm1398, %v374, %v2422
    %v3447 = vsel %vm1399, %v375, %v2423
    %v3448 = vsel %vm1400, %v376, %v2424
    %v3449 = vsel %vm1401, %v377, %v2425
    %v3450 = vsel %vm1402, %v378, %v2426
    %v3451 = vsel %vm1403, %v379, %v2427
    %v3452 = vsel %vm1404, %v380, %v2428
    %v3453 = vsel %vm1405, %v381, %v2429
    %v3454 = vsel %vm1406, %v382, %v2430
    %v3455 = vsel %vm1407, %v383, %v2431
    %v3456 = vsel %vm1408, %v384, %v2432
    %v3457 = vsel %vm1409, %v385, %v2433
    %v3458 = vsel %vm1410, %v386, %v2434
    %v3459 = vsel %vm1411, %v387, %v2435
    %v3460 = vsel %vm1412, %v388, %v2436
    %v3461 = vsel %vm1413, %v389, %v2437
    %v3462 = vsel %vm1414, %v390, %v2438
    %v3463 = vsel %vm1415, %v391, %v2439
    %v3464 = vsel %vm1416, %v392, %v2440
    %v3465 = vsel %vm1417, %v393, %v2441
    %v3466 = vsel %vm1418, %v394, %v2442
    %v3467 = vsel %vm1419, %v395, %v2443
    %v3468 = vsel %vm1420, %v396, %v2444
    %v3469 = vsel %vm1421, %v397, %v2445
    %v3470 = vsel %vm1422, %v398, %v2446
    %v3471 = vsel %vm1423, %v399, %v2447
    %v3472 = vsel %vm1424, %v400, %v2448
    %v3473 = vsel %vm1425, %v401, %v2449
    %v3474 = vsel %vm1426, %v402, %v2450
    %v3475 = vsel %vm1427, %v403, %v2451
    %v3476 = vsel %vm1428, %v404, %v2452
    %v3477 = vsel %vm1429, %v405, %v2453
    %v3478 = vsel %vm1430, %v406, %v2454
    %v3479 = vsel %vm1431, %v407, %v2455
    %v3480 = vsel %vm1432, %v408, %v2456
    %v3481 = vsel %vm1433, %v409, %v2457
    %v3482 = vsel %vm1434, %v410, %v2458
    %v3483 = vsel %vm1435, %v411, %v2459
    %v3484 = vsel %vm1436, %v412, %v2460
    %v3485 = vsel %vm1437, %v413, %v2461
    %v3486 = vsel %vm1438, %v414, %v2462
    %v3487 = vsel %vm1439, %v415, %v2463
    %v3488 = vsel %vm1440, %v416, %v2464
    %v3489 = vsel %vm1441, %v417, %v2465
    %v3490 = vsel %vm1442, %v418, %v2466
    %v3491 = vsel %vm1443, %v419, %v2467
    %v3492 = vsel %vm1444, %v420, %v2468
    %v3493 = vsel %vm1445, %v421, %v2469
    %v3494 = vsel %vm1446, %v422, %v2470
    %v3495 = vsel %vm1447, %v423, %v2471
    %v3496 = vsel %vm1448, %v424, %v2472
    %v3497 = vsel %vm1449, %v425, %v2473
    %v3498 = vsel %vm1450, %v426, %v2474
    %v3499 = vsel %vm1451, %v427, %v2475
    %v3500 = vsel %vm1452, %v428, %v2476
    %v3501 = vsel %vm1453, %v429, %v2477
    %v3502 = vsel %vm1454, %v430, %v2478
    %v3503 = vsel %vm1455, %v431, %v2479
    %v3504 = vsel %vm1456, %v432, %v2480
    %v3505 = vsel %vm1457, %v433, %v2481
    %v3506 = vsel %vm1458, %v434, %v2482
    %v3507 = vsel %vm1459, %v435, %v2483
    %v3508 = vsel %vm1460, %v436, %v2484
    %v3509 = vsel %vm1461, %v437, %v2485
    %v3510 = vsel %vm1462, %v438, %v2486
    %v3511 = vsel %vm1463, %v439, %v2487
    %v3512 = vsel %vm1464, %v440, %v2488
    %v3513 = vsel %vm1465, %v441, %v2489
    %v3514 = vsel %vm1466, %v442, %v2490
    %v3515 = vsel %vm1467, %v443, %v2491
    %v3516 = vsel %vm1468, %v444, %v2492
    %v3517 = vsel %vm1469, %v445, %v2493
    %v3518 = vsel %vm1470, %v446, %v2494
    %v3519 = vsel %vm1471, %v447, %v2495
    %v3520 = vsel %vm1472, %v448, %v2496
    %v3521 = vsel %vm1473, %v449, %v2497
    %v3522 = vsel %vm1474, %v450, %v2498
    %v3523 = vsel %vm1475, %v451, %v2499
    %v3524 = vsel %vm1476, %v452, %v2500
    %v3525 = vsel %vm1477, %v453, %v2501
    %v3526 = vsel %vm1478, %v454, %v2502
    %v3527 = vsel %vm1479, %v455, %v2503
    %v3528 = vsel %vm1480, %v456, %v2504
    %v3529 = vsel %vm1481, %v457, %v2505
    %v3530 = vsel %vm1482, %v458, %v2506
    %v3531 = vsel %vm1483, %v459, %v2507
    %v3532 = vsel %vm1484, %v460, %v2508
    %v3533 = vsel %vm1485, %v461, %v2509
    %v3534 = vsel %vm1486, %v462, %v2510
    %v3535 = vsel %vm1487, %v463, %v2511
    %v3536 = vsel %vm1488, %v464, %v2512
    %v3537 = vsel %vm1489, %v465, %v2513
    %v3538 = vsel %vm1490, %v466, %v2514
    %v3539 = vsel %vm1491, %v467, %v2515
    %v3540 = vsel %vm1492, %v468, %v2516
    %v3541 = vsel %vm1493, %v469, %v2517
    %v3542 = vsel %vm1494, %v470, %v2518
    %v3543 = vsel %vm1495, %v471, %v2519
    %v3544 = vsel %vm1496, %v472, %v2520
    %v3545 = vsel %vm1497, %v473, %v2521
    %v3546 = vsel %vm1498, %v474, %v2522
    %v3547 = vsel %vm1499, %v475, %v2523
    %v3548 = vsel %vm1500, %v476, %v2524
    %v3549 = vsel %vm1501, %v477, %v2525
    %v3550 = vsel %vm1502, %v478, %v2526
    %v3551 = vsel %vm1503, %v479, %v2527
    %v3552 = vsel %vm1504, %v480, %v2528
    %v3553 = vsel %vm1505, %v481, %v2529
    %v3554 = vsel %vm1506, %v482, %v2530
    %v3555 = vsel %vm1507, %v483, %v2531
    %v3556 = vsel %vm1508, %v484, %v2532
    %v3557 = vsel %vm1509, %v485, %v2533
    %v3558 = vsel %vm1510, %v486, %v2534
    %v3559 = vsel %vm1511, %v487, %v2535
    %v3560 = vsel %vm1512, %v488, %v2536
    %v3561 = vsel %vm1513, %v489, %v2537
    %v3562 = vsel %vm1514, %v490, %v2538
    %v3563 = vsel %vm1515, %v491, %v2539
    %v3564 = vsel %vm1516, %v492, %v2540
    %v3565 = vsel %vm1517, %v493, %v2541
    %v3566 = vsel %vm1518, %v494, %v2542
    %v3567 = vsel %vm1519, %v495, %v2543
    %v3568 = vsel %vm1520, %v496, %v2544
    %v3569 = vsel %vm1521, %v497, %v2545
    %v3570 = vsel %vm1522, %v498, %v2546
    %v3571 = vsel %vm1523, %v499, %v2547
    %v3572 = vsel %vm1524, %v500, %v2548
    %v3573 = vsel %vm1525, %v501, %v2549
    %v3574 = vsel %vm1526, %v502, %v2550
    %v3575 = vsel %vm1527, %v503, %v2551
    %v3576 = vsel %vm1528, %v504, %v2552
    %v3577 = vsel %vm1529, %v505, %v2553
    %v3578 = vsel %vm1530, %v506, %v2554
    %v3579 = vsel %vm1531, %v507, %v2555
    %v3580 = vsel %vm1532, %v508, %v2556
    %v3581 = vsel %vm1533, %v509, %v2557
    %v3582 = vsel %vm1534, %v510, %v2558
    %v3583 = vsel %vm1535, %v511, %v2559
    %v3584 = vsel %vm1536, %v512, %v2560
    %v3585 = vsel %vm1537, %v513, %v2561
    %v3586 = vsel %vm1538, %v514, %v2562
    %v3587 = vsel %vm1539, %v515, %v2563
    %v3588 = vsel %vm1540, %v516, %v2564
    %v3589 = vsel %vm1541, %v517, %v2565
    %v3590 = vsel %vm1542, %v518, %v2566
    %v3591 = vsel %vm1543, %v519, %v2567
    %v3592 = vsel %vm1544, %v520, %v2568
    %v3593 = vsel %vm1545, %v521, %v2569
    %v3594 = vsel %vm1546, %v522, %v2570
    %v3595 = vsel %vm1547, %v523, %v2571
    %v3596 = vsel %vm1548, %v524, %v2572
    %v3597 = vsel %vm1549, %v525, %v2573
    %v3598 = vsel %vm1550, %v526, %v2574
    %v3599 = vsel %vm1551, %v527, %v2575
    %v3600 = vsel %vm1552, %v528, %v2576
    %v3601 = vsel %vm1553, %v529, %v2577
    %v3602 = vsel %vm1554, %v530, %v2578
    %v3603 = vsel %vm1555, %v531, %v2579
    %v3604 = vsel %vm1556, %v532, %v2580
    %v3605 = vsel %vm1557, %v533, %v2581
    %v3606 = vsel %vm1558, %v534, %v2582
    %v3607 = vsel %vm1559, %v535, %v2583
    %v3608 = vsel %vm1560, %v536, %v2584
    %v3609 = vsel %vm1561, %v537, %v2585
    %v3610 = vsel %vm1562, %v538, %v2586
    %v3611 = vsel %vm1563, %v539, %v2587
    %v3612 = vsel %vm1564, %v540, %v2588
    %v3613 = vsel %vm1565, %v541, %v2589
    %v3614 = vsel %vm1566, %v542, %v2590
    %v3615 = vsel %vm1567, %v543, %v2591
    %v3616 = vsel %vm1568, %v544, %v2592
    %v3617 = vsel %vm1569, %v545, %v2593
    %v3618 = vsel %vm1570, %v546, %v2594
    %v3619 = vsel %vm1571, %v547, %v2595
    %v3620 = vsel %vm1572, %v548, %v2596
    %v3621 = vsel %vm1573, %v549, %v2597
    %v3622 = vsel %vm1574, %v550, %v2598
    %v3623 = vsel %vm1575, %v551, %v2599
    %v3624 = vsel %vm1576, %v552, %v2600
    %v3625 = vsel %vm1577, %v553, %v2601
    %v3626 = vsel %vm1578, %v554, %v2602
    %v3627 = vsel %vm1579, %v555, %v2603
    %v3628 = vsel %vm1580, %v556, %v2604
    %v3629 = vsel %vm1581, %v557, %v2605
    %v3630 = vsel %vm1582, %v558, %v2606
    %v3631 = vsel %vm1583, %v559, %v2607
    %v3632 = vsel %vm1584, %v560, %v2608
    %v3633 = vsel %vm1585, %v561, %v2609
    %v3634 = vsel %vm1586, %v562, %v2610
    %v3635 = vsel %vm1587, %v563, %v2611
    %v3636 = vsel %vm1588, %v564, %v2612
    %v3637 = vsel %vm1589, %v565, %v2613
    %v3638 = vsel %vm1590, %v566, %v2614
    %v3639 = vsel %vm1591, %v567, %v2615
    %v3640 = vsel %vm1592, %v568, %v2616
    %v3641 = vsel %vm1593, %v569, %v2617
    %v3642 = vsel %vm1594, %v570, %v2618
    %v3643 = vsel %vm1595, %v571, %v2619
    %v3644 = vsel %vm1596, %v572, %v2620
    %v3645 = vsel %vm1597, %v573, %v2621
    %v3646 = vsel %vm1598, %v574, %v2622
    %v3647 = vsel %vm1599, %v575, %v2623
    %v3648 = vsel %vm1600, %v576, %v2624
    %v3649 = vsel %vm1601, %v577, %v2625
    %v3650 = vsel %vm1602, %v578, %v2626
    %v3651 = vsel %vm1603, %v579, %v2627
    %v3652 = vsel %vm1604, %v580, %v2628
    %v3653 = vsel %vm1605, %v581, %v2629
    %v3654 = vsel %vm1606, %v582, %v2630
    %v3655 = vsel %vm1607, %v583, %v2631
    %v3656 = vsel %vm1608, %v584, %v2632
    %v3657 = vsel %vm1609, %v585, %v2633
    %v3658 = vsel %vm1610, %v586, %v2634
    %v3659 = vsel %vm1611, %v587, %v2635
    %v3660 = vsel %vm1612, %v588, %v2636
    %v3661 = vsel %vm1613, %v589, %v2637
    %v3662 = vsel %vm1614, %v590, %v2638
    %v3663 = vsel %vm1615, %v591, %v2639
    %v3664 = vsel %vm1616, %v592, %v2640
    %v3665 = vsel %vm1617, %v593, %v2641
    %v3666 = vsel %vm1618, %v594, %v2642
    %v3667 = vsel %vm1619, %v595, %v2643
    %v3668 = vsel %vm1620, %v596, %v2644
    %v3669 = vsel %vm1621, %v597, %v2645
    %v3670 = vsel %vm1622, %v598, %v2646
    %v3671 = vsel %vm1623, %v599, %v2647
    %v3672 = vsel %vm1624, %v600, %v2648
    %v3673 = vsel %vm1625, %v601, %v2649
    %v3674 = vsel %vm1626, %v602, %v2650
    %v3675 = vsel %vm1627, %v603, %v2651
    %v3676 = vsel %vm1628, %v604, %v2652
    %v3677 = vsel %vm1629, %v605, %v2653
    %v3678 = vsel %vm1630, %v606, %v2654
    %v3679 = vsel %vm1631, %v607, %v2655
    %v3680 = vsel %vm1632, %v608, %v2656
    %v3681 = vsel %vm1633, %v609, %v2657
    %v3682 = vsel %vm1634, %v610, %v2658
    %v3683 = vsel %vm1635, %v611, %v2659
    %v3684 = vsel %vm1636, %v612, %v2660
    %v3685 = vsel %vm1637, %v613, %v2661
    %v3686 = vsel %vm1638, %v614, %v2662
    %v3687 = vsel %vm1639, %v615, %v2663
    %v3688 = vsel %vm1640, %v616, %v2664
    %v3689 = vsel %vm1641, %v617, %v2665
    %v3690 = vsel %vm1642, %v618, %v2666
    %v3691 = vsel %vm1643, %v619, %v2667
    %v3692 = vsel %vm1644, %v620, %v2668
    %v3693 = vsel %vm1645, %v621, %v2669
    %v3694 = vsel %vm1646, %v622, %v2670
    %v3695 = vsel %vm1647, %v623, %v2671
    %v3696 = vsel %vm1648, %v624, %v2672
    %v3697 = vsel %vm1649, %v625, %v2673
    %v3698 = vsel %vm1650, %v626, %v2674
    %v3699 = vsel %vm1651, %v627, %v2675
    %v3700 = vsel %vm1652, %v628, %v2676
    %v3701 = vsel %vm1653, %v629, %v2677
    %v3702 = vsel %vm1654, %v630, %v2678
    %v3703 = vsel %vm1655, %v631, %v2679
    %v3704 = vsel %vm1656, %v632, %v2680
    %v3705 = vsel %vm1657, %v633, %v2681
    %v3706 = vsel %vm1658, %v634, %v2682
    %v3707 = vsel %vm1659, %v635, %v2683
    %v3708 = vsel %vm1660, %v636, %v2684
    %v3709 = vsel %vm1661, %v637, %v2685
    %v3710 = vsel %vm1662, %v638, %v2686
    %v3711 = vsel %vm1663, %v639, %v2687
    %v3712 = vsel %vm1664, %v640, %v2688
    %v3713 = vsel %vm1665, %v641, %v2689
    %v3714 = vsel %vm1666, %v642, %v2690
    %v3715 = vsel %vm1667, %v643, %v2691
    %v3716 = vsel %vm1668, %v644, %v2692
    %v3717 = vsel %vm1669, %v645, %v2693
    %v3718 = vsel %vm1670, %v646, %v2694
    %v3719 = vsel %vm1671, %v647, %v2695
    %v3720 = vsel %vm1672, %v648, %v2696
    %v3721 = vsel %vm1673, %v649, %v2697
    %v3722 = vsel %vm1674, %v650, %v2698
    %v3723 = vsel %vm1675, %v651, %v2699
    %v3724 = vsel %vm1676, %v652, %v2700
    %v3725 = vsel %vm1677, %v653, %v2701
    %v3726 = vsel %vm1678, %v654, %v2702
    %v3727 = vsel %vm1679, %v655, %v2703
    %v3728 = vsel %vm1680, %v656, %v2704
    %v3729 = vsel %vm1681, %v657, %v2705
    %v3730 = vsel %vm1682, %v658, %v2706
    %v3731 = vsel %vm1683, %v659, %v2707
    %v3732 = vsel %vm1684, %v660, %v2708
    %v3733 = vsel %vm1685, %v661, %v2709
    %v3734 = vsel %vm1686, %v662, %v2710
    %v3735 = vsel %vm1687, %v663, %v2711
    %v3736 = vsel %vm1688, %v664, %v2712
    %v3737 = vsel %vm1689, %v665, %v2713
    %v3738 = vsel %vm1690, %v666, %v2714
    %v3739 = vsel %vm1691, %v667, %v2715
    %v3740 = vsel %vm1692, %v668, %v2716
    %v3741 = vsel %vm1693, %v669, %v2717
    %v3742 = vsel %vm1694, %v670, %v2718
    %v3743 = vsel %vm1695, %v671, %v2719
    %v3744 = vsel %vm1696, %v672, %v2720
    %v3745 = vsel %vm1697, %v673, %v2721
    %v3746 = vsel %vm1698, %v674, %v2722
    %v3747 = vsel %vm1699, %v675, %v2723
    %v3748 = vsel %vm1700, %v676, %v2724
    %v3749 = vsel %vm1701, %v677, %v2725
    %v3750 = vsel %vm1702, %v678, %v2726
    %v3751 = vsel %vm1703, %v679, %v2727
    %v3752 = vsel %vm1704, %v680, %v2728
    %v3753 = vsel %vm1705, %v681, %v2729
    %v3754 = vsel %vm1706, %v682, %v2730
    %v3755 = vsel %vm1707, %v683, %v2731
    %v3756 = vsel %vm1708, %v684, %v2732
    %v3757 = vsel %vm1709, %v685, %v2733
    %v3758 = vsel %vm1710, %v686, %v2734
    %v3759 = vsel %vm1711, %v687, %v2735
    %v3760 = vsel %vm1712, %v688, %v2736
    %v3761 = vsel %vm1713, %v689, %v2737
    %v3762 = vsel %vm1714, %v690, %v2738
    %v3763 = vsel %vm1715, %v691, %v2739
    %v3764 = vsel %vm1716, %v692, %v2740
    %v3765 = vsel %vm1717, %v693, %v2741
    %v3766 = vsel %vm1718, %v694, %v2742
    %v3767 = vsel %vm1719, %v695, %v2743
    %v3768 = vsel %vm1720, %v696, %v2744
    %v3769 = vsel %vm1721, %v697, %v2745
    %v3770 = vsel %vm1722, %v698, %v2746
    %v3771 = vsel %vm1723, %v699, %v2747
    %v3772 = vsel %vm1724, %v700, %v2748
    %v3773 = vsel %vm1725, %v701, %v2749
    %v3774 = vsel %vm1726, %v702, %v2750
    %v3775 = vsel %vm1727, %v703, %v2751
    %v3776 = vsel %vm1728, %v704, %v2752
    %v3777 = vsel %vm1729, %v705, %v2753
    %v3778 = vsel %vm1730, %v706, %v2754
    %v3779 = vsel %vm1731, %v707, %v2755
    %v3780 = vsel %vm1732, %v708, %v2756
    %v3781 = vsel %vm1733, %v709, %v2757
    %v3782 = vsel %vm1734, %v710, %v2758
    %v3783 = vsel %vm1735, %v711, %v2759
    %v3784 = vsel %vm1736, %v712, %v2760
    %v3785 = vsel %vm1737, %v713, %v2761
    %v3786 = vsel %vm1738, %v714, %v2762
    %v3787 = vsel %vm1739, %v715, %v2763
    %v3788 = vsel %vm1740, %v716, %v2764
    %v3789 = vsel %vm1741, %v717, %v2765
    %v3790 = vsel %vm1742, %v718, %v2766
    %v3791 = vsel %vm1743, %v719, %v2767
    %v3792 = vsel %vm1744, %v720, %v2768
    %v3793 = vsel %vm1745, %v721, %v2769
    %v3794 = vsel %vm1746, %v722, %v2770
    %v3795 = vsel %vm1747, %v723, %v2771
    %v3796 = vsel %vm1748, %v724, %v2772
    %v3797 = vsel %vm1749, %v725, %v2773
    %v3798 = vsel %vm1750, %v726, %v2774
    %v3799 = vsel %vm1751, %v727, %v2775
    %v3800 = vsel %vm1752, %v728, %v2776
    %v3801 = vsel %vm1753, %v729, %v2777
    %v3802 = vsel %vm1754, %v730, %v2778
    %v3803 = vsel %vm1755, %v731, %v2779
    %v3804 = vsel %vm1756, %v732, %v2780
    %v3805 = vsel %vm1757, %v733, %v2781
    %v3806 = vsel %vm1758, %v734, %v2782
    %v3807 = vsel %vm1759, %v735, %v2783
    %v3808 = vsel %vm1760, %v736, %v2784
    %v3809 = vsel %vm1761, %v737, %v2785
    %v3810 = vsel %vm1762, %v738, %v2786
    %v3811 = vsel %vm1763, %v739, %v2787
    %v3812 = vsel %vm1764, %v740, %v2788
    %v3813 = vsel %vm1765, %v741, %v2789
    %v3814 = vsel %vm1766, %v742, %v2790
    %v3815 = vsel %vm1767, %v743, %v2791
    %v3816 = vsel %vm1768, %v744, %v2792
    %v3817 = vsel %vm1769, %v745, %v2793
    %v3818 = vsel %vm1770, %v746, %v2794
    %v3819 = vsel %vm1771, %v747, %v2795
    %v3820 = vsel %vm1772, %v748, %v2796
    %v3821 = vsel %vm1773, %v749, %v2797
    %v3822 = vsel %vm1774, %v750, %v2798
    %v3823 = vsel %vm1775, %v751, %v2799
    %v3824 = vsel %vm1776, %v752, %v2800
    %v3825 = vsel %vm1777, %v753, %v2801
    %v3826 = vsel %vm1778, %v754, %v2802
    %v3827 = vsel %vm1779, %v755, %v2803
    %v3828 = vsel %vm1780, %v756, %v2804
    %v3829 = vsel %vm1781, %v757, %v2805
    %v3830 = vsel %vm1782, %v758, %v2806
    %v3831 = vsel %vm1783, %v759, %v2807
    %v3832 = vsel %vm1784, %v760, %v2808
    %v3833 = vsel %vm1785, %v761, %v2809
    %v3834 = vsel %vm1786, %v762, %v2810
    %v3835 = vsel %vm1787, %v763, %v2811
    %v3836 = vsel %vm1788, %v764, %v2812
    %v3837 = vsel %vm1789, %v765, %v2813
    %v3838 = vsel %vm1790, %v766, %v2814
    %v3839 = vsel %vm1791, %v767, %v2815
    %v3840 = vsel %vm1792, %v768, %v2816
    %v3841 = vsel %vm1793, %v769, %v2817
    %v3842 = vsel %vm1794, %v770, %v2818
    %v3843 = vsel %vm1795, %v771, %v2819
    %v3844 = vsel %vm1796, %v772, %v2820
    %v3845 = vsel %vm1797, %v773, %v2821
    %v3846 = vsel %vm1798, %v774, %v2822
    %v3847 = vsel %vm1799, %v775, %v2823
    %v3848 = vsel %vm1800, %v776, %v2824
    %v3849 = vsel %vm1801, %v777, %v2825
    %v3850 = vsel %vm1802, %v778, %v2826
    %v3851 = vsel %vm1803, %v779, %v2827
    %v3852 = vsel %vm1804, %v780, %v2828
    %v3853 = vsel %vm1805, %v781, %v2829
    %v3854 = vsel %vm1806, %v782, %v2830
    %v3855 = vsel %vm1807, %v783, %v2831
    %v3856 = vsel %vm1808, %v784, %v2832
    %v3857 = vsel %vm1809, %v785, %v2833
    %v3858 = vsel %vm1810, %v786, %v2834
    %v3859 = vsel %vm1811, %v787, %v2835
    %v3860 = vsel %vm1812, %v788, %v2836
    %v3861 = vsel %vm1813, %v789, %v2837
    %v3862 = vsel %vm1814, %v790, %v2838
    %v3863 = vsel %vm1815, %v791, %v2839
    %v3864 = vsel %vm1816, %v792, %v2840
    %v3865 = vsel %vm1817, %v793, %v2841
    %v3866 = vsel %vm1818, %v794, %v2842
    %v3867 = vsel %vm1819, %v795, %v2843
    %v3868 = vsel %vm1820, %v796, %v2844
    %v3869 = vsel %vm1821, %v797, %v2845
    %v3870 = vsel %vm1822, %v798, %v2846
    %v3871 = vsel %vm1823, %v799, %v2847
    %v3872 = vsel %vm1824, %v800, %v2848
    %v3873 = vsel %vm1825, %v801, %v2849
    %v3874 = vsel %vm1826, %v802, %v2850
    %v3875 = vsel %vm1827, %v803, %v2851
    %v3876 = vsel %vm1828, %v804, %v2852
    %v3877 = vsel %vm1829, %v805, %v2853
    %v3878 = vsel %vm1830, %v806, %v2854
    %v3879 = vsel %vm1831, %v807, %v2855
    %v3880 = vsel %vm1832, %v808, %v2856
    %v3881 = vsel %vm1833, %v809, %v2857
    %v3882 = vsel %vm1834, %v810, %v2858
    %v3883 = vsel %vm1835, %v811, %v2859
    %v3884 = vsel %vm1836, %v812, %v2860
    %v3885 = vsel %vm1837, %v813, %v2861
    %v3886 = vsel %vm1838, %v814, %v2862
    %v3887 = vsel %vm1839, %v815, %v2863
    %v3888 = vsel %vm1840, %v816, %v2864
    %v3889 = vsel %vm1841, %v817, %v2865
    %v3890 = vsel %vm1842, %v818, %v2866
    %v3891 = vsel %vm1843, %v819, %v2867
    %v3892 = vsel %vm1844, %v820, %v2868
    %v3893 = vsel %vm1845, %v821, %v2869
    %v3894 = vsel %vm1846, %v822, %v2870
    %v3895 = vsel %vm1847, %v823, %v2871
    %v3896 = vsel %vm1848, %v824, %v2872
    %v3897 = vsel %vm1849, %v825, %v2873
    %v3898 = vsel %vm1850, %v826, %v2874
    %v3899 = vsel %vm1851, %v827, %v2875
    %v3900 = vsel %vm1852, %v828, %v2876
    %v3901 = vsel %vm1853, %v829, %v2877
    %v3902 = vsel %vm1854, %v830, %v2878
    %v3903 = vsel %vm1855, %v831, %v2879
    %v3904 = vsel %vm1856, %v832, %v2880
    %v3905 = vsel %vm1857, %v833, %v2881
    %v3906 = vsel %vm1858, %v834, %v2882
    %v3907 = vsel %vm1859, %v835, %v2883
    %v3908 = vsel %vm1860, %v836, %v2884
    %v3909 = vsel %vm1861, %v837, %v2885
    %v3910 = vsel %vm1862, %v838, %v2886
    %v3911 = vsel %vm1863, %v839, %v2887
    %v3912 = vsel %vm1864, %v840, %v2888
    %v3913 = vsel %vm1865, %v841, %v2889
    %v3914 = vsel %vm1866, %v842, %v2890
    %v3915 = vsel %vm1867, %v843, %v2891
    %v3916 = vsel %vm1868, %v844, %v2892
    %v3917 = vsel %vm1869, %v845, %v2893
    %v3918 = vsel %vm1870, %v846, %v2894
    %v3919 = vsel %vm1871, %v847, %v2895
    %v3920 = vsel %vm1872, %v848, %v2896
    %v3921 = vsel %vm1873, %v849, %v2897
    %v3922 = vsel %vm1874, %v850, %v2898
    %v3923 = vsel %vm1875, %v851, %v2899
    %v3924 = vsel %vm1876, %v852, %v2900
    %v3925 = vsel %vm1877, %v853, %v2901
    %v3926 = vsel %vm1878, %v854, %v2902
    %v3927 = vsel %vm1879, %v855, %v2903
    %v3928 = vsel %vm1880, %v856, %v2904
    %v3929 = vsel %vm1881, %v857, %v2905
    %v3930 = vsel %vm1882, %v858, %v2906
    %v3931 = vsel %vm1883, %v859, %v2907
    %v3932 = vsel %vm1884, %v860, %v2908
    %v3933 = vsel %vm1885, %v861, %v2909
    %v3934 = vsel %vm1886, %v862, %v2910
    %v3935 = vsel %vm1887, %v863, %v2911
    %v3936 = vsel %vm1888, %v864, %v2912
    %v3937 = vsel %vm1889, %v865, %v2913
    %v3938 = vsel %vm1890, %v866, %v2914
    %v3939 = vsel %vm1891, %v867, %v2915
    %v3940 = vsel %vm1892, %v868, %v2916
    %v3941 = vsel %vm1893, %v869, %v2917
    %v3942 = vsel %vm1894, %v870, %v2918
    %v3943 = vsel %vm1895, %v871, %v2919
    %v3944 = vsel %vm1896, %v872, %v2920
    %v3945 = vsel %vm1897, %v873, %v2921
    %v3946 = vsel %vm1898, %v874, %v2922
    %v3947 = vsel %vm1899, %v875, %v2923
    %v3948 = vsel %vm1900, %v876, %v2924
    %v3949 = vsel %vm1901, %v877, %v2925
    %v3950 = vsel %vm1902, %v878, %v2926
    %v3951 = vsel %vm1903, %v879, %v2927
    %v3952 = vsel %vm1904, %v880, %v2928
    %v3953 = vsel %vm1905, %v881, %v2929
    %v3954 = vsel %vm1906, %v882, %v2930
    %v3955 = vsel %vm1907, %v883, %v2931
    %v3956 = vsel %vm1908, %v884, %v2932
    %v3957 = vsel %vm1909, %v885, %v2933
    %v3958 = vsel %vm1910, %v886, %v2934
    %v3959 = vsel %vm1911, %v887, %v2935
    %v3960 = vsel %vm1912, %v888, %v2936
    %v3961 = vsel %vm1913, %v889, %v2937
    %v3962 = vsel %vm1914, %v890, %v2938
    %v3963 = vsel %vm1915, %v891, %v2939
    %v3964 = vsel %vm1916, %v892, %v2940
    %v3965 = vsel %vm1917, %v893, %v2941
    %v3966 = vsel %vm1918, %v894, %v2942
    %v3967 = vsel %vm1919, %v895, %v2943
    %v3968 = vsel %vm1920, %v896, %v2944
    %v3969 = vsel %vm1921, %v897, %v2945
    %v3970 = vsel %vm1922, %v898, %v2946
    %v3971 = vsel %vm1923, %v899, %v2947
    %v3972 = vsel %vm1924, %v900, %v2948
    %v3973 = vsel %vm1925, %v901, %v2949
    %v3974 = vsel %vm1926, %v902, %v2950
    %v3975 = vsel %vm1927, %v903, %v2951
    %v3976 = vsel %vm1928, %v904, %v2952
    %v3977 = vsel %vm1929, %v905, %v2953
    %v3978 = vsel %vm1930, %v906, %v2954
    %v3979 = vsel %vm1931, %v907, %v2955
    %v3980 = vsel %vm1932, %v908, %v2956
    %v3981 = vsel %vm1933, %v909, %v2957
    %v3982 = vsel %vm1934, %v910, %v2958
    %v3983 = vsel %vm1935, %v911, %v2959
    %v3984 = vsel %vm1936, %v912, %v2960
    %v3985 = vsel %vm1937, %v913, %v2961
    %v3986 = vsel %vm1938, %v914, %v2962
    %v3987 = vsel %vm1939, %v915, %v2963
    %v3988 = vsel %vm1940, %v916, %v2964
    %v3989 = vsel %vm1941, %v917, %v2965
    %v3990 = vsel %vm1942, %v918, %v2966
    %v3991 = vsel %vm1943, %v919, %v2967
    %v3992 = vsel %vm1944, %v920, %v2968
    %v3993 = vsel %vm1945, %v921, %v2969
    %v3994 = vsel %vm1946, %v922, %v2970
    %v3995 = vsel %vm1947, %v923, %v2971
    %v3996 = vsel %vm1948, %v924, %v2972
    %v3997 = vsel %vm1949, %v925, %v2973
    %v3998 = vsel %vm1950, %v926, %v2974
    %v3999 = vsel %vm1951, %v927, %v2975
    %v4000 = vsel %vm1952, %v928, %v2976
    %v4001 = vsel %vm1953, %v929, %v2977
    %v4002 = vsel %vm1954, %v930, %v2978
    %v4003 = vsel %vm1955, %v931, %v2979
    %v4004 = vsel %vm1956, %v932, %v2980
    %v4005 = vsel %vm1957, %v933, %v2981
    %v4006 = vsel %vm1958, %v934, %v2982
    %v4007 = vsel %vm1959, %v935, %v2983
    %v4008 = vsel %vm1960, %v936, %v2984
    %v4009 = vsel %vm1961, %v937, %v2985
    %v4010 = vsel %vm1962, %v938, %v2986
    %v4011 = vsel %vm1963, %v939, %v2987
    %v4012 = vsel %vm1964, %v940, %v2988
    %v4013 = vsel %vm1965, %v941, %v2989
    %v4014 = vsel %vm1966, %v942, %v2990
    %v4015 = vsel %vm1967, %v943, %v2991
    %v4016 = vsel %vm1968, %v944, %v2992
    %v4017 = vsel %vm1969, %v945, %v2993
    %v4018 = vsel %vm1970, %v946, %v2994
    %v4019 = vsel %vm1971, %v947, %v2995
    %v4020 = vsel %vm1972, %v948, %v2996
    %v4021 = vsel %vm1973, %v949, %v2997
    %v4022 = vsel %vm1974, %v950, %v2998
    %v4023 = vsel %vm1975, %v951, %v2999
    %v4024 = vsel %vm1976, %v952, %v3000
    %v4025 = vsel %vm1977, %v953, %v3001
    %v4026 = vsel %vm1978, %v954, %v3002
    %v4027 = vsel %vm1979, %v955, %v3003
    %v4028 = vsel %vm1980, %v956, %v3004
    %v4029 = vsel %vm1981, %v957, %v3005
    %v4030 = vsel %vm1982, %v958, %v3006
    %v4031 = vsel %vm1983, %v959, %v3007
    %v4032 = vsel %vm1984, %v960, %v3008
    %v4033 = vsel %vm1985, %v961, %v3009
    %v4034 = vsel %vm1986, %v962, %v3010
    %v4035 = vsel %vm1987, %v963, %v3011
    %v4036 = vsel %vm1988, %v964, %v3012
    %v4037 = vsel %vm1989, %v965, %v3013
    %v4038 = vsel %vm1990, %v966, %v3014
    %v4039 = vsel %vm1991, %v967, %v3015
    %v4040 = vsel %vm1992, %v968, %v3016
    %v4041 = vsel %vm1993, %v969, %v3017
    %v4042 = vsel %vm1994, %v970, %v3018
    %v4043 = vsel %vm1995, %v971, %v3019
    %v4044 = vsel %vm1996, %v972, %v3020
    %v4045 = vsel %vm1997, %v973, %v3021
    %v4046 = vsel %vm1998, %v974, %v3022
    %v4047 = vsel %vm1999, %v975, %v3023
    %v4048 = vsel %vm2000, %v976, %v3024
    %v4049 = vsel %vm2001, %v977, %v3025
    %v4050 = vsel %vm2002, %v978, %v3026
    %v4051 = vsel %vm2003, %v979, %v3027
    %v4052 = vsel %vm2004, %v980, %v3028
    %v4053 = vsel %vm2005, %v981, %v3029
    %v4054 = vsel %vm2006, %v982, %v3030
    %v4055 = vsel %vm2007, %v983, %v3031
    %v4056 = vsel %vm2008, %v984, %v3032
    %v4057 = vsel %vm2009, %v985, %v3033
    %v4058 = vsel %vm2010, %v986, %v3034
    %v4059 = vsel %vm2011, %v987, %v3035
    %v4060 = vsel %vm2012, %v988, %v3036
    %v4061 = vsel %vm2013, %v989, %v3037
    %v4062 = vsel %vm2014, %v990, %v3038
    %v4063 = vsel %vm2015, %v991, %v3039
    %v4064 = vsel %vm2016, %v992, %v3040
    %v4065 = vsel %vm2017, %v993, %v3041
    %v4066 = vsel %vm2018, %v994, %v3042
    %v4067 = vsel %vm2019, %v995, %v3043
    %v4068 = vsel %vm2020, %v996, %v3044
    %v4069 = vsel %vm2021, %v997, %v3045
    %v4070 = vsel %vm2022, %v998, %v3046
    %v4071 = vsel %vm2023, %v999, %v3047
    %v4072 = vsel %vm2024, %v1000, %v3048
    %v4073 = vsel %vm2025, %v1001, %v3049
    %v4074 = vsel %vm2026, %v1002, %v3050
    %v4075 = vsel %vm2027, %v1003, %v3051
    %v4076 = vsel %vm2028, %v1004, %v3052
    %v4077 = vsel %vm2029, %v1005, %v3053
    %v4078 = vsel %vm2030, %v1006, %v3054
    %v4079 = vsel %vm2031, %v1007, %v3055
    %v4080 = vsel %vm2032, %v1008, %v3056
    %v4081 = vsel %vm2033, %v1009, %v3057
    %v4082 = vsel %vm2034, %v1010, %v3058
    %v4083 = vsel %vm2035, %v1011, %v3059
    %v4084 = vsel %vm2036, %v1012, %v3060
    %v4085 = vsel %vm2037, %v1013, %v3061
    %v4086 = vsel %vm2038, %v1014, %v3062
    %v4087 = vsel %vm2039, %v1015, %v3063
    %v4088 = vsel %vm2040, %v1016, %v3064
    %v4089 = vsel %vm2041, %v1017, %v3065
    %v4090 = vsel %vm2042, %v1018, %v3066
    %v4091 = vsel %vm2043, %v1019, %v3067
    %v4092 = vsel %vm2044, %v1020, %v3068
    %v4093 = vsel %vm2045, %v1021, %v3069
    %v4094 = vsel %vm2046, %v1022, %v3070
    %v4095 = vsel %vm2047, %v1023, %v3071
    %v4096 = vsel %vm2048, %v1024, %v3072
    %v4097 = vsel %vm2049, %v1025, %v3073
    %v4098 = vsel %vm2050, %v1026, %v3074
    %v4099 = vsel %vm2051, %v1027, %v3075
    %v4100 = vsel %vm2052, %v1028, %v3076
    %v4101 = vsel %vm2053, %v1029, %v3077
    %v4102 = vsel %vm2054, %v1030, %v3078
    %v4103 = vsel %vm2055, %v1031, %v3079
    %v4104 = vsel %vm2056, %v1032, %v3080
    %v4105 = vsel %vm2057, %v1033, %v3081
    %v4106 = vsel %vm2058, %v1034, %v3082
    %v4107 = vsel %vm2059, %v1035, %v3083
    %v4108 = vsel %vm2060, %v1036, %v3084
    %v4109 = vsel %vm2061, %v1037, %v3085
    %v4110 = vsel %vm2062, %v1038, %v3086
    %v4111 = vsel %vm2063, %v1039, %v3087
    %v4112 = vsel %vm2064, %v1040, %v3088
    %v4113 = vsel %vm2065, %v1041, %v3089
    %v4114 = vsel %vm2066, %v1042, %v3090
    %v4115 = vsel %vm2067, %v1043, %v3091
    %v4116 = vsel %vm2068, %v1044, %v3092
    %v4117 = vsel %vm2069, %v1045, %v3093
    %v4118 = vsel %vm2070, %v1046, %v3094
    %4119 = vst [vmem:[#allocation5] sm:$0xff] %v3095
    %4120 = vst [vmem:[#allocation5 + $0x8] sm:$0xff] %v3096
    %4121 = vst [vmem:[#allocation5 + $0x10] sm:$0xff] %v3097
    %4122 = vst [vmem:[#allocation5 + $0x18] sm:$0xff] %v3098
    %4123 = vst [vmem:[#allocation5 + $0x20] sm:$0xff] %v3099
    %4124 = vst [vmem:[#allocation5 + $0x28] sm:$0xff] %v3100
    %4125 = vst [vmem:[#allocation5 + $0x30] sm:$0xff] %v3101
    %4126 = vst [vmem:[#allocation5 + $0x38] sm:$0xff] %v3102
    %4127 = vst [vmem:[#allocation5 + $0x40] sm:$0xff] %v3103
    %4128 = vst [vmem:[#allocation5 + $0x48] sm:$0xff] %v3104
    %4129 = vst [vmem:[#allocation5 + $0x50] sm:$0xff] %v3105
    %4130 = vst [vmem:[#allocation5 + $0x58] sm:$0xff] %v3106
    %4131 = vst [vmem:[#allocation5 + $0x60] sm:$0xff] %v3107
    %4132 = vst [vmem:[#allocation5 + $0x68] sm:$0xff] %v3108
    %4133 = vst [vmem:[#allocation5 + $0x70] sm:$0xff] %v3109
    %4134 = vst [vmem:[#allocation5 + $0x78] sm:$0xff] %v3110
    %4135 = vst [vmem:[#allocation5 + $0x80] sm:$0xff] %v3111
    %4136 = vst [vmem:[#allocation5 + $0x88] sm:$0xff] %v3112
    %4137 = vst [vmem:[#allocation5 + $0x90] sm:$0xff] %v3113
    %4138 = vst [vmem:[#allocation5 + $0x98] sm:$0xff] %v3114
    %4139 = vst [vmem:[#allocation5 + $0xa0] sm:$0xff] %v3115
    %4140 = vst [vmem:[#allocation5 + $0xa8] sm:$0xff] %v3116
    %4141 = vst [vmem:[#allocation5 + $0xb0] sm:$0xff] %v3117
    %4142 = vst [vmem:[#allocation5 + $0xb8] sm:$0xff] %v3118
    %4143 = vst [vmem:[#allocation5 + $0xc0] sm:$0xff] %v3119
    %4144 = vst [vmem:[#allocation5 + $0xc8] sm:$0xff] %v3120
    %4145 = vst [vmem:[#allocation5 + $0xd0] sm:$0xff] %v3121
    %4146 = vst [vmem:[#allocation5 + $0xd8] sm:$0xff] %v3122
    %4147 = vst [vmem:[#allocation5 + $0xe0] sm:$0xff] %v3123
    %4148 = vst [vmem:[#allocation5 + $0xe8] sm:$0xff] %v3124
    %4149 = vst [vmem:[#allocation5 + $0xf0] sm:$0xff] %v3125
    %4150 = vst [vmem:[#allocation5 + $0xf8] sm:$0xff] %v3126
    %4151 = vst [vmem:[#allocation5 + $0x100] sm:$0xff] %v3127
    %4152 = vst [vmem:[#allocation5 + $0x108] sm:$0xff] %v3128
    %4153 = vst [vmem:[#allocation5 + $0x110] sm:$0xff] %v3129
    %4154 = vst [vmem:[#allocation5 + $0x118] sm:$0xff] %v3130
    %4155 = vst [vmem:[#allocation5 + $0x120] sm:$0xff] %v3131
    %4156 = vst [vmem:[#allocation5 + $0x128] sm:$0xff] %v3132
    %4157 = vst [vmem:[#allocation5 + $0x130] sm:$0xff] %v3133
    %4158 = vst [vmem:[#allocation5 + $0x138] sm:$0xff] %v3134
    %4159 = vst [vmem:[#allocation5 + $0x140] sm:$0xff] %v3135
    %4160 = vst [vmem:[#allocation5 + $0x148] sm:$0xff] %v3136
    %4161 = vst [vmem:[#allocation5 + $0x150] sm:$0xff] %v3137
    %4162 = vst [vmem:[#allocation5 + $0x158] sm:$0xff] %v3138
    %4163 = vst [vmem:[#allocation5 + $0x160] sm:$0xff] %v3139
    %4164 = vst [vmem:[#allocation5 + $0x168] sm:$0xff] %v3140
    %4165 = vst [vmem:[#allocation5 + $0x170] sm:$0xff] %v3141
    %4166 = vst [vmem:[#allocation5 + $0x178] sm:$0xff] %v3142
    %4167 = vst [vmem:[#allocation5 + $0x180] sm:$0xff] %v3143
    %4168 = vst [vmem:[#allocation5 + $0x188] sm:$0xff] %v3144
    %4169 = vst [vmem:[#allocation5 + $0x190] sm:$0xff] %v3145
    %4170 = vst [vmem:[#allocation5 + $0x198] sm:$0xff] %v3146
    %4171 = vst [vmem:[#allocation5 + $0x1a0] sm:$0xff] %v3147
    %4172 = vst [vmem:[#allocation5 + $0x1a8] sm:$0xff] %v3148
    %4173 = vst [vmem:[#allocation5 + $0x1b0] sm:$0xff] %v3149
    %4174 = vst [vmem:[#allocation5 + $0x1b8] sm:$0xff] %v3150
    %4175 = vst [vmem:[#allocation5 + $0x1c0] sm:$0xff] %v3151
    %4176 = vst [vmem:[#allocation5 + $0x1c8] sm:$0xff] %v3152
    %4177 = vst [vmem:[#allocation5 + $0x1d0] sm:$0xff] %v3153
    %4178 = vst [vmem:[#allocation5 + $0x1d8] sm:$0xff] %v3154
    %4179 = vst [vmem:[#allocation5 + $0x1e0] sm:$0xff] %v3155
    %4180 = vst [vmem:[#allocation5 + $0x1e8] sm:$0xff] %v3156
    %4181 = vst [vmem:[#allocation5 + $0x1f0] sm:$0xff] %v3157
    %4182 = vst [vmem:[#allocation5 + $0x1f8] sm:$0xff] %v3158
    %4183 = vst [vmem:[#allocation5 + $0x200] sm:$0xff] %v3159
    %4184 = vst [vmem:[#allocation5 + $0x208] sm:$0xff] %v3160
    %4185 = vst [vmem:[#allocation5 + $0x210] sm:$0xff] %v3161
    %4186 = vst [vmem:[#allocation5 + $0x218] sm:$0xff] %v3162
    %4187 = vst [vmem:[#allocation5 + $0x220] sm:$0xff] %v3163
    %4188 = vst [vmem:[#allocation5 + $0x228] sm:$0xff] %v3164
    %4189 = vst [vmem:[#allocation5 + $0x230] sm:$0xff] %v3165
    %4190 = vst [vmem:[#allocation5 + $0x238] sm:$0xff] %v3166
    %4191 = vst [vmem:[#allocation5 + $0x240] sm:$0xff] %v3167
    %4192 = vst [vmem:[#allocation5 + $0x248] sm:$0xff] %v3168
    %4193 = vst [vmem:[#allocation5 + $0x250] sm:$0xff] %v3169
    %4194 = vst [vmem:[#allocation5 + $0x258] sm:$0xff] %v3170
    %4195 = vst [vmem:[#allocation5 + $0x260] sm:$0xff] %v3171
    %4196 = vst [vmem:[#allocation5 + $0x268] sm:$0xff] %v3172
    %4197 = vst [vmem:[#allocation5 + $0x270] sm:$0xff] %v3173
    %4198 = vst [vmem:[#allocation5 + $0x278] sm:$0xff] %v3174
    %4199 = vst [vmem:[#allocation5 + $0x280] sm:$0xff] %v3175
    %4200 = vst [vmem:[#allocation5 + $0x288] sm:$0xff] %v3176
    %4201 = vst [vmem:[#allocation5 + $0x290] sm:$0xff] %v3177
    %4202 = vst [vmem:[#allocation5 + $0x298] sm:$0xff] %v3178
    %4203 = vst [vmem:[#allocation5 + $0x2a0] sm:$0xff] %v3179
    %4204 = vst [vmem:[#allocation5 + $0x2a8] sm:$0xff] %v3180
    %4205 = vst [vmem:[#allocation5 + $0x2b0] sm:$0xff] %v3181
    %4206 = vst [vmem:[#allocation5 + $0x2b8] sm:$0xff] %v3182
    %4207 = vst [vmem:[#allocation5 + $0x2c0] sm:$0xff] %v3183
    %4208 = vst [vmem:[#allocation5 + $0x2c8] sm:$0xff] %v3184
    %4209 = vst [vmem:[#allocation5 + $0x2d0] sm:$0xff] %v3185
    %4210 = vst [vmem:[#allocation5 + $0x2d8] sm:$0xff] %v3186
    %4211 = vst [vmem:[#allocation5 + $0x2e0] sm:$0xff] %v3187
    %4212 = vst [vmem:[#allocation5 + $0x2e8] sm:$0xff] %v3188
    %4213 = vst [vmem:[#allocation5 + $0x2f0] sm:$0xff] %v3189
    %4214 = vst [vmem:[#allocation5 + $0x2f8] sm:$0xff] %v3190
    %4215 = vst [vmem:[#allocation5 + $0x300] sm:$0xff] %v3191
    %4216 = vst [vmem:[#allocation5 + $0x308] sm:$0xff] %v3192
    %4217 = vst [vmem:[#allocation5 + $0x310] sm:$0xff] %v3193
    %4218 = vst [vmem:[#allocation5 + $0x318] sm:$0xff] %v3194
    %4219 = vst [vmem:[#allocation5 + $0x320] sm:$0xff] %v3195
    %4220 = vst [vmem:[#allocation5 + $0x328] sm:$0xff] %v3196
    %4221 = vst [vmem:[#allocation5 + $0x330] sm:$0xff] %v3197
    %4222 = vst [vmem:[#allocation5 + $0x338] sm:$0xff] %v3198
    %4223 = vst [vmem:[#allocation5 + $0x340] sm:$0xff] %v3199
    %4224 = vst [vmem:[#allocation5 + $0x348] sm:$0xff] %v3200
    %4225 = vst [vmem:[#allocation5 + $0x350] sm:$0xff] %v3201
    %4226 = vst [vmem:[#allocation5 + $0x358] sm:$0xff] %v3202
    %4227 = vst [vmem:[#allocation5 + $0x360] sm:$0xff] %v3203
    %4228 = vst [vmem:[#allocation5 + $0x368] sm:$0xff] %v3204
    %4229 = vst [vmem:[#allocation5 + $0x370] sm:$0xff] %v3205
    %4230 = vst [vmem:[#allocation5 + $0x378] sm:$0xff] %v3206
    %4231 = vst [vmem:[#allocation5 + $0x380] sm:$0xff] %v3207
    %4232 = vst [vmem:[#allocation5 + $0x388] sm:$0xff] %v3208
    %4233 = vst [vmem:[#allocation5 + $0x390] sm:$0xff] %v3209
    %4234 = vst [vmem:[#allocation5 + $0x398] sm:$0xff] %v3210
    %4235 = vst [vmem:[#allocation5 + $0x3a0] sm:$0xff] %v3211
    %4236 = vst [vmem:[#allocation5 + $0x3a8] sm:$0xff] %v3212
    %4237 = vst [vmem:[#allocation5 + $0x3b0] sm:$0xff] %v3213
    %4238 = vst [vmem:[#allocation5 + $0x3b8] sm:$0xff] %v3214
    %4239 = vst [vmem:[#allocation5 + $0x3c0] sm:$0xff] %v3215
    %4240 = vst [vmem:[#allocation5 + $0x3c8] sm:$0xff] %v3216
    %4241 = vst [vmem:[#allocation5 + $0x3d0] sm:$0xff] %v3217
    %4242 = vst [vmem:[#allocation5 + $0x3d8] sm:$0xff] %v3218
    %4243 = vst [vmem:[#allocation5 + $0x3e0] sm:$0xff] %v3219
    %4244 = vst [vmem:[#allocation5 + $0x3e8] sm:$0xff] %v3220
    %4245 = vst [vmem:[#allocation5 + $0x3f0] sm:$0xff] %v3221
    %4246 = vst [vmem:[#allocation5 + $0x3f8] sm:$0xff] %v3222
    %4247 = vst [vmem:[#allocation5 + $0x400] sm:$0xff] %v3223
    %4248 = vst [vmem:[#allocation5 + $0x408] sm:$0xff] %v3224
    %4249 = vst [vmem:[#allocation5 + $0x410] sm:$0xff] %v3225
    %4250 = vst [vmem:[#allocation5 + $0x418] sm:$0xff] %v3226
    %4251 = vst [vmem:[#allocation5 + $0x420] sm:$0xff] %v3227
    %4252 = vst [vmem:[#allocation5 + $0x428] sm:$0xff] %v3228
    %4253 = vst [vmem:[#allocation5 + $0x430] sm:$0xff] %v3229
    %4254 = vst [vmem:[#allocation5 + $0x438] sm:$0xff] %v3230
    %4255 = vst [vmem:[#allocation5 + $0x440] sm:$0xff] %v3231
    %4256 = vst [vmem:[#allocation5 + $0x448] sm:$0xff] %v3232
    %4257 = vst [vmem:[#allocation5 + $0x450] sm:$0xff] %v3233
    %4258 = vst [vmem:[#allocation5 + $0x458] sm:$0xff] %v3234
    %4259 = vst [vmem:[#allocation5 + $0x460] sm:$0xff] %v3235
    %4260 = vst [vmem:[#allocation5 + $0x468] sm:$0xff] %v3236
    %4261 = vst [vmem:[#allocation5 + $0x470] sm:$0xff] %v3237
    %4262 = vst [vmem:[#allocation5 + $0x478] sm:$0xff] %v3238
    %4263 = vst [vmem:[#allocation5 + $0x480] sm:$0xff] %v3239
    %4264 = vst [vmem:[#allocation5 + $0x488] sm:$0xff] %v3240
    %4265 = vst [vmem:[#allocation5 + $0x490] sm:$0xff] %v3241
    %4266 = vst [vmem:[#allocation5 + $0x498] sm:$0xff] %v3242
    %4267 = vst [vmem:[#allocation5 + $0x4a0] sm:$0xff] %v3243
    %4268 = vst [vmem:[#allocation5 + $0x4a8] sm:$0xff] %v3244
    %4269 = vst [vmem:[#allocation5 + $0x4b0] sm:$0xff] %v3245
    %4270 = vst [vmem:[#allocation5 + $0x4b8] sm:$0xff] %v3246
    %4271 = vst [vmem:[#allocation5 + $0x4c0] sm:$0xff] %v3247
    %4272 = vst [vmem:[#allocation5 + $0x4c8] sm:$0xff] %v3248
    %4273 = vst [vmem:[#allocation5 + $0x4d0] sm:$0xff] %v3249
    %4274 = vst [vmem:[#allocation5 + $0x4d8] sm:$0xff] %v3250
    %4275 = vst [vmem:[#allocation5 + $0x4e0] sm:$0xff] %v3251
    %4276 = vst [vmem:[#allocation5 + $0x4e8] sm:$0xff] %v3252
    %4277 = vst [vmem:[#allocation5 + $0x4f0] sm:$0xff] %v3253
    %4278 = vst [vmem:[#allocation5 + $0x4f8] sm:$0xff] %v3254
    %4279 = vst [vmem:[#allocation5 + $0x500] sm:$0xff] %v3255
    %4280 = vst [vmem:[#allocation5 + $0x508] sm:$0xff] %v3256
    %4281 = vst [vmem:[#allocation5 + $0x510] sm:$0xff] %v3257
    %4282 = vst [vmem:[#allocation5 + $0x518] sm:$0xff] %v3258
    %4283 = vst [vmem:[#allocation5 + $0x520] sm:$0xff] %v3259
    %4284 = vst [vmem:[#allocation5 + $0x528] sm:$0xff] %v3260
    %4285 = vst [vmem:[#allocation5 + $0x530] sm:$0xff] %v3261
    %4286 = vst [vmem:[#allocation5 + $0x538] sm:$0xff] %v3262
    %4287 = vst [vmem:[#allocation5 + $0x540] sm:$0xff] %v3263
    %4288 = vst [vmem:[#allocation5 + $0x548] sm:$0xff] %v3264
    %4289 = vst [vmem:[#allocation5 + $0x550] sm:$0xff] %v3265
    %4290 = vst [vmem:[#allocation5 + $0x558] sm:$0xff] %v3266
    %4291 = vst [vmem:[#allocation5 + $0x560] sm:$0xff] %v3267
    %4292 = vst [vmem:[#allocation5 + $0x568] sm:$0xff] %v3268
    %4293 = vst [vmem:[#allocation5 + $0x570] sm:$0xff] %v3269
    %4294 = vst [vmem:[#allocation5 + $0x578] sm:$0xff] %v3270
    %4295 = vst [vmem:[#allocation5 + $0x580] sm:$0xff] %v3271
    %4296 = vst [vmem:[#allocation5 + $0x588] sm:$0xff] %v3272
    %4297 = vst [vmem:[#allocation5 + $0x590] sm:$0xff] %v3273
    %4298 = vst [vmem:[#allocation5 + $0x598] sm:$0xff] %v3274
    %4299 = vst [vmem:[#allocation5 + $0x5a0] sm:$0xff] %v3275
    %4300 = vst [vmem:[#allocation5 + $0x5a8] sm:$0xff] %v3276
    %4301 = vst [vmem:[#allocation5 + $0x5b0] sm:$0xff] %v3277
    %4302 = vst [vmem:[#allocation5 + $0x5b8] sm:$0xff] %v3278
    %4303 = vst [vmem:[#allocation5 + $0x5c0] sm:$0xff] %v3279
    %4304 = vst [vmem:[#allocation5 + $0x5c8] sm:$0xff] %v3280
    %4305 = vst [vmem:[#allocation5 + $0x5d0] sm:$0xff] %v3281
    %4306 = vst [vmem:[#allocation5 + $0x5d8] sm:$0xff] %v3282
    %4307 = vst [vmem:[#allocation5 + $0x5e0] sm:$0xff] %v3283
    %4308 = vst [vmem:[#allocation5 + $0x5e8] sm:$0xff] %v3284
    %4309 = vst [vmem:[#allocation5 + $0x5f0] sm:$0xff] %v3285
    %4310 = vst [vmem:[#allocation5 + $0x5f8] sm:$0xff] %v3286
    %4311 = vst [vmem:[#allocation5 + $0x600] sm:$0xff] %v3287
    %4312 = vst [vmem:[#allocation5 + $0x608] sm:$0xff] %v3288
    %4313 = vst [vmem:[#allocation5 + $0x610] sm:$0xff] %v3289
    %4314 = vst [vmem:[#allocation5 + $0x618] sm:$0xff] %v3290
    %4315 = vst [vmem:[#allocation5 + $0x620] sm:$0xff] %v3291
    %4316 = vst [vmem:[#allocation5 + $0x628] sm:$0xff] %v3292
    %4317 = vst [vmem:[#allocation5 + $0x630] sm:$0xff] %v3293
    %4318 = vst [vmem:[#allocation5 + $0x638] sm:$0xff] %v3294
    %4319 = vst [vmem:[#allocation5 + $0x640] sm:$0xff] %v3295
    %4320 = vst [vmem:[#allocation5 + $0x648] sm:$0xff] %v3296
    %4321 = vst [vmem:[#allocation5 + $0x650] sm:$0xff] %v3297
    %4322 = vst [vmem:[#allocation5 + $0x658] sm:$0xff] %v3298
    %4323 = vst [vmem:[#allocation5 + $0x660] sm:$0xff] %v3299
    %4324 = vst [vmem:[#allocation5 + $0x668] sm:$0xff] %v3300
    %4325 = vst [vmem:[#allocation5 + $0x670] sm:$0xff] %v3301
    %4326 = vst [vmem:[#allocation5 + $0x678] sm:$0xff] %v3302
    %4327 = vst [vmem:[#allocation5 + $0x680] sm:$0xff] %v3303
    %4328 = vst [vmem:[#allocation5 + $0x688] sm:$0xff] %v3304
    %4329 = vst [vmem:[#allocation5 + $0x690] sm:$0xff] %v3305
    %4330 = vst [vmem:[#allocation5 + $0x698] sm:$0xff] %v3306
    %4331 = vst [vmem:[#allocation5 + $0x6a0] sm:$0xff] %v3307
    %4332 = vst [vmem:[#allocation5 + $0x6a8] sm:$0xff] %v3308
    %4333 = vst [vmem:[#allocation5 + $0x6b0] sm:$0xff] %v3309
    %4334 = vst [vmem:[#allocation5 + $0x6b8] sm:$0xff] %v3310
    %4335 = vst [vmem:[#allocation5 + $0x6c0] sm:$0xff] %v3311
    %4336 = vst [vmem:[#allocation5 + $0x6c8] sm:$0xff] %v3312
    %4337 = vst [vmem:[#allocation5 + $0x6d0] sm:$0xff] %v3313
    %4338 = vst [vmem:[#allocation5 + $0x6d8] sm:$0xff] %v3314
    %4339 = vst [vmem:[#allocation5 + $0x6e0] sm:$0xff] %v3315
    %4340 = vst [vmem:[#allocation5 + $0x6e8] sm:$0xff] %v3316
    %4341 = vst [vmem:[#allocation5 + $0x6f0] sm:$0xff] %v3317
    %4342 = vst [vmem:[#allocation5 + $0x6f8] sm:$0xff] %v3318
    %4343 = vst [vmem:[#allocation5 + $0x700] sm:$0xff] %v3319
    %4344 = vst [vmem:[#allocation5 + $0x708] sm:$0xff] %v3320
    %4345 = vst [vmem:[#allocation5 + $0x710] sm:$0xff] %v3321
    %4346 = vst [vmem:[#allocation5 + $0x718] sm:$0xff] %v3322
    %4347 = vst [vmem:[#allocation5 + $0x720] sm:$0xff] %v3323
    %4348 = vst [vmem:[#allocation5 + $0x728] sm:$0xff] %v3324
    %4349 = vst [vmem:[#allocation5 + $0x730] sm:$0xff] %v3325
    %4350 = vst [vmem:[#allocation5 + $0x738] sm:$0xff] %v3326
    %4351 = vst [vmem:[#allocation5 + $0x740] sm:$0xff] %v3327
    %4352 = vst [vmem:[#allocation5 + $0x748] sm:$0xff] %v3328
    %4353 = vst [vmem:[#allocation5 + $0x750] sm:$0xff] %v3329
    %4354 = vst [vmem:[#allocation5 + $0x758] sm:$0xff] %v3330
    %4355 = vst [vmem:[#allocation5 + $0x760] sm:$0xff] %v3331
    %4356 = vst [vmem:[#allocation5 + $0x768] sm:$0xff] %v3332
    %4357 = vst [vmem:[#allocation5 + $0x770] sm:$0xff] %v3333
    %4358 = vst [vmem:[#allocation5 + $0x778] sm:$0xff] %v3334
    %4359 = vst [vmem:[#allocation5 + $0x780] sm:$0xff] %v3335
    %4360 = vst [vmem:[#allocation5 + $0x788] sm:$0xff] %v3336
    %4361 = vst [vmem:[#allocation5 + $0x790] sm:$0xff] %v3337
    %4362 = vst [vmem:[#allocation5 + $0x798] sm:$0xff] %v3338
    %4363 = vst [vmem:[#allocation5 + $0x7a0] sm:$0xff] %v3339
    %4364 = vst [vmem:[#allocation5 + $0x7a8] sm:$0xff] %v3340
    %4365 = vst [vmem:[#allocation5 + $0x7b0] sm:$0xff] %v3341
    %4366 = vst [vmem:[#allocation5 + $0x7b8] sm:$0xff] %v3342
    %4367 = vst [vmem:[#allocation5 + $0x7c0] sm:$0xff] %v3343
    %4368 = vst [vmem:[#allocation5 + $0x7c8] sm:$0xff] %v3344
    %4369 = vst [vmem:[#allocation5 + $0x7d0] sm:$0xff] %v3345
    %4370 = vst [vmem:[#allocation5 + $0x7d8] sm:$0xff] %v3346
    %4371 = vst [vmem:[#allocation5 + $0x7e0] sm:$0xff] %v3347
    %4372 = vst [vmem:[#allocation5 + $0x7e8] sm:$0xff] %v3348
    %4373 = vst [vmem:[#allocation5 + $0x7f0] sm:$0xff] %v3349
    %4374 = vst [vmem:[#allocation5 + $0x7f8] sm:$0xff] %v3350
    %4375 = vst [vmem:[#allocation5 + $0x800] sm:$0xff] %v3351
    %4376 = vst [vmem:[#allocation5 + $0x808] sm:$0xff] %v3352
    %4377 = vst [vmem:[#allocation5 + $0x810] sm:$0xff] %v3353
    %4378 = vst [vmem:[#allocation5 + $0x818] sm:$0xff] %v3354
    %4379 = vst [vmem:[#allocation5 + $0x820] sm:$0xff] %v3355
    %4380 = vst [vmem:[#allocation5 + $0x828] sm:$0xff] %v3356
    %4381 = vst [vmem:[#allocation5 + $0x830] sm:$0xff] %v3357
    %4382 = vst [vmem:[#allocation5 + $0x838] sm:$0xff] %v3358
    %4383 = vst [vmem:[#allocation5 + $0x840] sm:$0xff] %v3359
    %4384 = vst [vmem:[#allocation5 + $0x848] sm:$0xff] %v3360
    %4385 = vst [vmem:[#allocation5 + $0x850] sm:$0xff] %v3361
    %4386 = vst [vmem:[#allocation5 + $0x858] sm:$0xff] %v3362
    %4387 = vst [vmem:[#allocation5 + $0x860] sm:$0xff] %v3363
    %4388 = vst [vmem:[#allocation5 + $0x868] sm:$0xff] %v3364
    %4389 = vst [vmem:[#allocation5 + $0x870] sm:$0xff] %v3365
    %4390 = vst [vmem:[#allocation5 + $0x878] sm:$0xff] %v3366
    %4391 = vst [vmem:[#allocation5 + $0x880] sm:$0xff] %v3367
    %4392 = vst [vmem:[#allocation5 + $0x888] sm:$0xff] %v3368
    %4393 = vst [vmem:[#allocation5 + $0x890] sm:$0xff] %v3369
    %4394 = vst [vmem:[#allocation5 + $0x898] sm:$0xff] %v3370
    %4395 = vst [vmem:[#allocation5 + $0x8a0] sm:$0xff] %v3371
    %4396 = vst [vmem:[#allocation5 + $0x8a8] sm:$0xff] %v3372
    %4397 = vst [vmem:[#allocation5 + $0x8b0] sm:$0xff] %v3373
    %4398 = vst [vmem:[#allocation5 + $0x8b8] sm:$0xff] %v3374
    %4399 = vst [vmem:[#allocation5 + $0x8c0] sm:$0xff] %v3375
    %4400 = vst [vmem:[#allocation5 + $0x8c8] sm:$0xff] %v3376
    %4401 = vst [vmem:[#allocation5 + $0x8d0] sm:$0xff] %v3377
    %4402 = vst [vmem:[#allocation5 + $0x8d8] sm:$0xff] %v3378
    %4403 = vst [vmem:[#allocation5 + $0x8e0] sm:$0xff] %v3379
    %4404 = vst [vmem:[#allocation5 + $0x8e8] sm:$0xff] %v3380
    %4405 = vst [vmem:[#allocation5 + $0x8f0] sm:$0xff] %v3381
    %4406 = vst [vmem:[#allocation5 + $0x8f8] sm:$0xff] %v3382
    %4407 = vst [vmem:[#allocation5 + $0x900] sm:$0xff] %v3383
    %4408 = vst [vmem:[#allocation5 + $0x908] sm:$0xff] %v3384
    %4409 = vst [vmem:[#allocation5 + $0x910] sm:$0xff] %v3385
    %4410 = vst [vmem:[#allocation5 + $0x918] sm:$0xff] %v3386
    %4411 = vst [vmem:[#allocation5 + $0x920] sm:$0xff] %v3387
    %4412 = vst [vmem:[#allocation5 + $0x928] sm:$0xff] %v3388
    %4413 = vst [vmem:[#allocation5 + $0x930] sm:$0xff] %v3389
    %4414 = vst [vmem:[#allocation5 + $0x938] sm:$0xff] %v3390
    %4415 = vst [vmem:[#allocation5 + $0x940] sm:$0xff] %v3391
    %4416 = vst [vmem:[#allocation5 + $0x948] sm:$0xff] %v3392
    %4417 = vst [vmem:[#allocation5 + $0x950] sm:$0xff] %v3393
    %4418 = vst [vmem:[#allocation5 + $0x958] sm:$0xff] %v3394
    %4419 = vst [vmem:[#allocation5 + $0x960] sm:$0xff] %v3395
    %4420 = vst [vmem:[#allocation5 + $0x968] sm:$0xff] %v3396
    %4421 = vst [vmem:[#allocation5 + $0x970] sm:$0xff] %v3397
    %4422 = vst [vmem:[#allocation5 + $0x978] sm:$0xff] %v3398
    %4423 = vst [vmem:[#allocation5 + $0x980] sm:$0xff] %v3399
    %4424 = vst [vmem:[#allocation5 + $0x988] sm:$0xff] %v3400
    %4425 = vst [vmem:[#allocation5 + $0x990] sm:$0xff] %v3401
    %4426 = vst [vmem:[#allocation5 + $0x998] sm:$0xff] %v3402
    %4427 = vst [vmem:[#allocation5 + $0x9a0] sm:$0xff] %v3403
    %4428 = vst [vmem:[#allocation5 + $0x9a8] sm:$0xff] %v3404
    %4429 = vst [vmem:[#allocation5 + $0x9b0] sm:$0xff] %v3405
    %4430 = vst [vmem:[#allocation5 + $0x9b8] sm:$0xff] %v3406
    %4431 = vst [vmem:[#allocation5 + $0x9c0] sm:$0xff] %v3407
    %4432 = vst [vmem:[#allocation5 + $0x9c8] sm:$0xff] %v3408
    %4433 = vst [vmem:[#allocation5 + $0x9d0] sm:$0xff] %v3409
    %4434 = vst [vmem:[#allocation5 + $0x9d8] sm:$0xff] %v3410
    %4435 = vst [vmem:[#allocation5 + $0x9e0] sm:$0xff] %v3411
    %4436 = vst [vmem:[#allocation5 + $0x9e8] sm:$0xff] %v3412
    %4437 = vst [vmem:[#allocation5 + $0x9f0] sm:$0xff] %v3413
    %4438 = vst [vmem:[#allocation5 + $0x9f8] sm:$0xff] %v3414
    %4439 = vst [vmem:[#allocation5 + $0xa00] sm:$0xff] %v3415
    %4440 = vst [vmem:[#allocation5 + $0xa08] sm:$0xff] %v3416
    %4441 = vst [vmem:[#allocation5 + $0xa10] sm:$0xff] %v3417
    %4442 = vst [vmem:[#allocation5 + $0xa18] sm:$0xff] %v3418
    %4443 = vst [vmem:[#allocation5 + $0xa20] sm:$0xff] %v3419
    %4444 = vst [vmem:[#allocation5 + $0xa28] sm:$0xff] %v3420
    %4445 = vst [vmem:[#allocation5 + $0xa30] sm:$0xff] %v3421
    %4446 = vst [vmem:[#allocation5 + $0xa38] sm:$0xff] %v3422
    %4447 = vst [vmem:[#allocation5 + $0xa40] sm:$0xff] %v3423
    %4448 = vst [vmem:[#allocation5 + $0xa48] sm:$0xff] %v3424
    %4449 = vst [vmem:[#allocation5 + $0xa50] sm:$0xff] %v3425
    %4450 = vst [vmem:[#allocation5 + $0xa58] sm:$0xff] %v3426
    %4451 = vst [vmem:[#allocation5 + $0xa60] sm:$0xff] %v3427
    %4452 = vst [vmem:[#allocation5 + $0xa68] sm:$0xff] %v3428
    %4453 = vst [vmem:[#allocation5 + $0xa70] sm:$0xff] %v3429
    %4454 = vst [vmem:[#allocation5 + $0xa78] sm:$0xff] %v3430
    %4455 = vst [vmem:[#allocation5 + $0xa80] sm:$0xff] %v3431
    %4456 = vst [vmem:[#allocation5 + $0xa88] sm:$0xff] %v3432
    %4457 = vst [vmem:[#allocation5 + $0xa90] sm:$0xff] %v3433
    %4458 = vst [vmem:[#allocation5 + $0xa98] sm:$0xff] %v3434
    %4459 = vst [vmem:[#allocation5 + $0xaa0] sm:$0xff] %v3435
    %4460 = vst [vmem:[#allocation5 + $0xaa8] sm:$0xff] %v3436
    %4461 = vst [vmem:[#allocation5 + $0xab0] sm:$0xff] %v3437
    %4462 = vst [vmem:[#allocation5 + $0xab8] sm:$0xff] %v3438
    %4463 = vst [vmem:[#allocation5 + $0xac0] sm:$0xff] %v3439
    %4464 = vst [vmem:[#allocation5 + $0xac8] sm:$0xff] %v3440
    %4465 = vst [vmem:[#allocation5 + $0xad0] sm:$0xff] %v3441
    %4466 = vst [vmem:[#allocation5 + $0xad8] sm:$0xff] %v3442
    %4467 = vst [vmem:[#allocation5 + $0xae0] sm:$0xff] %v3443
    %4468 = vst [vmem:[#allocation5 + $0xae8] sm:$0xff] %v3444
    %4469 = vst [vmem:[#allocation5 + $0xaf0] sm:$0xff] %v3445
    %4470 = vst [vmem:[#allocation5 + $0xaf8] sm:$0xff] %v3446
    %4471 = vst [vmem:[#allocation5 + $0xb00] sm:$0xff] %v3447
    %4472 = vst [vmem:[#allocation5 + $0xb08] sm:$0xff] %v3448
    %4473 = vst [vmem:[#allocation5 + $0xb10] sm:$0xff] %v3449
    %4474 = vst [vmem:[#allocation5 + $0xb18] sm:$0xff] %v3450
    %4475 = vst [vmem:[#allocation5 + $0xb20] sm:$0xff] %v3451
    %4476 = vst [vmem:[#allocation5 + $0xb28] sm:$0xff] %v3452
    %4477 = vst [vmem:[#allocation5 + $0xb30] sm:$0xff] %v3453
    %4478 = vst [vmem:[#allocation5 + $0xb38] sm:$0xff] %v3454
    %4479 = vst [vmem:[#allocation5 + $0xb40] sm:$0xff] %v3455
    %4480 = vst [vmem:[#allocation5 + $0xb48] sm:$0xff] %v3456
    %4481 = vst [vmem:[#allocation5 + $0xb50] sm:$0xff] %v3457
    %4482 = vst [vmem:[#allocation5 + $0xb58] sm:$0xff] %v3458
    %4483 = vst [vmem:[#allocation5 + $0xb60] sm:$0xff] %v3459
    %4484 = vst [vmem:[#allocation5 + $0xb68] sm:$0xff] %v3460
    %4485 = vst [vmem:[#allocation5 + $0xb70] sm:$0xff] %v3461
    %4486 = vst [vmem:[#allocation5 + $0xb78] sm:$0xff] %v3462
    %4487 = vst [vmem:[#allocation5 + $0xb80] sm:$0xff] %v3463
    %4488 = vst [vmem:[#allocation5 + $0xb88] sm:$0xff] %v3464
    %4489 = vst [vmem:[#allocation5 + $0xb90] sm:$0xff] %v3465
    %4490 = vst [vmem:[#allocation5 + $0xb98] sm:$0xff] %v3466
    %4491 = vst [vmem:[#allocation5 + $0xba0] sm:$0xff] %v3467
    %4492 = vst [vmem:[#allocation5 + $0xba8] sm:$0xff] %v3468
    %4493 = vst [vmem:[#allocation5 + $0xbb0] sm:$0xff] %v3469
    %4494 = vst [vmem:[#allocation5 + $0xbb8] sm:$0xff] %v3470
    %4495 = vst [vmem:[#allocation5 + $0xbc0] sm:$0xff] %v3471
    %4496 = vst [vmem:[#allocation5 + $0xbc8] sm:$0xff] %v3472
    %4497 = vst [vmem:[#allocation5 + $0xbd0] sm:$0xff] %v3473
    %4498 = vst [vmem:[#allocation5 + $0xbd8] sm:$0xff] %v3474
    %4499 = vst [vmem:[#allocation5 + $0xbe0] sm:$0xff] %v3475
    %4500 = vst [vmem:[#allocation5 + $0xbe8] sm:$0xff] %v3476
    %4501 = vst [vmem:[#allocation5 + $0xbf0] sm:$0xff] %v3477
    %4502 = vst [vmem:[#allocation5 + $0xbf8] sm:$0xff] %v3478
    %4503 = vst [vmem:[#allocation5 + $0xc00] sm:$0xff] %v3479
    %4504 = vst [vmem:[#allocation5 + $0xc08] sm:$0xff] %v3480
    %4505 = vst [vmem:[#allocation5 + $0xc10] sm:$0xff] %v3481
    %4506 = vst [vmem:[#allocation5 + $0xc18] sm:$0xff] %v3482
    %4507 = vst [vmem:[#allocation5 + $0xc20] sm:$0xff] %v3483
    %4508 = vst [vmem:[#allocation5 + $0xc28] sm:$0xff] %v3484
    %4509 = vst [vmem:[#allocation5 + $0xc30] sm:$0xff] %v3485
    %4510 = vst [vmem:[#allocation5 + $0xc38] sm:$0xff] %v3486
    %4511 = vst [vmem:[#allocation5 + $0xc40] sm:$0xff] %v3487
    %4512 = vst [vmem:[#allocation5 + $0xc48] sm:$0xff] %v3488
    %4513 = vst [vmem:[#allocation5 + $0xc50] sm:$0xff] %v3489
    %4514 = vst [vmem:[#allocation5 + $0xc58] sm:$0xff] %v3490
    %4515 = vst [vmem:[#allocation5 + $0xc60] sm:$0xff] %v3491
    %4516 = vst [vmem:[#allocation5 + $0xc68] sm:$0xff] %v3492
    %4517 = vst [vmem:[#allocation5 + $0xc70] sm:$0xff] %v3493
    %4518 = vst [vmem:[#allocation5 + $0xc78] sm:$0xff] %v3494
    %4519 = vst [vmem:[#allocation5 + $0xc80] sm:$0xff] %v3495
    %4520 = vst [vmem:[#allocation5 + $0xc88] sm:$0xff] %v3496
    %4521 = vst [vmem:[#allocation5 + $0xc90] sm:$0xff] %v3497
    %4522 = vst [vmem:[#allocation5 + $0xc98] sm:$0xff] %v3498
    %4523 = vst [vmem:[#allocation5 + $0xca0] sm:$0xff] %v3499
    %4524 = vst [vmem:[#allocation5 + $0xca8] sm:$0xff] %v3500
    %4525 = vst [vmem:[#allocation5 + $0xcb0] sm:$0xff] %v3501
    %4526 = vst [vmem:[#allocation5 + $0xcb8] sm:$0xff] %v3502
    %4527 = vst [vmem:[#allocation5 + $0xcc0] sm:$0xff] %v3503
    %4528 = vst [vmem:[#allocation5 + $0xcc8] sm:$0xff] %v3504
    %4529 = vst [vmem:[#allocation5 + $0xcd0] sm:$0xff] %v3505
    %4530 = vst [vmem:[#allocation5 + $0xcd8] sm:$0xff] %v3506
    %4531 = vst [vmem:[#allocation5 + $0xce0] sm:$0xff] %v3507
    %4532 = vst [vmem:[#allocation5 + $0xce8] sm:$0xff] %v3508
    %4533 = vst [vmem:[#allocation5 + $0xcf0] sm:$0xff] %v3509
    %4534 = vst [vmem:[#allocation5 + $0xcf8] sm:$0xff] %v3510
    %4535 = vst [vmem:[#allocation5 + $0xd00] sm:$0xff] %v3511
    %4536 = vst [vmem:[#allocation5 + $0xd08] sm:$0xff] %v3512
    %4537 = vst [vmem:[#allocation5 + $0xd10] sm:$0xff] %v3513
    %4538 = vst [vmem:[#allocation5 + $0xd18] sm:$0xff] %v3514
    %4539 = vst [vmem:[#allocation5 + $0xd20] sm:$0xff] %v3515
    %4540 = vst [vmem:[#allocation5 + $0xd28] sm:$0xff] %v3516
    %4541 = vst [vmem:[#allocation5 + $0xd30] sm:$0xff] %v3517
    %4542 = vst [vmem:[#allocation5 + $0xd38] sm:$0xff] %v3518
    %4543 = vst [vmem:[#allocation5 + $0xd40] sm:$0xff] %v3519
    %4544 = vst [vmem:[#allocation5 + $0xd48] sm:$0xff] %v3520
    %4545 = vst [vmem:[#allocation5 + $0xd50] sm:$0xff] %v3521
    %4546 = vst [vmem:[#allocation5 + $0xd58] sm:$0xff] %v3522
    %4547 = vst [vmem:[#allocation5 + $0xd60] sm:$0xff] %v3523
    %4548 = vst [vmem:[#allocation5 + $0xd68] sm:$0xff] %v3524
    %4549 = vst [vmem:[#allocation5 + $0xd70] sm:$0xff] %v3525
    %4550 = vst [vmem:[#allocation5 + $0xd78] sm:$0xff] %v3526
    %4551 = vst [vmem:[#allocation5 + $0xd80] sm:$0xff] %v3527
    %4552 = vst [vmem:[#allocation5 + $0xd88] sm:$0xff] %v3528
    %4553 = vst [vmem:[#allocation5 + $0xd90] sm:$0xff] %v3529
    %4554 = vst [vmem:[#allocation5 + $0xd98] sm:$0xff] %v3530
    %4555 = vst [vmem:[#allocation5 + $0xda0] sm:$0xff] %v3531
    %4556 = vst [vmem:[#allocation5 + $0xda8] sm:$0xff] %v3532
    %4557 = vst [vmem:[#allocation5 + $0xdb0] sm:$0xff] %v3533
    %4558 = vst [vmem:[#allocation5 + $0xdb8] sm:$0xff] %v3534
    %4559 = vst [vmem:[#allocation5 + $0xdc0] sm:$0xff] %v3535
    %4560 = vst [vmem:[#allocation5 + $0xdc8] sm:$0xff] %v3536
    %4561 = vst [vmem:[#allocation5 + $0xdd0] sm:$0xff] %v3537
    %4562 = vst [vmem:[#allocation5 + $0xdd8] sm:$0xff] %v3538
    %4563 = vst [vmem:[#allocation5 + $0xde0] sm:$0xff] %v3539
    %4564 = vst [vmem:[#allocation5 + $0xde8] sm:$0xff] %v3540
    %4565 = vst [vmem:[#allocation5 + $0xdf0] sm:$0xff] %v3541
    %4566 = vst [vmem:[#allocation5 + $0xdf8] sm:$0xff] %v3542
    %4567 = vst [vmem:[#allocation5 + $0xe00] sm:$0xff] %v3543
    %4568 = vst [vmem:[#allocation5 + $0xe08] sm:$0xff] %v3544
    %4569 = vst [vmem:[#allocation5 + $0xe10] sm:$0xff] %v3545
    %4570 = vst [vmem:[#allocation5 + $0xe18] sm:$0xff] %v3546
    %4571 = vst [vmem:[#allocation5 + $0xe20] sm:$0xff] %v3547
    %4572 = vst [vmem:[#allocation5 + $0xe28] sm:$0xff] %v3548
    %4573 = vst [vmem:[#allocation5 + $0xe30] sm:$0xff] %v3549
    %4574 = vst [vmem:[#allocation5 + $0xe38] sm:$0xff] %v3550
    %4575 = vst [vmem:[#allocation5 + $0xe40] sm:$0xff] %v3551
    %4576 = vst [vmem:[#allocation5 + $0xe48] sm:$0xff] %v3552
    %4577 = vst [vmem:[#allocation5 + $0xe50] sm:$0xff] %v3553
    %4578 = vst [vmem:[#allocation5 + $0xe58] sm:$0xff] %v3554
    %4579 = vst [vmem:[#allocation5 + $0xe60] sm:$0xff] %v3555
    %4580 = vst [vmem:[#allocation5 + $0xe68] sm:$0xff] %v3556
    %4581 = vst [vmem:[#allocation5 + $0xe70] sm:$0xff] %v3557
    %4582 = vst [vmem:[#allocation5 + $0xe78] sm:$0xff] %v3558
    %4583 = vst [vmem:[#allocation5 + $0xe80] sm:$0xff] %v3559
    %4584 = vst [vmem:[#allocation5 + $0xe88] sm:$0xff] %v3560
    %4585 = vst [vmem:[#allocation5 + $0xe90] sm:$0xff] %v3561
    %4586 = vst [vmem:[#allocation5 + $0xe98] sm:$0xff] %v3562
    %4587 = vst [vmem:[#allocation5 + $0xea0] sm:$0xff] %v3563
    %4588 = vst [vmem:[#allocation5 + $0xea8] sm:$0xff] %v3564
    %4589 = vst [vmem:[#allocation5 + $0xeb0] sm:$0xff] %v3565
    %4590 = vst [vmem:[#allocation5 + $0xeb8] sm:$0xff] %v3566
    %4591 = vst [vmem:[#allocation5 + $0xec0] sm:$0xff] %v3567
    %4592 = vst [vmem:[#allocation5 + $0xec8] sm:$0xff] %v3568
    %4593 = vst [vmem:[#allocation5 + $0xed0] sm:$0xff] %v3569
    %4594 = vst [vmem:[#allocation5 + $0xed8] sm:$0xff] %v3570
    %4595 = vst [vmem:[#allocation5 + $0xee0] sm:$0xff] %v3571
    %4596 = vst [vmem:[#allocation5 + $0xee8] sm:$0xff] %v3572
    %4597 = vst [vmem:[#allocation5 + $0xef0] sm:$0xff] %v3573
    %4598 = vst [vmem:[#allocation5 + $0xef8] sm:$0xff] %v3574
    %4599 = vst [vmem:[#allocation5 + $0xf00] sm:$0xff] %v3575
    %4600 = vst [vmem:[#allocation5 + $0xf08] sm:$0xff] %v3576
    %4601 = vst [vmem:[#allocation5 + $0xf10] sm:$0xff] %v3577
    %4602 = vst [vmem:[#allocation5 + $0xf18] sm:$0xff] %v3578
    %4603 = vst [vmem:[#allocation5 + $0xf20] sm:$0xff] %v3579
    %4604 = vst [vmem:[#allocation5 + $0xf28] sm:$0xff] %v3580
    %4605 = vst [vmem:[#allocation5 + $0xf30] sm:$0xff] %v3581
    %4606 = vst [vmem:[#allocation5 + $0xf38] sm:$0xff] %v3582
    %4607 = vst [vmem:[#allocation5 + $0xf40] sm:$0xff] %v3583
    %4608 = vst [vmem:[#allocation5 + $0xf48] sm:$0xff] %v3584
    %4609 = vst [vmem:[#allocation5 + $0xf50] sm:$0xff] %v3585
    %4610 = vst [vmem:[#allocation5 + $0xf58] sm:$0xff] %v3586
    %4611 = vst [vmem:[#allocation5 + $0xf60] sm:$0xff] %v3587
    %4612 = vst [vmem:[#allocation5 + $0xf68] sm:$0xff] %v3588
    %4613 = vst [vmem:[#allocation5 + $0xf70] sm:$0xff] %v3589
    %4614 = vst [vmem:[#allocation5 + $0xf78] sm:$0xff] %v3590
    %4615 = vst [vmem:[#allocation5 + $0xf80] sm:$0xff] %v3591
    %4616 = vst [vmem:[#allocation5 + $0xf88] sm:$0xff] %v3592
    %4617 = vst [vmem:[#allocation5 + $0xf90] sm:$0xff] %v3593
    %4618 = vst [vmem:[#allocation5 + $0xf98] sm:$0xff] %v3594
    %4619 = vst [vmem:[#allocation5 + $0xfa0] sm:$0xff] %v3595
    %4620 = vst [vmem:[#allocation5 + $0xfa8] sm:$0xff] %v3596
    %4621 = vst [vmem:[#allocation5 + $0xfb0] sm:$0xff] %v3597
    %4622 = vst [vmem:[#allocation5 + $0xfb8] sm:$0xff] %v3598
    %4623 = vst [vmem:[#allocation5 + $0xfc0] sm:$0xff] %v3599
    %4624 = vst [vmem:[#allocation5 + $0xfc8] sm:$0xff] %v3600
    %4625 = vst [vmem:[#allocation5 + $0xfd0] sm:$0xff] %v3601
    %4626 = vst [vmem:[#allocation5 + $0xfd8] sm:$0xff] %v3602
    %4627 = vst [vmem:[#allocation5 + $0xfe0] sm:$0xff] %v3603
    %4628 = vst [vmem:[#allocation5 + $0xfe8] sm:$0xff] %v3604
    %4629 = vst [vmem:[#allocation5 + $0xff0] sm:$0xff] %v3605
    %4630 = vst [vmem:[#allocation5 + $0xff8] sm:$0xff] %v3606
    %4631 = vst [vmem:[#allocation5 + $0x1000] sm:$0xff] %v3607
    %4632 = vst [vmem:[#allocation5 + $0x1008] sm:$0xff] %v3608
    %4633 = vst [vmem:[#allocation5 + $0x1010] sm:$0xff] %v3609
    %4634 = vst [vmem:[#allocation5 + $0x1018] sm:$0xff] %v3610
    %4635 = vst [vmem:[#allocation5 + $0x1020] sm:$0xff] %v3611
    %4636 = vst [vmem:[#allocation5 + $0x1028] sm:$0xff] %v3612
    %4637 = vst [vmem:[#allocation5 + $0x1030] sm:$0xff] %v3613
    %4638 = vst [vmem:[#allocation5 + $0x1038] sm:$0xff] %v3614
    %4639 = vst [vmem:[#allocation5 + $0x1040] sm:$0xff] %v3615
    %4640 = vst [vmem:[#allocation5 + $0x1048] sm:$0xff] %v3616
    %4641 = vst [vmem:[#allocation5 + $0x1050] sm:$0xff] %v3617
    %4642 = vst [vmem:[#allocation5 + $0x1058] sm:$0xff] %v3618
    %4643 = vst [vmem:[#allocation5 + $0x1060] sm:$0xff] %v3619
    %4644 = vst [vmem:[#allocation5 + $0x1068] sm:$0xff] %v3620
    %4645 = vst [vmem:[#allocation5 + $0x1070] sm:$0xff] %v3621
    %4646 = vst [vmem:[#allocation5 + $0x1078] sm:$0xff] %v3622
    %4647 = vst [vmem:[#allocation5 + $0x1080] sm:$0xff] %v3623
    %4648 = vst [vmem:[#allocation5 + $0x1088] sm:$0xff] %v3624
    %4649 = vst [vmem:[#allocation5 + $0x1090] sm:$0xff] %v3625
    %4650 = vst [vmem:[#allocation5 + $0x1098] sm:$0xff] %v3626
    %4651 = vst [vmem:[#allocation5 + $0x10a0] sm:$0xff] %v3627
    %4652 = vst [vmem:[#allocation5 + $0x10a8] sm:$0xff] %v3628
    %4653 = vst [vmem:[#allocation5 + $0x10b0] sm:$0xff] %v3629
    %4654 = vst [vmem:[#allocation5 + $0x10b8] sm:$0xff] %v3630
    %4655 = vst [vmem:[#allocation5 + $0x10c0] sm:$0xff] %v3631
    %4656 = vst [vmem:[#allocation5 + $0x10c8] sm:$0xff] %v3632
    %4657 = vst [vmem:[#allocation5 + $0x10d0] sm:$0xff] %v3633
    %4658 = vst [vmem:[#allocation5 + $0x10d8] sm:$0xff] %v3634
    %4659 = vst [vmem:[#allocation5 + $0x10e0] sm:$0xff] %v3635
    %4660 = vst [vmem:[#allocation5 + $0x10e8] sm:$0xff] %v3636
    %4661 = vst [vmem:[#allocation5 + $0x10f0] sm:$0xff] %v3637
    %4662 = vst [vmem:[#allocation5 + $0x10f8] sm:$0xff] %v3638
    %4663 = vst [vmem:[#allocation5 + $0x1100] sm:$0xff] %v3639
    %4664 = vst [vmem:[#allocation5 + $0x1108] sm:$0xff] %v3640
    %4665 = vst [vmem:[#allocation5 + $0x1110] sm:$0xff] %v3641
    %4666 = vst [vmem:[#allocation5 + $0x1118] sm:$0xff] %v3642
    %4667 = vst [vmem:[#allocation5 + $0x1120] sm:$0xff] %v3643
    %4668 = vst [vmem:[#allocation5 + $0x1128] sm:$0xff] %v3644
    %4669 = vst [vmem:[#allocation5 + $0x1130] sm:$0xff] %v3645
    %4670 = vst [vmem:[#allocation5 + $0x1138] sm:$0xff] %v3646
    %4671 = vst [vmem:[#allocation5 + $0x1140] sm:$0xff] %v3647
    %4672 = vst [vmem:[#allocation5 + $0x1148] sm:$0xff] %v3648
    %4673 = vst [vmem:[#allocation5 + $0x1150] sm:$0xff] %v3649
    %4674 = vst [vmem:[#allocation5 + $0x1158] sm:$0xff] %v3650
    %4675 = vst [vmem:[#allocation5 + $0x1160] sm:$0xff] %v3651
    %4676 = vst [vmem:[#allocation5 + $0x1168] sm:$0xff] %v3652
    %4677 = vst [vmem:[#allocation5 + $0x1170] sm:$0xff] %v3653
    %4678 = vst [vmem:[#allocation5 + $0x1178] sm:$0xff] %v3654
    %4679 = vst [vmem:[#allocation5 + $0x1180] sm:$0xff] %v3655
    %4680 = vst [vmem:[#allocation5 + $0x1188] sm:$0xff] %v3656
    %4681 = vst [vmem:[#allocation5 + $0x1190] sm:$0xff] %v3657
    %4682 = vst [vmem:[#allocation5 + $0x1198] sm:$0xff] %v3658
    %4683 = vst [vmem:[#allocation5 + $0x11a0] sm:$0xff] %v3659
    %4684 = vst [vmem:[#allocation5 + $0x11a8] sm:$0xff] %v3660
    %4685 = vst [vmem:[#allocation5 + $0x11b0] sm:$0xff] %v3661
    %4686 = vst [vmem:[#allocation5 + $0x11b8] sm:$0xff] %v3662
    %4687 = vst [vmem:[#allocation5 + $0x11c0] sm:$0xff] %v3663
    %4688 = vst [vmem:[#allocation5 + $0x11c8] sm:$0xff] %v3664
    %4689 = vst [vmem:[#allocation5 + $0x11d0] sm:$0xff] %v3665
    %4690 = vst [vmem:[#allocation5 + $0x11d8] sm:$0xff] %v3666
    %4691 = vst [vmem:[#allocation5 + $0x11e0] sm:$0xff] %v3667
    %4692 = vst [vmem:[#allocation5 + $0x11e8] sm:$0xff] %v3668
    %4693 = vst [vmem:[#allocation5 + $0x11f0] sm:$0xff] %v3669
    %4694 = vst [vmem:[#allocation5 + $0x11f8] sm:$0xff] %v3670
    %4695 = vst [vmem:[#allocation5 + $0x1200] sm:$0xff] %v3671
    %4696 = vst [vmem:[#allocation5 + $0x1208] sm:$0xff] %v3672
    %4697 = vst [vmem:[#allocation5 + $0x1210] sm:$0xff] %v3673
    %4698 = vst [vmem:[#allocation5 + $0x1218] sm:$0xff] %v3674
    %4699 = vst [vmem:[#allocation5 + $0x1220] sm:$0xff] %v3675
    %4700 = vst [vmem:[#allocation5 + $0x1228] sm:$0xff] %v3676
    %4701 = vst [vmem:[#allocation5 + $0x1230] sm:$0xff] %v3677
    %4702 = vst [vmem:[#allocation5 + $0x1238] sm:$0xff] %v3678
    %4703 = vst [vmem:[#allocation5 + $0x1240] sm:$0xff] %v3679
    %4704 = vst [vmem:[#allocation5 + $0x1248] sm:$0xff] %v3680
    %4705 = vst [vmem:[#allocation5 + $0x1250] sm:$0xff] %v3681
    %4706 = vst [vmem:[#allocation5 + $0x1258] sm:$0xff] %v3682
    %4707 = vst [vmem:[#allocation5 + $0x1260] sm:$0xff] %v3683
    %4708 = vst [vmem:[#allocation5 + $0x1268] sm:$0xff] %v3684
    %4709 = vst [vmem:[#allocation5 + $0x1270] sm:$0xff] %v3685
    %4710 = vst [vmem:[#allocation5 + $0x1278] sm:$0xff] %v3686
    %4711 = vst [vmem:[#allocation5 + $0x1280] sm:$0xff] %v3687
    %4712 = vst [vmem:[#allocation5 + $0x1288] sm:$0xff] %v3688
    %4713 = vst [vmem:[#allocation5 + $0x1290] sm:$0xff] %v3689
    %4714 = vst [vmem:[#allocation5 + $0x1298] sm:$0xff] %v3690
    %4715 = vst [vmem:[#allocation5 + $0x12a0] sm:$0xff] %v3691
    %4716 = vst [vmem:[#allocation5 + $0x12a8] sm:$0xff] %v3692
    %4717 = vst [vmem:[#allocation5 + $0x12b0] sm:$0xff] %v3693
    %4718 = vst [vmem:[#allocation5 + $0x12b8] sm:$0xff] %v3694
    %4719 = vst [vmem:[#allocation5 + $0x12c0] sm:$0xff] %v3695
    %4720 = vst [vmem:[#allocation5 + $0x12c8] sm:$0xff] %v3696
    %4721 = vst [vmem:[#allocation5 + $0x12d0] sm:$0xff] %v3697
    %4722 = vst [vmem:[#allocation5 + $0x12d8] sm:$0xff] %v3698
    %4723 = vst [vmem:[#allocation5 + $0x12e0] sm:$0xff] %v3699
    %4724 = vst [vmem:[#allocation5 + $0x12e8] sm:$0xff] %v3700
    %4725 = vst [vmem:[#allocation5 + $0x12f0] sm:$0xff] %v3701
    %4726 = vst [vmem:[#allocation5 + $0x12f8] sm:$0xff] %v3702
    %4727 = vst [vmem:[#allocation5 + $0x1300] sm:$0xff] %v3703
    %4728 = vst [vmem:[#allocation5 + $0x1308] sm:$0xff] %v3704
    %4729 = vst [vmem:[#allocation5 + $0x1310] sm:$0xff] %v3705
    %4730 = vst [vmem:[#allocation5 + $0x1318] sm:$0xff] %v3706
    %4731 = vst [vmem:[#allocation5 + $0x1320] sm:$0xff] %v3707
    %4732 = vst [vmem:[#allocation5 + $0x1328] sm:$0xff] %v3708
    %4733 = vst [vmem:[#allocation5 + $0x1330] sm:$0xff] %v3709
    %4734 = vst [vmem:[#allocation5 + $0x1338] sm:$0xff] %v3710
    %4735 = vst [vmem:[#allocation5 + $0x1340] sm:$0xff] %v3711
    %4736 = vst [vmem:[#allocation5 + $0x1348] sm:$0xff] %v3712
    %4737 = vst [vmem:[#allocation5 + $0x1350] sm:$0xff] %v3713
    %4738 = vst [vmem:[#allocation5 + $0x1358] sm:$0xff] %v3714
    %4739 = vst [vmem:[#allocation5 + $0x1360] sm:$0xff] %v3715
    %4740 = vst [vmem:[#allocation5 + $0x1368] sm:$0xff] %v3716
    %4741 = vst [vmem:[#allocation5 + $0x1370] sm:$0xff] %v3717
    %4742 = vst [vmem:[#allocation5 + $0x1378] sm:$0xff] %v3718
    %4743 = vst [vmem:[#allocation5 + $0x1380] sm:$0xff] %v3719
    %4744 = vst [vmem:[#allocation5 + $0x1388] sm:$0xff] %v3720
    %4745 = vst [vmem:[#allocation5 + $0x1390] sm:$0xff] %v3721
    %4746 = vst [vmem:[#allocation5 + $0x1398] sm:$0xff] %v3722
    %4747 = vst [vmem:[#allocation5 + $0x13a0] sm:$0xff] %v3723
    %4748 = vst [vmem:[#allocation5 + $0x13a8] sm:$0xff] %v3724
    %4749 = vst [vmem:[#allocation5 + $0x13b0] sm:$0xff] %v3725
    %4750 = vst [vmem:[#allocation5 + $0x13b8] sm:$0xff] %v3726
    %4751 = vst [vmem:[#allocation5 + $0x13c0] sm:$0xff] %v3727
    %4752 = vst [vmem:[#allocation5 + $0x13c8] sm:$0xff] %v3728
    %4753 = vst [vmem:[#allocation5 + $0x13d0] sm:$0xff] %v3729
    %4754 = vst [vmem:[#allocation5 + $0x13d8] sm:$0xff] %v3730
    %4755 = vst [vmem:[#allocation5 + $0x13e0] sm:$0xff] %v3731
    %4756 = vst [vmem:[#allocation5 + $0x13e8] sm:$0xff] %v3732
    %4757 = vst [vmem:[#allocation5 + $0x13f0] sm:$0xff] %v3733
    %4758 = vst [vmem:[#allocation5 + $0x13f8] sm:$0xff] %v3734
    %4759 = vst [vmem:[#allocation5 + $0x1400] sm:$0xff] %v3735
    %4760 = vst [vmem:[#allocation5 + $0x1408] sm:$0xff] %v3736
    %4761 = vst [vmem:[#allocation5 + $0x1410] sm:$0xff] %v3737
    %4762 = vst [vmem:[#allocation5 + $0x1418] sm:$0xff] %v3738
    %4763 = vst [vmem:[#allocation5 + $0x1420] sm:$0xff] %v3739
    %4764 = vst [vmem:[#allocation5 + $0x1428] sm:$0xff] %v3740
    %4765 = vst [vmem:[#allocation5 + $0x1430] sm:$0xff] %v3741
    %4766 = vst [vmem:[#allocation5 + $0x1438] sm:$0xff] %v3742
    %4767 = vst [vmem:[#allocation5 + $0x1440] sm:$0xff] %v3743
    %4768 = vst [vmem:[#allocation5 + $0x1448] sm:$0xff] %v3744
    %4769 = vst [vmem:[#allocation5 + $0x1450] sm:$0xff] %v3745
    %4770 = vst [vmem:[#allocation5 + $0x1458] sm:$0xff] %v3746
    %4771 = vst [vmem:[#allocation5 + $0x1460] sm:$0xff] %v3747
    %4772 = vst [vmem:[#allocation5 + $0x1468] sm:$0xff] %v3748
    %4773 = vst [vmem:[#allocation5 + $0x1470] sm:$0xff] %v3749
    %4774 = vst [vmem:[#allocation5 + $0x1478] sm:$0xff] %v3750
    %4775 = vst [vmem:[#allocation5 + $0x1480] sm:$0xff] %v3751
    %4776 = vst [vmem:[#allocation5 + $0x1488] sm:$0xff] %v3752
    %4777 = vst [vmem:[#allocation5 + $0x1490] sm:$0xff] %v3753
    %4778 = vst [vmem:[#allocation5 + $0x1498] sm:$0xff] %v3754
    %4779 = vst [vmem:[#allocation5 + $0x14a0] sm:$0xff] %v3755
    %4780 = vst [vmem:[#allocation5 + $0x14a8] sm:$0xff] %v3756
    %4781 = vst [vmem:[#allocation5 + $0x14b0] sm:$0xff] %v3757
    %4782 = vst [vmem:[#allocation5 + $0x14b8] sm:$0xff] %v3758
    %4783 = vst [vmem:[#allocation5 + $0x14c0] sm:$0xff] %v3759
    %4784 = vst [vmem:[#allocation5 + $0x14c8] sm:$0xff] %v3760
    %4785 = vst [vmem:[#allocation5 + $0x14d0] sm:$0xff] %v3761
    %4786 = vst [vmem:[#allocation5 + $0x14d8] sm:$0xff] %v3762
    %4787 = vst [vmem:[#allocation5 + $0x14e0] sm:$0xff] %v3763
    %4788 = vst [vmem:[#allocation5 + $0x14e8] sm:$0xff] %v3764
    %4789 = vst [vmem:[#allocation5 + $0x14f0] sm:$0xff] %v3765
    %4790 = vst [vmem:[#allocation5 + $0x14f8] sm:$0xff] %v3766
    %4791 = vst [vmem:[#allocation5 + $0x1500] sm:$0xff] %v3767
    %4792 = vst [vmem:[#allocation5 + $0x1508] sm:$0xff] %v3768
    %4793 = vst [vmem:[#allocation5 + $0x1510] sm:$0xff] %v3769
    %4794 = vst [vmem:[#allocation5 + $0x1518] sm:$0xff] %v3770
    %4795 = vst [vmem:[#allocation5 + $0x1520] sm:$0xff] %v3771
    %4796 = vst [vmem:[#allocation5 + $0x1528] sm:$0xff] %v3772
    %4797 = vst [vmem:[#allocation5 + $0x1530] sm:$0xff] %v3773
    %4798 = vst [vmem:[#allocation5 + $0x1538] sm:$0xff] %v3774
    %4799 = vst [vmem:[#allocation5 + $0x1540] sm:$0xff] %v3775
    %4800 = vst [vmem:[#allocation5 + $0x1548] sm:$0xff] %v3776
    %4801 = vst [vmem:[#allocation5 + $0x1550] sm:$0xff] %v3777
    %4802 = vst [vmem:[#allocation5 + $0x1558] sm:$0xff] %v3778
    %4803 = vst [vmem:[#allocation5 + $0x1560] sm:$0xff] %v3779
    %4804 = vst [vmem:[#allocation5 + $0x1568] sm:$0xff] %v3780
    %4805 = vst [vmem:[#allocation5 + $0x1570] sm:$0xff] %v3781
    %4806 = vst [vmem:[#allocation5 + $0x1578] sm:$0xff] %v3782
    %4807 = vst [vmem:[#allocation5 + $0x1580] sm:$0xff] %v3783
    %4808 = vst [vmem:[#allocation5 + $0x1588] sm:$0xff] %v3784
    %4809 = vst [vmem:[#allocation5 + $0x1590] sm:$0xff] %v3785
    %4810 = vst [vmem:[#allocation5 + $0x1598] sm:$0xff] %v3786
    %4811 = vst [vmem:[#allocation5 + $0x15a0] sm:$0xff] %v3787
    %4812 = vst [vmem:[#allocation5 + $0x15a8] sm:$0xff] %v3788
    %4813 = vst [vmem:[#allocation5 + $0x15b0] sm:$0xff] %v3789
    %4814 = vst [vmem:[#allocation5 + $0x15b8] sm:$0xff] %v3790
    %4815 = vst [vmem:[#allocation5 + $0x15c0] sm:$0xff] %v3791
    %4816 = vst [vmem:[#allocation5 + $0x15c8] sm:$0xff] %v3792
    %4817 = vst [vmem:[#allocation5 + $0x15d0] sm:$0xff] %v3793
    %4818 = vst [vmem:[#allocation5 + $0x15d8] sm:$0xff] %v3794
    %4819 = vst [vmem:[#allocation5 + $0x15e0] sm:$0xff] %v3795
    %4820 = vst [vmem:[#allocation5 + $0x15e8] sm:$0xff] %v3796
    %4821 = vst [vmem:[#allocation5 + $0x15f0] sm:$0xff] %v3797
    %4822 = vst [vmem:[#allocation5 + $0x15f8] sm:$0xff] %v3798
    %4823 = vst [vmem:[#allocation5 + $0x1600] sm:$0xff] %v3799
    %4824 = vst [vmem:[#allocation5 + $0x1608] sm:$0xff] %v3800
    %4825 = vst [vmem:[#allocation5 + $0x1610] sm:$0xff] %v3801
    %4826 = vst [vmem:[#allocation5 + $0x1618] sm:$0xff] %v3802
    %4827 = vst [vmem:[#allocation5 + $0x1620] sm:$0xff] %v3803
    %4828 = vst [vmem:[#allocation5 + $0x1628] sm:$0xff] %v3804
    %4829 = vst [vmem:[#allocation5 + $0x1630] sm:$0xff] %v3805
    %4830 = vst [vmem:[#allocation5 + $0x1638] sm:$0xff] %v3806
    %4831 = vst [vmem:[#allocation5 + $0x1640] sm:$0xff] %v3807
    %4832 = vst [vmem:[#allocation5 + $0x1648] sm:$0xff] %v3808
    %4833 = vst [vmem:[#allocation5 + $0x1650] sm:$0xff] %v3809
    %4834 = vst [vmem:[#allocation5 + $0x1658] sm:$0xff] %v3810
    %4835 = vst [vmem:[#allocation5 + $0x1660] sm:$0xff] %v3811
    %4836 = vst [vmem:[#allocation5 + $0x1668] sm:$0xff] %v3812
    %4837 = vst [vmem:[#allocation5 + $0x1670] sm:$0xff] %v3813
    %4838 = vst [vmem:[#allocation5 + $0x1678] sm:$0xff] %v3814
    %4839 = vst [vmem:[#allocation5 + $0x1680] sm:$0xff] %v3815
    %4840 = vst [vmem:[#allocation5 + $0x1688] sm:$0xff] %v3816
    %4841 = vst [vmem:[#allocation5 + $0x1690] sm:$0xff] %v3817
    %4842 = vst [vmem:[#allocation5 + $0x1698] sm:$0xff] %v3818
    %4843 = vst [vmem:[#allocation5 + $0x16a0] sm:$0xff] %v3819
    %4844 = vst [vmem:[#allocation5 + $0x16a8] sm:$0xff] %v3820
    %4845 = vst [vmem:[#allocation5 + $0x16b0] sm:$0xff] %v3821
    %4846 = vst [vmem:[#allocation5 + $0x16b8] sm:$0xff] %v3822
    %4847 = vst [vmem:[#allocation5 + $0x16c0] sm:$0xff] %v3823
    %4848 = vst [vmem:[#allocation5 + $0x16c8] sm:$0xff] %v3824
    %4849 = vst [vmem:[#allocation5 + $0x16d0] sm:$0xff] %v3825
    %4850 = vst [vmem:[#allocation5 + $0x16d8] sm:$0xff] %v3826
    %4851 = vst [vmem:[#allocation5 + $0x16e0] sm:$0xff] %v3827
    %4852 = vst [vmem:[#allocation5 + $0x16e8] sm:$0xff] %v3828
    %4853 = vst [vmem:[#allocation5 + $0x16f0] sm:$0xff] %v3829
    %4854 = vst [vmem:[#allocation5 + $0x16f8] sm:$0xff] %v3830
    %4855 = vst [vmem:[#allocation5 + $0x1700] sm:$0xff] %v3831
    %4856 = vst [vmem:[#allocation5 + $0x1708] sm:$0xff] %v3832
    %4857 = vst [vmem:[#allocation5 + $0x1710] sm:$0xff] %v3833
    %4858 = vst [vmem:[#allocation5 + $0x1718] sm:$0xff] %v3834
    %4859 = vst [vmem:[#allocation5 + $0x1720] sm:$0xff] %v3835
    %4860 = vst [vmem:[#allocation5 + $0x1728] sm:$0xff] %v3836
    %4861 = vst [vmem:[#allocation5 + $0x1730] sm:$0xff] %v3837
    %4862 = vst [vmem:[#allocation5 + $0x1738] sm:$0xff] %v3838
    %4863 = vst [vmem:[#allocation5 + $0x1740] sm:$0xff] %v3839
    %4864 = vst [vmem:[#allocation5 + $0x1748] sm:$0xff] %v3840
    %4865 = vst [vmem:[#allocation5 + $0x1750] sm:$0xff] %v3841
    %4866 = vst [vmem:[#allocation5 + $0x1758] sm:$0xff] %v3842
    %4867 = vst [vmem:[#allocation5 + $0x1760] sm:$0xff] %v3843
    %4868 = vst [vmem:[#allocation5 + $0x1768] sm:$0xff] %v3844
    %4869 = vst [vmem:[#allocation5 + $0x1770] sm:$0xff] %v3845
    %4870 = vst [vmem:[#allocation5 + $0x1778] sm:$0xff] %v3846
    %4871 = vst [vmem:[#allocation5 + $0x1780] sm:$0xff] %v3847
    %4872 = vst [vmem:[#allocation5 + $0x1788] sm:$0xff] %v3848
    %4873 = vst [vmem:[#allocation5 + $0x1790] sm:$0xff] %v3849
    %4874 = vst [vmem:[#allocation5 + $0x1798] sm:$0xff] %v3850
    %4875 = vst [vmem:[#allocation5 + $0x17a0] sm:$0xff] %v3851
    %4876 = vst [vmem:[#allocation5 + $0x17a8] sm:$0xff] %v3852
    %4877 = vst [vmem:[#allocation5 + $0x17b0] sm:$0xff] %v3853
    %4878 = vst [vmem:[#allocation5 + $0x17b8] sm:$0xff] %v3854
    %4879 = vst [vmem:[#allocation5 + $0x17c0] sm:$0xff] %v3855
    %4880 = vst [vmem:[#allocation5 + $0x17c8] sm:$0xff] %v3856
    %4881 = vst [vmem:[#allocation5 + $0x17d0] sm:$0xff] %v3857
    %4882 = vst [vmem:[#allocation5 + $0x17d8] sm:$0xff] %v3858
    %4883 = vst [vmem:[#allocation5 + $0x17e0] sm:$0xff] %v3859
    %4884 = vst [vmem:[#allocation5 + $0x17e8] sm:$0xff] %v3860
    %4885 = vst [vmem:[#allocation5 + $0x17f0] sm:$0xff] %v3861
    %4886 = vst [vmem:[#allocation5 + $0x17f8] sm:$0xff] %v3862
    %4887 = vst [vmem:[#allocation5 + $0x1800] sm:$0xff] %v3863
    %4888 = vst [vmem:[#allocation5 + $0x1808] sm:$0xff] %v3864
    %4889 = vst [vmem:[#allocation5 + $0x1810] sm:$0xff] %v3865
    %4890 = vst [vmem:[#allocation5 + $0x1818] sm:$0xff] %v3866
    %4891 = vst [vmem:[#allocation5 + $0x1820] sm:$0xff] %v3867
    %4892 = vst [vmem:[#allocation5 + $0x1828] sm:$0xff] %v3868
    %4893 = vst [vmem:[#allocation5 + $0x1830] sm:$0xff] %v3869
    %4894 = vst [vmem:[#allocation5 + $0x1838] sm:$0xff] %v3870
    %4895 = vst [vmem:[#allocation5 + $0x1840] sm:$0xff] %v3871
    %4896 = vst [vmem:[#allocation5 + $0x1848] sm:$0xff] %v3872
    %4897 = vst [vmem:[#allocation5 + $0x1850] sm:$0xff] %v3873
    %4898 = vst [vmem:[#allocation5 + $0x1858] sm:$0xff] %v3874
    %4899 = vst [vmem:[#allocation5 + $0x1860] sm:$0xff] %v3875
    %4900 = vst [vmem:[#allocation5 + $0x1868] sm:$0xff] %v3876
    %4901 = vst [vmem:[#allocation5 + $0x1870] sm:$0xff] %v3877
    %4902 = vst [vmem:[#allocation5 + $0x1878] sm:$0xff] %v3878
    %4903 = vst [vmem:[#allocation5 + $0x1880] sm:$0xff] %v3879
    %4904 = vst [vmem:[#allocation5 + $0x1888] sm:$0xff] %v3880
    %4905 = vst [vmem:[#allocation5 + $0x1890] sm:$0xff] %v3881
    %4906 = vst [vmem:[#allocation5 + $0x1898] sm:$0xff] %v3882
    %4907 = vst [vmem:[#allocation5 + $0x18a0] sm:$0xff] %v3883
    %4908 = vst [vmem:[#allocation5 + $0x18a8] sm:$0xff] %v3884
    %4909 = vst [vmem:[#allocation5 + $0x18b0] sm:$0xff] %v3885
    %4910 = vst [vmem:[#allocation5 + $0x18b8] sm:$0xff] %v3886
    %4911 = vst [vmem:[#allocation5 + $0x18c0] sm:$0xff] %v3887
    %4912 = vst [vmem:[#allocation5 + $0x18c8] sm:$0xff] %v3888
    %4913 = vst [vmem:[#allocation5 + $0x18d0] sm:$0xff] %v3889
    %4914 = vst [vmem:[#allocation5 + $0x18d8] sm:$0xff] %v3890
    %4915 = vst [vmem:[#allocation5 + $0x18e0] sm:$0xff] %v3891
    %4916 = vst [vmem:[#allocation5 + $0x18e8] sm:$0xff] %v3892
    %4917 = vst [vmem:[#allocation5 + $0x18f0] sm:$0xff] %v3893
    %4918 = vst [vmem:[#allocation5 + $0x18f8] sm:$0xff] %v3894
    %4919 = vst [vmem:[#allocation5 + $0x1900] sm:$0xff] %v3895
    %4920 = vst [vmem:[#allocation5 + $0x1908] sm:$0xff] %v3896
    %4921 = vst [vmem:[#allocation5 + $0x1910] sm:$0xff] %v3897
    %4922 = vst [vmem:[#allocation5 + $0x1918] sm:$0xff] %v3898
    %4923 = vst [vmem:[#allocation5 + $0x1920] sm:$0xff] %v3899
    %4924 = vst [vmem:[#allocation5 + $0x1928] sm:$0xff] %v3900
    %4925 = vst [vmem:[#allocation5 + $0x1930] sm:$0xff] %v3901
    %4926 = vst [vmem:[#allocation5 + $0x1938] sm:$0xff] %v3902
    %4927 = vst [vmem:[#allocation5 + $0x1940] sm:$0xff] %v3903
    %4928 = vst [vmem:[#allocation5 + $0x1948] sm:$0xff] %v3904
    %4929 = vst [vmem:[#allocation5 + $0x1950] sm:$0xff] %v3905
    %4930 = vst [vmem:[#allocation5 + $0x1958] sm:$0xff] %v3906
    %4931 = vst [vmem:[#allocation5 + $0x1960] sm:$0xff] %v3907
    %4932 = vst [vmem:[#allocation5 + $0x1968] sm:$0xff] %v3908
    %4933 = vst [vmem:[#allocation5 + $0x1970] sm:$0xff] %v3909
    %4934 = vst [vmem:[#allocation5 + $0x1978] sm:$0xff] %v3910
    %4935 = vst [vmem:[#allocation5 + $0x1980] sm:$0xff] %v3911
    %4936 = vst [vmem:[#allocation5 + $0x1988] sm:$0xff] %v3912
    %4937 = vst [vmem:[#allocation5 + $0x1990] sm:$0xff] %v3913
    %4938 = vst [vmem:[#allocation5 + $0x1998] sm:$0xff] %v3914
    %4939 = vst [vmem:[#allocation5 + $0x19a0] sm:$0xff] %v3915
    %4940 = vst [vmem:[#allocation5 + $0x19a8] sm:$0xff] %v3916
    %4941 = vst [vmem:[#allocation5 + $0x19b0] sm:$0xff] %v3917
    %4942 = vst [vmem:[#allocation5 + $0x19b8] sm:$0xff] %v3918
    %4943 = vst [vmem:[#allocation5 + $0x19c0] sm:$0xff] %v3919
    %4944 = vst [vmem:[#allocation5 + $0x19c8] sm:$0xff] %v3920
    %4945 = vst [vmem:[#allocation5 + $0x19d0] sm:$0xff] %v3921
    %4946 = vst [vmem:[#allocation5 + $0x19d8] sm:$0xff] %v3922
    %4947 = vst [vmem:[#allocation5 + $0x19e0] sm:$0xff] %v3923
    %4948 = vst [vmem:[#allocation5 + $0x19e8] sm:$0xff] %v3924
    %4949 = vst [vmem:[#allocation5 + $0x19f0] sm:$0xff] %v3925
    %4950 = vst [vmem:[#allocation5 + $0x19f8] sm:$0xff] %v3926
    %4951 = vst [vmem:[#allocation5 + $0x1a00] sm:$0xff] %v3927
    %4952 = vst [vmem:[#allocation5 + $0x1a08] sm:$0xff] %v3928
    %4953 = vst [vmem:[#allocation5 + $0x1a10] sm:$0xff] %v3929
    %4954 = vst [vmem:[#allocation5 + $0x1a18] sm:$0xff] %v3930
    %4955 = vst [vmem:[#allocation5 + $0x1a20] sm:$0xff] %v3931
    %4956 = vst [vmem:[#allocation5 + $0x1a28] sm:$0xff] %v3932
    %4957 = vst [vmem:[#allocation5 + $0x1a30] sm:$0xff] %v3933
    %4958 = vst [vmem:[#allocation5 + $0x1a38] sm:$0xff] %v3934
    %4959 = vst [vmem:[#allocation5 + $0x1a40] sm:$0xff] %v3935
    %4960 = vst [vmem:[#allocation5 + $0x1a48] sm:$0xff] %v3936
    %4961 = vst [vmem:[#allocation5 + $0x1a50] sm:$0xff] %v3937
    %4962 = vst [vmem:[#allocation5 + $0x1a58] sm:$0xff] %v3938
    %4963 = vst [vmem:[#allocation5 + $0x1a60] sm:$0xff] %v3939
    %4964 = vst [vmem:[#allocation5 + $0x1a68] sm:$0xff] %v3940
    %4965 = vst [vmem:[#allocation5 + $0x1a70] sm:$0xff] %v3941
    %4966 = vst [vmem:[#allocation5 + $0x1a78] sm:$0xff] %v3942
    %4967 = vst [vmem:[#allocation5 + $0x1a80] sm:$0xff] %v3943
    %4968 = vst [vmem:[#allocation5 + $0x1a88] sm:$0xff] %v3944
    %4969 = vst [vmem:[#allocation5 + $0x1a90] sm:$0xff] %v3945
    %4970 = vst [vmem:[#allocation5 + $0x1a98] sm:$0xff] %v3946
    %4971 = vst [vmem:[#allocation5 + $0x1aa0] sm:$0xff] %v3947
    %4972 = vst [vmem:[#allocation5 + $0x1aa8] sm:$0xff] %v3948
    %4973 = vst [vmem:[#allocation5 + $0x1ab0] sm:$0xff] %v3949
    %4974 = vst [vmem:[#allocation5 + $0x1ab8] sm:$0xff] %v3950
    %4975 = vst [vmem:[#allocation5 + $0x1ac0] sm:$0xff] %v3951
    %4976 = vst [vmem:[#allocation5 + $0x1ac8] sm:$0xff] %v3952
    %4977 = vst [vmem:[#allocation5 + $0x1ad0] sm:$0xff] %v3953
    %4978 = vst [vmem:[#allocation5 + $0x1ad8] sm:$0xff] %v3954
    %4979 = vst [vmem:[#allocation5 + $0x1ae0] sm:$0xff] %v3955
    %4980 = vst [vmem:[#allocation5 + $0x1ae8] sm:$0xff] %v3956
    %4981 = vst [vmem:[#allocation5 + $0x1af0] sm:$0xff] %v3957
    %4982 = vst [vmem:[#allocation5 + $0x1af8] sm:$0xff] %v3958
    %4983 = vst [vmem:[#allocation5 + $0x1b00] sm:$0xff] %v3959
    %4984 = vst [vmem:[#allocation5 + $0x1b08] sm:$0xff] %v3960
    %4985 = vst [vmem:[#allocation5 + $0x1b10] sm:$0xff] %v3961
    %4986 = vst [vmem:[#allocation5 + $0x1b18] sm:$0xff] %v3962
    %4987 = vst [vmem:[#allocation5 + $0x1b20] sm:$0xff] %v3963
    %4988 = vst [vmem:[#allocation5 + $0x1b28] sm:$0xff] %v3964
    %4989 = vst [vmem:[#allocation5 + $0x1b30] sm:$0xff] %v3965
    %4990 = vst [vmem:[#allocation5 + $0x1b38] sm:$0xff] %v3966
    %4991 = vst [vmem:[#allocation5 + $0x1b40] sm:$0xff] %v3967
    %4992 = vst [vmem:[#allocation5 + $0x1b48] sm:$0xff] %v3968
    %4993 = vst [vmem:[#allocation5 + $0x1b50] sm:$0xff] %v3969
    %4994 = vst [vmem:[#allocation5 + $0x1b58] sm:$0xff] %v3970
    %4995 = vst [vmem:[#allocation5 + $0x1b60] sm:$0xff] %v3971
    %4996 = vst [vmem:[#allocation5 + $0x1b68] sm:$0xff] %v3972
    %4997 = vst [vmem:[#allocation5 + $0x1b70] sm:$0xff] %v3973
    %4998 = vst [vmem:[#allocation5 + $0x1b78] sm:$0xff] %v3974
    %4999 = vst [vmem:[#allocation5 + $0x1b80] sm:$0xff] %v3975
    %5000 = vst [vmem:[#allocation5 + $0x1b88] sm:$0xff] %v3976
    %5001 = vst [vmem:[#allocation5 + $0x1b90] sm:$0xff] %v3977
    %5002 = vst [vmem:[#allocation5 + $0x1b98] sm:$0xff] %v3978
    %5003 = vst [vmem:[#allocation5 + $0x1ba0] sm:$0xff] %v3979
    %5004 = vst [vmem:[#allocation5 + $0x1ba8] sm:$0xff] %v3980
    %5005 = vst [vmem:[#allocation5 + $0x1bb0] sm:$0xff] %v3981
    %5006 = vst [vmem:[#allocation5 + $0x1bb8] sm:$0xff] %v3982
    %5007 = vst [vmem:[#allocation5 + $0x1bc0] sm:$0xff] %v3983
    %5008 = vst [vmem:[#allocation5 + $0x1bc8] sm:$0xff] %v3984
    %5009 = vst [vmem:[#allocation5 + $0x1bd0] sm:$0xff] %v3985
    %5010 = vst [vmem:[#allocation5 + $0x1bd8] sm:$0xff] %v3986
    %5011 = vst [vmem:[#allocation5 + $0x1be0] sm:$0xff] %v3987
    %5012 = vst [vmem:[#allocation5 + $0x1be8] sm:$0xff] %v3988
    %5013 = vst [vmem:[#allocation5 + $0x1bf0] sm:$0xff] %v3989
    %5014 = vst [vmem:[#allocation5 + $0x1bf8] sm:$0xff] %v3990
    %5015 = vst [vmem:[#allocation5 + $0x1c00] sm:$0xff] %v3991
    %5016 = vst [vmem:[#allocation5 + $0x1c08] sm:$0xff] %v3992
    %5017 = vst [vmem:[#allocation5 + $0x1c10] sm:$0xff] %v3993
    %5018 = vst [vmem:[#allocation5 + $0x1c18] sm:$0xff] %v3994
    %5019 = vst [vmem:[#allocation5 + $0x1c20] sm:$0xff] %v3995
    %5020 = vst [vmem:[#allocation5 + $0x1c28] sm:$0xff] %v3996
    %5021 = vst [vmem:[#allocation5 + $0x1c30] sm:$0xff] %v3997
    %5022 = vst [vmem:[#allocation5 + $0x1c38] sm:$0xff] %v3998
    %5023 = vst [vmem:[#allocation5 + $0x1c40] sm:$0xff] %v3999
    %5024 = vst [vmem:[#allocation5 + $0x1c48] sm:$0xff] %v4000
    %5025 = vst [vmem:[#allocation5 + $0x1c50] sm:$0xff] %v4001
    %5026 = vst [vmem:[#allocation5 + $0x1c58] sm:$0xff] %v4002
    %5027 = vst [vmem:[#allocation5 + $0x1c60] sm:$0xff] %v4003
    %5028 = vst [vmem:[#allocation5 + $0x1c68] sm:$0xff] %v4004
    %5029 = vst [vmem:[#allocation5 + $0x1c70] sm:$0xff] %v4005
    %5030 = vst [vmem:[#allocation5 + $0x1c78] sm:$0xff] %v4006
    %5031 = vst [vmem:[#allocation5 + $0x1c80] sm:$0xff] %v4007
    %5032 = vst [vmem:[#allocation5 + $0x1c88] sm:$0xff] %v4008
    %5033 = vst [vmem:[#allocation5 + $0x1c90] sm:$0xff] %v4009
    %5034 = vst [vmem:[#allocation5 + $0x1c98] sm:$0xff] %v4010
    %5035 = vst [vmem:[#allocation5 + $0x1ca0] sm:$0xff] %v4011
    %5036 = vst [vmem:[#allocation5 + $0x1ca8] sm:$0xff] %v4012
    %5037 = vst [vmem:[#allocation5 + $0x1cb0] sm:$0xff] %v4013
    %5038 = vst [vmem:[#allocation5 + $0x1cb8] sm:$0xff] %v4014
    %5039 = vst [vmem:[#allocation5 + $0x1cc0] sm:$0xff] %v4015
    %5040 = vst [vmem:[#allocation5 + $0x1cc8] sm:$0xff] %v4016
    %5041 = vst [vmem:[#allocation5 + $0x1cd0] sm:$0xff] %v4017
    %5042 = vst [vmem:[#allocation5 + $0x1cd8] sm:$0xff] %v4018
    %5043 = vst [vmem:[#allocation5 + $0x1ce0] sm:$0xff] %v4019
    %5044 = vst [vmem:[#allocation5 + $0x1ce8] sm:$0xff] %v4020
    %5045 = vst [vmem:[#allocation5 + $0x1cf0] sm:$0xff] %v4021
    %5046 = vst [vmem:[#allocation5 + $0x1cf8] sm:$0xff] %v4022
    %5047 = vst [vmem:[#allocation5 + $0x1d00] sm:$0xff] %v4023
    %5048 = vst [vmem:[#allocation5 + $0x1d08] sm:$0xff] %v4024
    %5049 = vst [vmem:[#allocation5 + $0x1d10] sm:$0xff] %v4025
    %5050 = vst [vmem:[#allocation5 + $0x1d18] sm:$0xff] %v4026
    %5051 = vst [vmem:[#allocation5 + $0x1d20] sm:$0xff] %v4027
    %5052 = vst [vmem:[#allocation5 + $0x1d28] sm:$0xff] %v4028
    %5053 = vst [vmem:[#allocation5 + $0x1d30] sm:$0xff] %v4029
    %5054 = vst [vmem:[#allocation5 + $0x1d38] sm:$0xff] %v4030
    %5055 = vst [vmem:[#allocation5 + $0x1d40] sm:$0xff] %v4031
    %5056 = vst [vmem:[#allocation5 + $0x1d48] sm:$0xff] %v4032
    %5057 = vst [vmem:[#allocation5 + $0x1d50] sm:$0xff] %v4033
    %5058 = vst [vmem:[#allocation5 + $0x1d58] sm:$0xff] %v4034
    %5059 = vst [vmem:[#allocation5 + $0x1d60] sm:$0xff] %v4035
    %5060 = vst [vmem:[#allocation5 + $0x1d68] sm:$0xff] %v4036
    %5061 = vst [vmem:[#allocation5 + $0x1d70] sm:$0xff] %v4037
    %5062 = vst [vmem:[#allocation5 + $0x1d78] sm:$0xff] %v4038
    %5063 = vst [vmem:[#allocation5 + $0x1d80] sm:$0xff] %v4039
    %5064 = vst [vmem:[#allocation5 + $0x1d88] sm:$0xff] %v4040
    %5065 = vst [vmem:[#allocation5 + $0x1d90] sm:$0xff] %v4041
    %5066 = vst [vmem:[#allocation5 + $0x1d98] sm:$0xff] %v4042
    %5067 = vst [vmem:[#allocation5 + $0x1da0] sm:$0xff] %v4043
    %5068 = vst [vmem:[#allocation5 + $0x1da8] sm:$0xff] %v4044
    %5069 = vst [vmem:[#allocation5 + $0x1db0] sm:$0xff] %v4045
    %5070 = vst [vmem:[#allocation5 + $0x1db8] sm:$0xff] %v4046
    %5071 = vst [vmem:[#allocation5 + $0x1dc0] sm:$0xff] %v4047
    %5072 = vst [vmem:[#allocation5 + $0x1dc8] sm:$0xff] %v4048
    %5073 = vst [vmem:[#allocation5 + $0x1dd0] sm:$0xff] %v4049
    %5074 = vst [vmem:[#allocation5 + $0x1dd8] sm:$0xff] %v4050
    %5075 = vst [vmem:[#allocation5 + $0x1de0] sm:$0xff] %v4051
    %5076 = vst [vmem:[#allocation5 + $0x1de8] sm:$0xff] %v4052
    %5077 = vst [vmem:[#allocation5 + $0x1df0] sm:$0xff] %v4053
    %5078 = vst [vmem:[#allocation5 + $0x1df8] sm:$0xff] %v4054
    %5079 = vst [vmem:[#allocation5 + $0x1e00] sm:$0xff] %v4055
    %5080 = vst [vmem:[#allocation5 + $0x1e08] sm:$0xff] %v4056
    %5081 = vst [vmem:[#allocation5 + $0x1e10] sm:$0xff] %v4057
    %5082 = vst [vmem:[#allocation5 + $0x1e18] sm:$0xff] %v4058
    %5083 = vst [vmem:[#allocation5 + $0x1e20] sm:$0xff] %v4059
    %5084 = vst [vmem:[#allocation5 + $0x1e28] sm:$0xff] %v4060
    %5085 = vst [vmem:[#allocation5 + $0x1e30] sm:$0xff] %v4061
    %5086 = vst [vmem:[#allocation5 + $0x1e38] sm:$0xff] %v4062
    %5087 = vst [vmem:[#allocation5 + $0x1e40] sm:$0xff] %v4063
    %5088 = vst [vmem:[#allocation5 + $0x1e48] sm:$0xff] %v4064
    %5089 = vst [vmem:[#allocation5 + $0x1e50] sm:$0xff] %v4065
    %5090 = vst [vmem:[#allocation5 + $0x1e58] sm:$0xff] %v4066
    %5091 = vst [vmem:[#allocation5 + $0x1e60] sm:$0xff] %v4067
    %5092 = vst [vmem:[#allocation5 + $0x1e68] sm:$0xff] %v4068
    %5093 = vst [vmem:[#allocation5 + $0x1e70] sm:$0xff] %v4069
    %5094 = vst [vmem:[#allocation5 + $0x1e78] sm:$0xff] %v4070
    %5095 = vst [vmem:[#allocation5 + $0x1e80] sm:$0xff] %v4071
    %5096 = vst [vmem:[#allocation5 + $0x1e88] sm:$0xff] %v4072
    %5097 = vst [vmem:[#allocation5 + $0x1e90] sm:$0xff] %v4073
    %5098 = vst [vmem:[#allocation5 + $0x1e98] sm:$0xff] %v4074
    %5099 = vst [vmem:[#allocation5 + $0x1ea0] sm:$0xff] %v4075
    %5100 = vst [vmem:[#allocation5 + $0x1ea8] sm:$0xff] %v4076
    %5101 = vst [vmem:[#allocation5 + $0x1eb0] sm:$0xff] %v4077
    %5102 = vst [vmem:[#allocation5 + $0x1eb8] sm:$0xff] %v4078
    %5103 = vst [vmem:[#allocation5 + $0x1ec0] sm:$0xff] %v4079
    %5104 = vst [vmem:[#allocation5 + $0x1ec8] sm:$0xff] %v4080
    %5105 = vst [vmem:[#allocation5 + $0x1ed0] sm:$0xff] %v4081
    %5106 = vst [vmem:[#allocation5 + $0x1ed8] sm:$0xff] %v4082
    %5107 = vst [vmem:[#allocation5 + $0x1ee0] sm:$0xff] %v4083
    %5108 = vst [vmem:[#allocation5 + $0x1ee8] sm:$0xff] %v4084
    %5109 = vst [vmem:[#allocation5 + $0x1ef0] sm:$0xff] %v4085
    %5110 = vst [vmem:[#allocation5 + $0x1ef8] sm:$0xff] %v4086
    %5111 = vst [vmem:[#allocation5 + $0x1f00] sm:$0xff] %v4087
    %5112 = vst [vmem:[#allocation5 + $0x1f08] sm:$0xff] %v4088
    %5113 = vst [vmem:[#allocation5 + $0x1f10] sm:$0xff] %v4089
    %5114 = vst [vmem:[#allocation5 + $0x1f18] sm:$0xff] %v4090
    %5115 = vst [vmem:[#allocation5 + $0x1f20] sm:$0xff] %v4091
    %5116 = vst [vmem:[#allocation5 + $0x1f28] sm:$0xff] %v4092
    %5117 = vst [vmem:[#allocation5 + $0x1f30] sm:$0xff] %v4093
    %5118 = vst [vmem:[#allocation5 + $0x1f38] sm:$0xff] %v4094
    %5119 = vst [vmem:[#allocation5 + $0x1f40] sm:$0xff] %v4095
    %5120 = vst [vmem:[#allocation5 + $0x1f48] sm:$0xff] %v4096
    %5121 = vst [vmem:[#allocation5 + $0x1f50] sm:$0xff] %v4097
    %5122 = vst [vmem:[#allocation5 + $0x1f58] sm:$0xff] %v4098
    %5123 = vst [vmem:[#allocation5 + $0x1f60] sm:$0xff] %v4099
    %5124 = vst [vmem:[#allocation5 + $0x1f68] sm:$0xff] %v4100
    %5125 = vst [vmem:[#allocation5 + $0x1f70] sm:$0xff] %v4101
    %5126 = vst [vmem:[#allocation5 + $0x1f78] sm:$0xff] %v4102
    %5127 = vst [vmem:[#allocation5 + $0x1f80] sm:$0xff] %v4103
    %5128 = vst [vmem:[#allocation5 + $0x1f88] sm:$0xff] %v4104
    %5129 = vst [vmem:[#allocation5 + $0x1f90] sm:$0xff] %v4105
    %5130 = vst [vmem:[#allocation5 + $0x1f98] sm:$0xff] %v4106
    %5131 = vst [vmem:[#allocation5 + $0x1fa0] sm:$0xff] %v4107
    %5132 = vst [vmem:[#allocation5 + $0x1fa8] sm:$0xff] %v4108
    %5133 = vst [vmem:[#allocation5 + $0x1fb0] sm:$0xff] %v4109
    %5134 = vst [vmem:[#allocation5 + $0x1fb8] sm:$0xff] %v4110
    %5135 = vst [vmem:[#allocation5 + $0x1fc0] sm:$0xff] %v4111
    %5136 = vst [vmem:[#allocation5 + $0x1fc8] sm:$0xff] %v4112
    %5137 = vst [vmem:[#allocation5 + $0x1fd0] sm:$0xff] %v4113
    %5138 = vst [vmem:[#allocation5 + $0x1fd8] sm:$0xff] %v4114
    %5139 = vst [vmem:[#allocation5 + $0x1fe0] sm:$0xff] %v4115
    %5140 = vst [vmem:[#allocation5 + $0x1fe8] sm:$0xff] %v4116
    %5141 = vst [vmem:[#allocation5 + $0x1ff0] sm:$0xff] %v4117
    %5142 = vst [vmem:[#allocation5 + $0x1ff8] sm:$0xff] %v4118
    // Predicated region
    $region10: #{tpu_custom_call.1} parent=1 // pred_check
      _
    $region11: #{tpu_custom_call.1} parent=1 // pred_check_branch
      %5144 = sbr.rel (0) target = $region13
    $region12: #{tpu_custom_call.1} parent=1 // pred_region
      %s5146 = ssub.s32 131072, 131072
      %5147 = vsyncadd [#allocation4], %s5146
      %s5148 = sshll.u32 [#allocation5], 4
      %s5149 = int_to_ptr.vmem [resolvable:$true] %s5148
      %5154 = dma.vmem_to_hbm [thread:$0]  %s5149, 131072, %s1, [#allocation4], 4096, 4096, 256
    $region13: #{tpu_custom_call.1} parent=1 // pred_fallthru
      _
    // Predicated region
    $region14: #{tpu_custom_call.1} parent=1 // pred_check
      _
    $region15: #{tpu_custom_call.1} parent=1 // pred_check_branch
      %5156 = sbr.rel (0) target = $region17
    $region16: #{tpu_custom_call.1} parent=1 // pred_region
      %5157 = dma.done [#allocation4], 131072
    $region17: #{tpu_custom_call.1} parent=1 // pred_fallthru
      _
    %5158 = vsyncpa [#allocation3], 1
    %5159 = vsyncpa [#allocation4], 1

</llo_original>
